<compile_context>
chip_gen: v7x
topology: tpu7x:2x2x1
jax: 0.10.0
libtpu: 0.0.40
codegen_flags: <defaults>
</compile_context>

<pallas_src>
import jax
import jax.numpy as jnp
from jax.experimental import pallas as pl
from jax.experimental.pallas import tpu as pltpu

IN_DIM = 768
HID_DIM = 1024
NO_CLASSES = 128  # synthetic stand-in for len(os.listdir(CLASSES))

# Row-tile candidates: multiples of 16 (bf16 packs 2 rows per sublane), capped at 512
# so the per-tile VMEM footprint stays safe on v7x (64 MiB physical VMEM).
_TM_CANDIDATES = (512, 256, 128, 64, 32, 16)
_MAX_PAD_FRAC = 0.125


def mlp_kernel(x_ref, w1_ref, b1_ref, w2_ref, b2_ref, w3_ref, b3_ref, o_ref):
    # x_ref: (tm, 768) bf16 tile of the flattened batch; weights are resident bf16.
    # All three matmuls run with bf16 inputs and f32 accumulation; bias+ReLU in f32.
    x = x_ref[...]
    h1 = jnp.dot(x, w1_ref[...], preferred_element_type=jnp.float32) + b1_ref[...]
    h1 = jnp.maximum(h1, 0.0).astype(jnp.bfloat16)
    h2 = jnp.dot(h1, w2_ref[...], preferred_element_type=jnp.float32) + b2_ref[...]
    h2 = jnp.maximum(h2, 0.0).astype(jnp.bfloat16)
    out = jnp.dot(h2, w3_ref[...], preferred_element_type=jnp.float32) + b3_ref[...]
    o_ref[...] = out.astype(o_ref.dtype)


def init_params(key):
    """Deterministic f32 init mimicking nn.Linear default (uniform +-1/sqrt(fan_in))."""
    ks = jax.random.split(key, 6)

    def linear(kw, kb, fan_in, fan_out):
        bound = 1.0 / jnp.sqrt(float(fan_in))
        w = jax.random.uniform(kw, (fan_in, fan_out), jnp.float32, -bound, bound)
        b = jax.random.uniform(kb, (1, fan_out), jnp.float32, -bound, bound)
        return w, b

    w1, b1 = linear(ks[0], ks[1], IN_DIM, HID_DIM)
    w2, b2 = linear(ks[2], ks[3], HID_DIM, HID_DIM)
    w3, b3 = linear(ks[4], ks[5], HID_DIM, NO_CLASSES)
    return w1, b1, w2, b2, w3, b3


def prepare_params(params):
    """One-time conversion of weights to bf16 for the MXU (biases stay f32).

    Do this once at model-setup time, NOT per forward call, so the f32->bf16 casts
    (~7 MiB of HBM reads) are not re-issued on every invocation.
    """
    w1, b1, w2, b2, w3, b3 = params
    return (w1.astype(jnp.bfloat16), b1,
            w2.astype(jnp.bfloat16), b2,
            w3.astype(jnp.bfloat16), b3)


def _round_up(n, m):
    return ((n + m - 1) // m) * m


def _choose_tm(B):
    """Pick a row tile: largest candidate with <=12.5% padding waste, then make sure
    the grid has >=2 steps when the batch allows it (so both v7x TensorCores get work)."""
    tm = 16
    for t in _TM_CANDIDATES:
        if t > _round_up(B, 16):
            continue
        Bp = _round_up(B, t)
        if (Bp - B) / Bp <= _MAX_PAD_FRAC:
            tm = t
            break
    # Keep >=2 grid steps when possible (halving tm never increases padding here).
    if B > 16:
        while tm > 16 and _round_up(B, tm) // tm < 2:
            tm //= 2
    return max(16, tm)


def mlp_forward(x, prepared_params, *, tm=None):
    w1, b1, w2, b2, w3, b3 = prepared_params
    # matches xb.reshape(-1, 768); bf16 in the wrapper halves the x-tile DMA traffic
    # (the matmul consumes bf16 anyway, so this is numerically identical).
    xb = x.reshape(-1, IN_DIM).astype(jnp.bfloat16)
    B = xb.shape[0]

    if tm is None:
        tm = _choose_tm(B)
    else:
        tm = max(16, min(_round_up(tm, 16), 512))
        tm = min(tm, _round_up(B, 16))

    Bp = _round_up(B, tm)
    if Bp != B:
        xb = jnp.pad(xb, ((0, Bp - B), (0, 0)))

    grid = (Bp // tm,)

    # Weights / biases stay fully resident in VMEM, single-buffered (no grid blocking).
    resident = pl.BlockSpec(memory_space=pltpu.MemorySpace.VMEM)

    flops = 2 * Bp * (IN_DIM * HID_DIM + HID_DIM * HID_DIM + HID_DIM * NO_CLASSES)
    bytes_accessed = (
        Bp * IN_DIM * 2                                   # x (bf16)
        + (IN_DIM * HID_DIM + HID_DIM * HID_DIM + HID_DIM * NO_CLASSES) * 2  # W (bf16)
        + (HID_DIM + HID_DIM + NO_CLASSES) * 4            # biases (f32)
        + Bp * NO_CLASSES * 4                             # out (f32)
    )

    out = pl.pallas_call(
        mlp_kernel,
        out_shape=jax.ShapeDtypeStruct((Bp, NO_CLASSES), jnp.float32),
        grid_spec=pltpu.PrefetchScalarGridSpec(
            num_scalar_prefetch=0,
            grid=grid,
            in_specs=[
                pl.BlockSpec((tm, IN_DIM), lambda i: (i, 0)),   # x tile (pipelined, bf16)
                resident,                                       # W1 (bf16)
                resident,                                       # b1 (f32)
                resident,                                       # W2 (bf16)
                resident,                                       # b2 (f32)
                resident,                                       # W3 (bf16)
                resident,                                       # b3 (f32)
            ],
            out_specs=pl.BlockSpec((tm, NO_CLASSES), lambda i: (i, 0)),
        ),
        compiler_params=pltpu.CompilerParams(
            dimension_semantics=("parallel",),   # shards the row grid across TCs on v7x
            vmem_limit_bytes=32 * 1024 * 1024,   # raises v5e's 16 MiB scoped default
        ),
        cost_estimate=pl.CostEstimate(
            flops=flops, transcendentals=0, bytes_accessed=bytes_accessed),
    )(xb, w1, b1, w2, b2, w3, b3)

    # Padded rows compute relu(bias)-style garbage; slice them off (do not remove).
    return out[:B]


def mlp_reference(x, params_f32):
    w1, b1, w2, b2, w3, b3 = params_f32
    xb = x.reshape(-1, IN_DIM).astype(jnp.float32)
    h1 = jnp.maximum(xb @ w1 + b1, 0.0)
    h2 = jnp.maximum(h1 @ w2 + b2, 0.0)
    return h2 @ w3 + b3


if __name__ == "__main__":
    key = jax.random.PRNGKey(0)
    k_param, k_x1, k_x2 = jax.random.split(key, 3)

    params_f32 = init_params(k_param)
    params = prepare_params(params_f32)   # one-time bf16 weight conversion

    # Small batch: (2, 4, 768) -> reshape(-1, 768) -> (8, 768)  (single 16-row tile)
    x = jax.random.normal(k_x1, (2, 4, IN_DIM), dtype=jnp.float32)
    out = jax.block_until_ready(mlp_forward(x, params))
    ref = mlp_reference(x, params_f32)
    assert out.shape == (8, NO_CLASSES)
    # bf16 matmul inputs with f32 accumulation -> small drift vs the f32 reference.
    assert jnp.allclose(out, ref, atol=5e-2, rtol=5e-2)

    # Ragged batch exercising the adaptive-tile / padded multi-step path
    # (B=300 -> tm=64, Bp=320, 5 grid steps, ~6% padding instead of ~41%).
    x2 = jax.random.normal(k_x2, (300, IN_DIM), dtype=jnp.float32)
    out2 = jax.block_until_ready(mlp_forward(x2, params))
    ref2 = mlp_reference(x2, params_f32)
    assert out2.shape == (300, NO_CLASSES)
    assert jnp.allclose(out2, ref2, atol=5e-2, rtol=5e-2)

    print("KERNEL_OK")
</pallas_src>

<mosaic_0001>
module attributes {stable_mosaic.version = 11 : i64} {
  func.func @mlp_kernel(%arg0: i32, %arg1: memref<16x768xbf16, #tpu.memory_space<vmem>>, %arg2: memref<768x1024xbf16, #tpu.memory_space<vmem>>, %arg3: memref<1x1024xf32, #tpu.memory_space<vmem>>, %arg4: memref<1024x1024xbf16, #tpu.memory_space<vmem>>, %arg5: memref<1x1024xf32, #tpu.memory_space<vmem>>, %arg6: memref<1024x128xbf16, #tpu.memory_space<vmem>>, %arg7: memref<1x128xf32, #tpu.memory_space<vmem>>, %arg8: memref<16x128xf32, #tpu.memory_space<vmem>>) attributes {dimension_semantics = [#tpu.dimension_semantics<parallel>], iteration_bounds = array<i64: 1>, scalar_prefetch = 0 : i64, scratch_operands = 0 : i64, tpu.core_type = #tpu.core_type<tc>, window_params = [{transform_indices = @transform_0, window_bounds = array<i64: 16, 768>}, {pipeline_mode = #tpu.pipeline_mode<synchronous>, transform_indices = @transform_1, window_bounds = array<i64: 768, 1024>}, {pipeline_mode = #tpu.pipeline_mode<synchronous>, transform_indices = @transform_2, window_bounds = array<i64: 1, 1024>}, {pipeline_mode = #tpu.pipeline_mode<synchronous>, transform_indices = @transform_3, window_bounds = array<i64: 1024, 1024>}, {pipeline_mode = #tpu.pipeline_mode<synchronous>, transform_indices = @transform_4, window_bounds = array<i64: 1, 1024>}, {pipeline_mode = #tpu.pipeline_mode<synchronous>, transform_indices = @transform_5, window_bounds = array<i64: 1024, 128>}, {pipeline_mode = #tpu.pipeline_mode<synchronous>, transform_indices = @transform_6, window_bounds = array<i64: 1, 128>}, {transform_indices = @transform_7, window_bounds = array<i64: 16, 128>}]} {
    %c0 = arith.constant 0 : index
    %c0_0 = arith.constant 0 : index
    %0 = vector.load %arg1[%c0, %c0_0] : memref<16x768xbf16, #tpu.memory_space<vmem>>, vector<16x768xbf16>
    %c0_1 = arith.constant 0 : index
    %c0_2 = arith.constant 0 : index
    %1 = vector.load %arg2[%c0_1, %c0_2] : memref<768x1024xbf16, #tpu.memory_space<vmem>>, vector<768x1024xbf16>
    %cst = arith.constant dense<0.000000e+00> : vector<16x1024xf32>
    %2 = tpu.matmul %0, %1, %cst {dimension_numbers = #tpu.dot_dimension_numbers<[1], [0], [0], [1], [0, 0, 1, 1], [], []>} : vector<16x768xbf16>, vector<768x1024xbf16>, vector<16x1024xf32> -> vector<16x1024xf32>
    %c0_3 = arith.constant 0 : index
    %c0_4 = arith.constant 0 : index
    %3 = vector.load %arg3[%c0_3, %c0_4] : memref<1x1024xf32, #tpu.memory_space<vmem>>, vector<1x1024xf32>
    %4 = vector.broadcast %3 : vector<1x1024xf32> to vector<16x1024xf32>
    %5 = arith.addf %2, %4 : vector<16x1024xf32>
    %cst_5 = arith.constant 0.000000e+00 : f32
    %6 = vector.broadcast %cst_5 : f32 to vector<16x1024xf32>
    %7 = arith.maximumf %5, %6 : vector<16x1024xf32>
    %8 = arith.truncf %7 : vector<16x1024xf32> to vector<16x1024xbf16>
    %c0_6 = arith.constant 0 : index
    %c0_7 = arith.constant 0 : index
    %9 = vector.load %arg4[%c0_6, %c0_7] : memref<1024x1024xbf16, #tpu.memory_space<vmem>>, vector<1024x1024xbf16>
    %cst_8 = arith.constant dense<0.000000e+00> : vector<16x1024xf32>
    %10 = tpu.matmul %8, %9, %cst_8 {dimension_numbers = #tpu.dot_dimension_numbers<[1], [0], [0], [1], [0, 0, 1, 1], [], []>} : vector<16x1024xbf16>, vector<1024x1024xbf16>, vector<16x1024xf32> -> vector<16x1024xf32>
    %c0_9 = arith.constant 0 : index
    %c0_10 = arith.constant 0 : index
    %11 = vector.load %arg5[%c0_9, %c0_10] : memref<1x1024xf32, #tpu.memory_space<vmem>>, vector<1x1024xf32>
    %12 = vector.broadcast %11 : vector<1x1024xf32> to vector<16x1024xf32>
    %13 = arith.addf %10, %12 : vector<16x1024xf32>
    %cst_11 = arith.constant 0.000000e+00 : f32
    %14 = vector.broadcast %cst_11 : f32 to vector<16x1024xf32>
    %15 = arith.maximumf %13, %14 : vector<16x1024xf32>
    %16 = arith.truncf %15 : vector<16x1024xf32> to vector<16x1024xbf16>
    %c0_12 = arith.constant 0 : index
    %c0_13 = arith.constant 0 : index
    %17 = vector.load %arg6[%c0_12, %c0_13] : memref<1024x128xbf16, #tpu.memory_space<vmem>>, vector<1024x128xbf16>
    %cst_14 = arith.constant dense<0.000000e+00> : vector<16x128xf32>
    %18 = tpu.matmul %16, %17, %cst_14 {dimension_numbers = #tpu.dot_dimension_numbers<[1], [0], [0], [1], [0, 0, 1, 1], [], []>} : vector<16x1024xbf16>, vector<1024x128xbf16>, vector<16x128xf32> -> vector<16x128xf32>
    %c0_15 = arith.constant 0 : index
    %c0_16 = arith.constant 0 : index
    %19 = vector.load %arg7[%c0_15, %c0_16] : memref<1x128xf32, #tpu.memory_space<vmem>>, vector<1x128xf32>
    %20 = vector.broadcast %19 : vector<1x128xf32> to vector<16x128xf32>
    %21 = arith.addf %18, %20 : vector<16x128xf32>
    %c0_17 = arith.constant 0 : index
    %c0_18 = arith.constant 0 : index
    %22 = vector.load %arg8[%c0_17, %c0_18] : memref<16x128xf32, #tpu.memory_space<vmem>>, vector<16x128xf32>
    tpu.vector_store %arg8[%c0_17, %c0_18], %21 {strides = array<i32>} : memref<16x128xf32, #tpu.memory_space<vmem>>, vector<16x128xf32>,
    return
  }
  func.func @transform_0(%arg0: i32) -> (i32, i32) {
    %c0_i32 = arith.constant 0 : i32
    %c0_i32_0 = arith.constant 0 : i32
    return %arg0, %c0_i32 : i32, i32
  }
  func.func @transform_1(%arg0: i32) -> (i32, i32) {
    %c0_i32 = arith.constant 0 : i32
    %c0_i32_0 = arith.constant 0 : i32
    %c0_i32_1 = arith.constant 0 : i32
    return %c0_i32, %c0_i32_0 : i32, i32
  }
  func.func @transform_2(%arg0: i32) -> (i32, i32) {
    %c0_i32 = arith.constant 0 : i32
    %c0_i32_0 = arith.constant 0 : i32
    %c0_i32_1 = arith.constant 0 : i32
    return %c0_i32, %c0_i32_0 : i32, i32
  }
  func.func @transform_3(%arg0: i32) -> (i32, i32) {
    %c0_i32 = arith.constant 0 : i32
    %c0_i32_0 = arith.constant 0 : i32
    %c0_i32_1 = arith.constant 0 : i32
    return %c0_i32, %c0_i32_0 : i32, i32
  }
  func.func @transform_4(%arg0: i32) -> (i32, i32) {
    %c0_i32 = arith.constant 0 : i32
    %c0_i32_0 = arith.constant 0 : i32
    %c0_i32_1 = arith.constant 0 : i32
    return %c0_i32, %c0_i32_0 : i32, i32
  }
  func.func @transform_5(%arg0: i32) -> (i32, i32) {
    %c0_i32 = arith.constant 0 : i32
    %c0_i32_0 = arith.constant 0 : i32
    %c0_i32_1 = arith.constant 0 : i32
    return %c0_i32, %c0_i32_0 : i32, i32
  }
  func.func @transform_6(%arg0: i32) -> (i32, i32) {
    %c0_i32 = arith.constant 0 : i32
    %c0_i32_0 = arith.constant 0 : i32
    %c0_i32_1 = arith.constant 0 : i32
    return %c0_i32, %c0_i32_0 : i32, i32
  }
  func.func @transform_7(%arg0: i32) -> (i32, i32) {
    %c0_i32 = arith.constant 0 : i32
    %c0_i32_0 = arith.constant 0 : i32
    return %arg0, %c0_i32 : i32, i32
  }
}

</mosaic_0001>

<llo_original>
// kernel: tpu_custom_call.1
$region0: #{tpu_custom_call.1}
  #allocation0 [shape = 'u32[]', space=smem, size = 0x4, offset = 0x4, fixed_abs, tag = 'smem constant byte address 0x4 - core index']
  #allocation1 [shape = 'u32[144,128]{1,0:T(1,128)}', space=vmem, size = 0x12000, scoped, tag = 'internal scratch']
  %s0 = inlined_call_operand.hbm [shape: bf16[16,768], index: 0, kind: input, shape index: {}]
  %s1 = inlined_call_operand.hbm [shape: bf16[768,1024], index: 1, kind: input, shape index: {}]
  %s2 = inlined_call_operand.hbm [shape: f32[1,1024], index: 2, kind: input, shape index: {}]
  %s3 = inlined_call_operand.hbm [shape: bf16[1024,1024], index: 3, kind: input, shape index: {}]
  %s4 = inlined_call_operand.hbm [shape: f32[1,1024], index: 4, kind: input, shape index: {}]
  %s5 = inlined_call_operand.hbm [shape: bf16[1024,128], index: 5, kind: input, shape index: {}]
  %s6 = inlined_call_operand.hbm [shape: f32[1,128], index: 6, kind: input, shape index: {}]
  %s7 = inlined_call_operand.hbm [shape: f32[16,128], index: 7, kind: output, shape index: {}]
  %s8 = sld [smem:[#allocation0]]
  $region66: #{tpu_custom_call.1} parent=0
    _
  %s10 = ssub.s32 1, %s8
  %s11 = scalar_select 0, %s10, %s8
  $region1: #{tpu_custom_call.1} parent=0
    #allocation2 [shape = 'u8[24576]{0}', space=vmem, size = 0x6000, scoped, tag = 'input window, operand 0, single buffered']
    #allocation3 [shape = 's32[1]{0}', space=sflag, size = 0x4, scoped, tag = 'scoped memory for tpu_custom_call.1']
    #allocation4 [shape = 's32[1]{0}', space=sflag, size = 0x4, scoped, tag = 'scoped memory for tpu_custom_call.1']
    #allocation5 [shape = 'u8[1572864]{0}', space=vmem, size = 0x180000, scoped, tag = 'input window, operand 1, single buffered']
    #allocation6 [shape = 's32[1]{0}', space=sflag, size = 0x4, scoped, tag = 'scoped memory for tpu_custom_call.1']
    #allocation7 [shape = 'u8[4096]{0}', space=vmem, size = 0x1000, scoped, tag = 'input window, operand 2, single buffered']
    #allocation8 [shape = 'u8[2097152]{0}', space=vmem, size = 0x200000, scoped, tag = 'input window, operand 3, single buffered']
    #allocation9 [shape = 's32[1]{0}', space=sflag, size = 0x4, scoped, tag = 'scoped memory for tpu_custom_call.1']
    #allocation10 [shape = 'u8[4096]{0}', space=vmem, size = 0x1000, scoped, tag = 'input window, operand 4, single buffered']
    #allocation11 [shape = 'u8[262144]{0}', space=vmem, size = 0x40000, scoped, tag = 'input window, operand 5, single buffered']
    #allocation12 [shape = 's32[1]{0}', space=sflag, size = 0x4, scoped, tag = 'scoped memory for tpu_custom_call.1']
    #allocation13 [shape = 'u8[512]{0}', space=vmem, size = 0x400, scoped, tag = 'input window, operand 6, single buffered']
    #allocation14 [shape = 'u8[8192]{0}', space=vmem, size = 0x2000, scoped, tag = 'output window, operand 0, single buffered']
    %12 = vsyncpa [#allocation3], 0
    %13 = vsyncpa [#allocation6], 0
    %14 = vsyncpa [#allocation9], 0
    %15 = vsyncpa [#allocation12], 0
    %16 = vsyncpa [#allocation4], 0
    // Predicated region
    $region2: #{tpu_custom_call.1} parent=1 // pred_check
      _
    $region3: #{tpu_custom_call.1} parent=1 // pred_check_branch
      %18 = sbr.rel (0) target = $region5
    $region4: #{tpu_custom_call.1} parent=1 // pred_region
      %s20 = ssub.s32 768, 768
      %21 = vsyncadd [#allocation3], %s20
      %s22 = sshll.u32 [#allocation2], 4
      %s23 = int_to_ptr.vmem [resolvable:$true] %s22
      %28 = dma.hbm_to_vmem [thread:$0]  %s0, 768, %s23, [#allocation3], 384, 384, 24
    $region5: #{tpu_custom_call.1} parent=1 // pred_fallthru
      _
    // Predicated region
    $region6: #{tpu_custom_call.1} parent=1 // pred_check
      _
    $region7: #{tpu_custom_call.1} parent=1 // pred_check_branch
      %30 = sbr.rel (0) target = $region9
    $region8: #{tpu_custom_call.1} parent=1 // pred_region
      %s32 = ssub.s32 49152, 49152
      %33 = vsyncadd [#allocation6], %s32
      %s34 = sshll.u32 [#allocation5], 4
      %s35 = int_to_ptr.vmem [resolvable:$true] %s34
      %40 = dma.hbm_to_vmem [thread:$0]  %s1, 49152, %s35, [#allocation6], 512, 512, 32
    $region9: #{tpu_custom_call.1} parent=1 // pred_fallthru
      _
    // Predicated region
    $region10: #{tpu_custom_call.1} parent=1 // pred_check
      _
    $region11: #{tpu_custom_call.1} parent=1 // pred_check_branch
      %42 = sbr.rel (0) target = $region13
    $region12: #{tpu_custom_call.1} parent=1 // pred_region
      %s44 = ssub.s32 128, 128
      %45 = vsyncadd [#allocation6], %s44
      %s47 = sshll.u32 [#allocation7], 4
      %s48 = int_to_ptr.vmem [resolvable:$true] %s47
      %50 = dma.hbm_to_vmem [thread:$0]  %s2, 128, %s48, [#allocation6]
    $region13: #{tpu_custom_call.1} parent=1 // pred_fallthru
      _
    // Predicated region
    $region14: #{tpu_custom_call.1} parent=1 // pred_check
      _
    $region15: #{tpu_custom_call.1} parent=1 // pred_check_branch
      %52 = sbr.rel (0) target = $region17
    $region16: #{tpu_custom_call.1} parent=1 // pred_region
      %s54 = ssub.s32 65536, 65536
      %55 = vsyncadd [#allocation9], %s54
      %s56 = sshll.u32 [#allocation8], 4
      %s57 = int_to_ptr.vmem [resolvable:$true] %s56
      %62 = dma.hbm_to_vmem [thread:$0]  %s3, 65536, %s57, [#allocation9], 512, 512, 32
    $region17: #{tpu_custom_call.1} parent=1 // pred_fallthru
      _
    // Predicated region
    $region18: #{tpu_custom_call.1} parent=1 // pred_check
      _
    $region19: #{tpu_custom_call.1} parent=1 // pred_check_branch
      %64 = sbr.rel (0) target = $region21
    $region20: #{tpu_custom_call.1} parent=1 // pred_region
      %s66 = ssub.s32 128, 128
      %67 = vsyncadd [#allocation9], %s66
      %s69 = sshll.u32 [#allocation10], 4
      %s70 = int_to_ptr.vmem [resolvable:$true] %s69
      %72 = dma.hbm_to_vmem [thread:$0]  %s4, 128, %s70, [#allocation9]
    $region21: #{tpu_custom_call.1} parent=1 // pred_fallthru
      _
    // Predicated region
    $region22: #{tpu_custom_call.1} parent=1 // pred_check
      _
    $region23: #{tpu_custom_call.1} parent=1 // pred_check_branch
      %74 = sbr.rel (0) target = $region25
    $region24: #{tpu_custom_call.1} parent=1 // pred_region
      %s76 = ssub.s32 8192, 8192
      %77 = vsyncadd [#allocation12], %s76
      %s78 = sshll.u32 [#allocation11], 4
      %s79 = int_to_ptr.vmem [resolvable:$true] %s78
      %84 = dma.hbm_to_vmem [thread:$0]  %s5, 8192, %s79, [#allocation12], 64, 64, 4
    $region25: #{tpu_custom_call.1} parent=1 // pred_fallthru
      _
    // Predicated region
    $region26: #{tpu_custom_call.1} parent=1 // pred_check
      _
    $region27: #{tpu_custom_call.1} parent=1 // pred_check_branch
      %86 = sbr.rel (0) target = $region29
    $region28: #{tpu_custom_call.1} parent=1 // pred_region
      %s88 = ssub.s32 16, 16
      %89 = vsyncadd [#allocation12], %s88
      %s91 = sshll.u32 [#allocation13], 4
      %s92 = int_to_ptr.vmem [resolvable:$true] %s91
      %94 = dma.hbm_to_vmem [thread:$0]  %s6, 16, %s92, [#allocation12]
    $region29: #{tpu_custom_call.1} parent=1 // pred_fallthru
      _
    // Predicated region
    $region30: #{tpu_custom_call.1} parent=1 // pred_check
      _
    $region31: #{tpu_custom_call.1} parent=1 // pred_check_branch
      %96 = sbr.rel (0) target = $region33
    $region32: #{tpu_custom_call.1} parent=1 // pred_region
      %97 = dma.done [#allocation3], 768
    $region33: #{tpu_custom_call.1} parent=1 // pred_fallthru
      _
    // Predicated region
    $region34: #{tpu_custom_call.1} parent=1 // pred_check
      _
    $region35: #{tpu_custom_call.1} parent=1 // pred_check_branch
      %99 = sbr.rel (0) target = $region37
    $region36: #{tpu_custom_call.1} parent=1 // pred_region
      %100 = dma.done [#allocation6], 49152
    $region37: #{tpu_custom_call.1} parent=1 // pred_fallthru
      _
    // Predicated region
    $region38: #{tpu_custom_call.1} parent=1 // pred_check
      _
    $region39: #{tpu_custom_call.1} parent=1 // pred_check_branch
      %102 = sbr.rel (0) target = $region41
    $region40: #{tpu_custom_call.1} parent=1 // pred_region
      %103 = dma.done [#allocation6], 128
    $region41: #{tpu_custom_call.1} parent=1 // pred_fallthru
      _
    // Predicated region
    $region42: #{tpu_custom_call.1} parent=1 // pred_check
      _
    $region43: #{tpu_custom_call.1} parent=1 // pred_check_branch
      %105 = sbr.rel (0) target = $region45
    $region44: #{tpu_custom_call.1} parent=1 // pred_region
      %106 = dma.done [#allocation9], 65536
    $region45: #{tpu_custom_call.1} parent=1 // pred_fallthru
      _
    // Predicated region
    $region46: #{tpu_custom_call.1} parent=1 // pred_check
      _
    $region47: #{tpu_custom_call.1} parent=1 // pred_check_branch
      %108 = sbr.rel (0) target = $region49
    $region48: #{tpu_custom_call.1} parent=1 // pred_region
      %109 = dma.done [#allocation9], 128
    $region49: #{tpu_custom_call.1} parent=1 // pred_fallthru
      _
    // Predicated region
    $region50: #{tpu_custom_call.1} parent=1 // pred_check
      _
    $region51: #{tpu_custom_call.1} parent=1 // pred_check_branch
      %111 = sbr.rel (0) target = $region53
    $region52: #{tpu_custom_call.1} parent=1 // pred_region
      %112 = dma.done [#allocation12], 8192
    $region53: #{tpu_custom_call.1} parent=1 // pred_fallthru
      _
    // Predicated region
    $region54: #{tpu_custom_call.1} parent=1 // pred_check
      _
    $region55: #{tpu_custom_call.1} parent=1 // pred_check_branch
      %114 = sbr.rel (0) target = $region57
    $region56: #{tpu_custom_call.1} parent=1 // pred_region
      %115 = dma.done [#allocation12], 16
    $region57: #{tpu_custom_call.1} parent=1 // pred_fallthru
      _
    %v117 = vld [vmem:[#allocation2] sm:$0xff]
    %v118 = vld [vmem:[#allocation2 + $0x8] sm:$0xff]
    %v119 = vld [vmem:[#allocation2 + $0x10] sm:$0xff]
    %v120 = vld [vmem:[#allocation2 + $0x18] sm:$0xff]
    %v121 = vld [vmem:[#allocation2 + $0x20] sm:$0xff]
    %v122 = vld [vmem:[#allocation2 + $0x28] sm:$0xff]
    %v123 = vld [vmem:[#allocation5] sm:$0xff]
    %v124 = vld [vmem:[#allocation5 + $0x8] sm:$0xff]
    %v125 = vld [vmem:[#allocation5 + $0x10] sm:$0xff]
    %v126 = vld [vmem:[#allocation5 + $0x18] sm:$0xff]
    %v127 = vld [vmem:[#allocation5 + $0x20] sm:$0xff]
    %v128 = vld [vmem:[#allocation5 + $0x28] sm:$0xff]
    %v129 = vld [vmem:[#allocation5 + $0x30] sm:$0xff]
    %v130 = vld [vmem:[#allocation5 + $0x38] sm:$0xff]
    %v131 = vld [vmem:[#allocation5 + $0x40] sm:$0xff]
    %v132 = vld [vmem:[#allocation5 + $0x48] sm:$0xff]
    %v133 = vld [vmem:[#allocation5 + $0x50] sm:$0xff]
    %v134 = vld [vmem:[#allocation5 + $0x58] sm:$0xff]
    %v135 = vld [vmem:[#allocation5 + $0x60] sm:$0xff]
    %v136 = vld [vmem:[#allocation5 + $0x68] sm:$0xff]
    %v137 = vld [vmem:[#allocation5 + $0x70] sm:$0xff]
    %v138 = vld [vmem:[#allocation5 + $0x78] sm:$0xff]
    %v139 = vld [vmem:[#allocation5 + $0x80] sm:$0xff]
    %v140 = vld [vmem:[#allocation5 + $0x88] sm:$0xff]
    %v141 = vld [vmem:[#allocation5 + $0x90] sm:$0xff]
    %v142 = vld [vmem:[#allocation5 + $0x98] sm:$0xff]
    %v143 = vld [vmem:[#allocation5 + $0xa0] sm:$0xff]
    %v144 = vld [vmem:[#allocation5 + $0xa8] sm:$0xff]
    %v145 = vld [vmem:[#allocation5 + $0xb0] sm:$0xff]
    %v146 = vld [vmem:[#allocation5 + $0xb8] sm:$0xff]
    %v147 = vld [vmem:[#allocation5 + $0xc0] sm:$0xff]
    %v148 = vld [vmem:[#allocation5 + $0xc8] sm:$0xff]
    %v149 = vld [vmem:[#allocation5 + $0xd0] sm:$0xff]
    %v150 = vld [vmem:[#allocation5 + $0xd8] sm:$0xff]
    %v151 = vld [vmem:[#allocation5 + $0xe0] sm:$0xff]
    %v152 = vld [vmem:[#allocation5 + $0xe8] sm:$0xff]
    %v153 = vld [vmem:[#allocation5 + $0xf0] sm:$0xff]
    %v154 = vld [vmem:[#allocation5 + $0xf8] sm:$0xff]
    %v155 = vld [vmem:[#allocation5 + $0x100] sm:$0xff]
    %v156 = vld [vmem:[#allocation5 + $0x108] sm:$0xff]
    %v157 = vld [vmem:[#allocation5 + $0x110] sm:$0xff]
    %v158 = vld [vmem:[#allocation5 + $0x118] sm:$0xff]
    %v159 = vld [vmem:[#allocation5 + $0x120] sm:$0xff]
    %v160 = vld [vmem:[#allocation5 + $0x128] sm:$0xff]
    %v161 = vld [vmem:[#allocation5 + $0x130] sm:$0xff]
    %v162 = vld [vmem:[#allocation5 + $0x138] sm:$0xff]
    %v163 = vld [vmem:[#allocation5 + $0x140] sm:$0xff]
    %v164 = vld [vmem:[#allocation5 + $0x148] sm:$0xff]
    %v165 = vld [vmem:[#allocation5 + $0x150] sm:$0xff]
    %v166 = vld [vmem:[#allocation5 + $0x158] sm:$0xff]
    %v167 = vld [vmem:[#allocation5 + $0x160] sm:$0xff]
    %v168 = vld [vmem:[#allocation5 + $0x168] sm:$0xff]
    %v169 = vld [vmem:[#allocation5 + $0x170] sm:$0xff]
    %v170 = vld [vmem:[#allocation5 + $0x178] sm:$0xff]
    %v171 = vld [vmem:[#allocation5 + $0x180] sm:$0xff]
    %v172 = vld [vmem:[#allocation5 + $0x188] sm:$0xff]
    %v173 = vld [vmem:[#allocation5 + $0x190] sm:$0xff]
    %v174 = vld [vmem:[#allocation5 + $0x198] sm:$0xff]
    %v175 = vld [vmem:[#allocation5 + $0x1a0] sm:$0xff]
    %v176 = vld [vmem:[#allocation5 + $0x1a8] sm:$0xff]
    %v177 = vld [vmem:[#allocation5 + $0x1b0] sm:$0xff]
    %v178 = vld [vmem:[#allocation5 + $0x1b8] sm:$0xff]
    %v179 = vld [vmem:[#allocation5 + $0x1c0] sm:$0xff]
    %v180 = vld [vmem:[#allocation5 + $0x1c8] sm:$0xff]
    %v181 = vld [vmem:[#allocation5 + $0x1d0] sm:$0xff]
    %v182 = vld [vmem:[#allocation5 + $0x1d8] sm:$0xff]
    %v183 = vld [vmem:[#allocation5 + $0x1e0] sm:$0xff]
    %v184 = vld [vmem:[#allocation5 + $0x1e8] sm:$0xff]
    %v185 = vld [vmem:[#allocation5 + $0x1f0] sm:$0xff]
    %v186 = vld [vmem:[#allocation5 + $0x1f8] sm:$0xff]
    %v187 = vld [vmem:[#allocation5 + $0x200] sm:$0xff]
    %v188 = vld [vmem:[#allocation5 + $0x208] sm:$0xff]
    %v189 = vld [vmem:[#allocation5 + $0x210] sm:$0xff]
    %v190 = vld [vmem:[#allocation5 + $0x218] sm:$0xff]
    %v191 = vld [vmem:[#allocation5 + $0x220] sm:$0xff]
    %v192 = vld [vmem:[#allocation5 + $0x228] sm:$0xff]
    %v193 = vld [vmem:[#allocation5 + $0x230] sm:$0xff]
    %v194 = vld [vmem:[#allocation5 + $0x238] sm:$0xff]
    %v195 = vld [vmem:[#allocation5 + $0x240] sm:$0xff]
    %v196 = vld [vmem:[#allocation5 + $0x248] sm:$0xff]
    %v197 = vld [vmem:[#allocation5 + $0x250] sm:$0xff]
    %v198 = vld [vmem:[#allocation5 + $0x258] sm:$0xff]
    %v199 = vld [vmem:[#allocation5 + $0x260] sm:$0xff]
    %v200 = vld [vmem:[#allocation5 + $0x268] sm:$0xff]
    %v201 = vld [vmem:[#allocation5 + $0x270] sm:$0xff]
    %v202 = vld [vmem:[#allocation5 + $0x278] sm:$0xff]
    %v203 = vld [vmem:[#allocation5 + $0x280] sm:$0xff]
    %v204 = vld [vmem:[#allocation5 + $0x288] sm:$0xff]
    %v205 = vld [vmem:[#allocation5 + $0x290] sm:$0xff]
    %v206 = vld [vmem:[#allocation5 + $0x298] sm:$0xff]
    %v207 = vld [vmem:[#allocation5 + $0x2a0] sm:$0xff]
    %v208 = vld [vmem:[#allocation5 + $0x2a8] sm:$0xff]
    %v209 = vld [vmem:[#allocation5 + $0x2b0] sm:$0xff]
    %v210 = vld [vmem:[#allocation5 + $0x2b8] sm:$0xff]
    %v211 = vld [vmem:[#allocation5 + $0x2c0] sm:$0xff]
    %v212 = vld [vmem:[#allocation5 + $0x2c8] sm:$0xff]
    %v213 = vld [vmem:[#allocation5 + $0x2d0] sm:$0xff]
    %v214 = vld [vmem:[#allocation5 + $0x2d8] sm:$0xff]
    %v215 = vld [vmem:[#allocation5 + $0x2e0] sm:$0xff]
    %v216 = vld [vmem:[#allocation5 + $0x2e8] sm:$0xff]
    %v217 = vld [vmem:[#allocation5 + $0x2f0] sm:$0xff]
    %v218 = vld [vmem:[#allocation5 + $0x2f8] sm:$0xff]
    %v219 = vld [vmem:[#allocation5 + $0x300] sm:$0xff]
    %v220 = vld [vmem:[#allocation5 + $0x308] sm:$0xff]
    %v221 = vld [vmem:[#allocation5 + $0x310] sm:$0xff]
    %v222 = vld [vmem:[#allocation5 + $0x318] sm:$0xff]
    %v223 = vld [vmem:[#allocation5 + $0x320] sm:$0xff]
    %v224 = vld [vmem:[#allocation5 + $0x328] sm:$0xff]
    %v225 = vld [vmem:[#allocation5 + $0x330] sm:$0xff]
    %v226 = vld [vmem:[#allocation5 + $0x338] sm:$0xff]
    %v227 = vld [vmem:[#allocation5 + $0x340] sm:$0xff]
    %v228 = vld [vmem:[#allocation5 + $0x348] sm:$0xff]
    %v229 = vld [vmem:[#allocation5 + $0x350] sm:$0xff]
    %v230 = vld [vmem:[#allocation5 + $0x358] sm:$0xff]
    %v231 = vld [vmem:[#allocation5 + $0x360] sm:$0xff]
    %v232 = vld [vmem:[#allocation5 + $0x368] sm:$0xff]
    %v233 = vld [vmem:[#allocation5 + $0x370] sm:$0xff]
    %v234 = vld [vmem:[#allocation5 + $0x378] sm:$0xff]
    %v235 = vld [vmem:[#allocation5 + $0x380] sm:$0xff]
    %v236 = vld [vmem:[#allocation5 + $0x388] sm:$0xff]
    %v237 = vld [vmem:[#allocation5 + $0x390] sm:$0xff]
    %v238 = vld [vmem:[#allocation5 + $0x398] sm:$0xff]
    %v239 = vld [vmem:[#allocation5 + $0x3a0] sm:$0xff]
    %v240 = vld [vmem:[#allocation5 + $0x3a8] sm:$0xff]
    %v241 = vld [vmem:[#allocation5 + $0x3b0] sm:$0xff]
    %v242 = vld [vmem:[#allocation5 + $0x3b8] sm:$0xff]
    %v243 = vld [vmem:[#allocation5 + $0x3c0] sm:$0xff]
    %v244 = vld [vmem:[#allocation5 + $0x3c8] sm:$0xff]
    %v245 = vld [vmem:[#allocation5 + $0x3d0] sm:$0xff]
    %v246 = vld [vmem:[#allocation5 + $0x3d8] sm:$0xff]
    %v247 = vld [vmem:[#allocation5 + $0x3e0] sm:$0xff]
    %v248 = vld [vmem:[#allocation5 + $0x3e8] sm:$0xff]
    %v249 = vld [vmem:[#allocation5 + $0x3f0] sm:$0xff]
    %v250 = vld [vmem:[#allocation5 + $0x3f8] sm:$0xff]
    %v251 = vld [vmem:[#allocation5 + $0x400] sm:$0xff]
    %v252 = vld [vmem:[#allocation5 + $0x408] sm:$0xff]
    %v253 = vld [vmem:[#allocation5 + $0x410] sm:$0xff]
    %v254 = vld [vmem:[#allocation5 + $0x418] sm:$0xff]
    %v255 = vld [vmem:[#allocation5 + $0x420] sm:$0xff]
    %v256 = vld [vmem:[#allocation5 + $0x428] sm:$0xff]
    %v257 = vld [vmem:[#allocation5 + $0x430] sm:$0xff]
    %v258 = vld [vmem:[#allocation5 + $0x438] sm:$0xff]
    %v259 = vld [vmem:[#allocation5 + $0x440] sm:$0xff]
    %v260 = vld [vmem:[#allocation5 + $0x448] sm:$0xff]
    %v261 = vld [vmem:[#allocation5 + $0x450] sm:$0xff]
    %v262 = vld [vmem:[#allocation5 + $0x458] sm:$0xff]
    %v263 = vld [vmem:[#allocation5 + $0x460] sm:$0xff]
    %v264 = vld [vmem:[#allocation5 + $0x468] sm:$0xff]
    %v265 = vld [vmem:[#allocation5 + $0x470] sm:$0xff]
    %v266 = vld [vmem:[#allocation5 + $0x478] sm:$0xff]
    %v267 = vld [vmem:[#allocation5 + $0x480] sm:$0xff]
    %v268 = vld [vmem:[#allocation5 + $0x488] sm:$0xff]
    %v269 = vld [vmem:[#allocation5 + $0x490] sm:$0xff]
    %v270 = vld [vmem:[#allocation5 + $0x498] sm:$0xff]
    %v271 = vld [vmem:[#allocation5 + $0x4a0] sm:$0xff]
    %v272 = vld [vmem:[#allocation5 + $0x4a8] sm:$0xff]
    %v273 = vld [vmem:[#allocation5 + $0x4b0] sm:$0xff]
    %v274 = vld [vmem:[#allocation5 + $0x4b8] sm:$0xff]
    %v275 = vld [vmem:[#allocation5 + $0x4c0] sm:$0xff]
    %v276 = vld [vmem:[#allocation5 + $0x4c8] sm:$0xff]
    %v277 = vld [vmem:[#allocation5 + $0x4d0] sm:$0xff]
    %v278 = vld [vmem:[#allocation5 + $0x4d8] sm:$0xff]
    %v279 = vld [vmem:[#allocation5 + $0x4e0] sm:$0xff]
    %v280 = vld [vmem:[#allocation5 + $0x4e8] sm:$0xff]
    %v281 = vld [vmem:[#allocation5 + $0x4f0] sm:$0xff]
    %v282 = vld [vmem:[#allocation5 + $0x4f8] sm:$0xff]
    %v283 = vld [vmem:[#allocation5 + $0x500] sm:$0xff]
    %v284 = vld [vmem:[#allocation5 + $0x508] sm:$0xff]
    %v285 = vld [vmem:[#allocation5 + $0x510] sm:$0xff]
    %v286 = vld [vmem:[#allocation5 + $0x518] sm:$0xff]
    %v287 = vld [vmem:[#allocation5 + $0x520] sm:$0xff]
    %v288 = vld [vmem:[#allocation5 + $0x528] sm:$0xff]
    %v289 = vld [vmem:[#allocation5 + $0x530] sm:$0xff]
    %v290 = vld [vmem:[#allocation5 + $0x538] sm:$0xff]
    %v291 = vld [vmem:[#allocation5 + $0x540] sm:$0xff]
    %v292 = vld [vmem:[#allocation5 + $0x548] sm:$0xff]
    %v293 = vld [vmem:[#allocation5 + $0x550] sm:$0xff]
    %v294 = vld [vmem:[#allocation5 + $0x558] sm:$0xff]
    %v295 = vld [vmem:[#allocation5 + $0x560] sm:$0xff]
    %v296 = vld [vmem:[#allocation5 + $0x568] sm:$0xff]
    %v297 = vld [vmem:[#allocation5 + $0x570] sm:$0xff]
    %v298 = vld [vmem:[#allocation5 + $0x578] sm:$0xff]
    %v299 = vld [vmem:[#allocation5 + $0x580] sm:$0xff]
    %v300 = vld [vmem:[#allocation5 + $0x588] sm:$0xff]
    %v301 = vld [vmem:[#allocation5 + $0x590] sm:$0xff]
    %v302 = vld [vmem:[#allocation5 + $0x598] sm:$0xff]
    %v303 = vld [vmem:[#allocation5 + $0x5a0] sm:$0xff]
    %v304 = vld [vmem:[#allocation5 + $0x5a8] sm:$0xff]
    %v305 = vld [vmem:[#allocation5 + $0x5b0] sm:$0xff]
    %v306 = vld [vmem:[#allocation5 + $0x5b8] sm:$0xff]
    %v307 = vld [vmem:[#allocation5 + $0x5c0] sm:$0xff]
    %v308 = vld [vmem:[#allocation5 + $0x5c8] sm:$0xff]
    %v309 = vld [vmem:[#allocation5 + $0x5d0] sm:$0xff]
    %v310 = vld [vmem:[#allocation5 + $0x5d8] sm:$0xff]
    %v311 = vld [vmem:[#allocation5 + $0x5e0] sm:$0xff]
    %v312 = vld [vmem:[#allocation5 + $0x5e8] sm:$0xff]
    %v313 = vld [vmem:[#allocation5 + $0x5f0] sm:$0xff]
    %v314 = vld [vmem:[#allocation5 + $0x5f8] sm:$0xff]
    %v315 = vld [vmem:[#allocation5 + $0x600] sm:$0xff]
    %v316 = vld [vmem:[#allocation5 + $0x608] sm:$0xff]
    %v317 = vld [vmem:[#allocation5 + $0x610] sm:$0xff]
    %v318 = vld [vmem:[#allocation5 + $0x618] sm:$0xff]
    %v319 = vld [vmem:[#allocation5 + $0x620] sm:$0xff]
    %v320 = vld [vmem:[#allocation5 + $0x628] sm:$0xff]
    %v321 = vld [vmem:[#allocation5 + $0x630] sm:$0xff]
    %v322 = vld [vmem:[#allocation5 + $0x638] sm:$0xff]
    %v323 = vld [vmem:[#allocation5 + $0x640] sm:$0xff]
    %v324 = vld [vmem:[#allocation5 + $0x648] sm:$0xff]
    %v325 = vld [vmem:[#allocation5 + $0x650] sm:$0xff]
    %v326 = vld [vmem:[#allocation5 + $0x658] sm:$0xff]
    %v327 = vld [vmem:[#allocation5 + $0x660] sm:$0xff]
    %v328 = vld [vmem:[#allocation5 + $0x668] sm:$0xff]
    %v329 = vld [vmem:[#allocation5 + $0x670] sm:$0xff]
    %v330 = vld [vmem:[#allocation5 + $0x678] sm:$0xff]
    %v331 = vld [vmem:[#allocation5 + $0x680] sm:$0xff]
    %v332 = vld [vmem:[#allocation5 + $0x688] sm:$0xff]
    %v333 = vld [vmem:[#allocation5 + $0x690] sm:$0xff]
    %v334 = vld [vmem:[#allocation5 + $0x698] sm:$0xff]
    %v335 = vld [vmem:[#allocation5 + $0x6a0] sm:$0xff]
    %v336 = vld [vmem:[#allocation5 + $0x6a8] sm:$0xff]
    %v337 = vld [vmem:[#allocation5 + $0x6b0] sm:$0xff]
    %v338 = vld [vmem:[#allocation5 + $0x6b8] sm:$0xff]
    %v339 = vld [vmem:[#allocation5 + $0x6c0] sm:$0xff]
    %v340 = vld [vmem:[#allocation5 + $0x6c8] sm:$0xff]
    %v341 = vld [vmem:[#allocation5 + $0x6d0] sm:$0xff]
    %v342 = vld [vmem:[#allocation5 + $0x6d8] sm:$0xff]
    %v343 = vld [vmem:[#allocation5 + $0x6e0] sm:$0xff]
    %v344 = vld [vmem:[#allocation5 + $0x6e8] sm:$0xff]
    %v345 = vld [vmem:[#allocation5 + $0x6f0] sm:$0xff]
    %v346 = vld [vmem:[#allocation5 + $0x6f8] sm:$0xff]
    %v347 = vld [vmem:[#allocation5 + $0x700] sm:$0xff]
    %v348 = vld [vmem:[#allocation5 + $0x708] sm:$0xff]
    %v349 = vld [vmem:[#allocation5 + $0x710] sm:$0xff]
    %v350 = vld [vmem:[#allocation5 + $0x718] sm:$0xff]
    %v351 = vld [vmem:[#allocation5 + $0x720] sm:$0xff]
    %v352 = vld [vmem:[#allocation5 + $0x728] sm:$0xff]
    %v353 = vld [vmem:[#allocation5 + $0x730] sm:$0xff]
    %v354 = vld [vmem:[#allocation5 + $0x738] sm:$0xff]
    %v355 = vld [vmem:[#allocation5 + $0x740] sm:$0xff]
    %v356 = vld [vmem:[#allocation5 + $0x748] sm:$0xff]
    %v357 = vld [vmem:[#allocation5 + $0x750] sm:$0xff]
    %v358 = vld [vmem:[#allocation5 + $0x758] sm:$0xff]
    %v359 = vld [vmem:[#allocation5 + $0x760] sm:$0xff]
    %v360 = vld [vmem:[#allocation5 + $0x768] sm:$0xff]
    %v361 = vld [vmem:[#allocation5 + $0x770] sm:$0xff]
    %v362 = vld [vmem:[#allocation5 + $0x778] sm:$0xff]
    %v363 = vld [vmem:[#allocation5 + $0x780] sm:$0xff]
    %v364 = vld [vmem:[#allocation5 + $0x788] sm:$0xff]
    %v365 = vld [vmem:[#allocation5 + $0x790] sm:$0xff]
    %v366 = vld [vmem:[#allocation5 + $0x798] sm:$0xff]
    %v367 = vld [vmem:[#allocation5 + $0x7a0] sm:$0xff]
    %v368 = vld [vmem:[#allocation5 + $0x7a8] sm:$0xff]
    %v369 = vld [vmem:[#allocation5 + $0x7b0] sm:$0xff]
    %v370 = vld [vmem:[#allocation5 + $0x7b8] sm:$0xff]
    %v371 = vld [vmem:[#allocation5 + $0x7c0] sm:$0xff]
    %v372 = vld [vmem:[#allocation5 + $0x7c8] sm:$0xff]
    %v373 = vld [vmem:[#allocation5 + $0x7d0] sm:$0xff]
    %v374 = vld [vmem:[#allocation5 + $0x7d8] sm:$0xff]
    %v375 = vld [vmem:[#allocation5 + $0x7e0] sm:$0xff]
    %v376 = vld [vmem:[#allocation5 + $0x7e8] sm:$0xff]
    %v377 = vld [vmem:[#allocation5 + $0x7f0] sm:$0xff]
    %v378 = vld [vmem:[#allocation5 + $0x7f8] sm:$0xff]
    %v379 = vld [vmem:[#allocation5 + $0x800] sm:$0xff]
    %v380 = vld [vmem:[#allocation5 + $0x808] sm:$0xff]
    %v381 = vld [vmem:[#allocation5 + $0x810] sm:$0xff]
    %v382 = vld [vmem:[#allocation5 + $0x818] sm:$0xff]
    %v383 = vld [vmem:[#allocation5 + $0x820] sm:$0xff]
    %v384 = vld [vmem:[#allocation5 + $0x828] sm:$0xff]
    %v385 = vld [vmem:[#allocation5 + $0x830] sm:$0xff]
    %v386 = vld [vmem:[#allocation5 + $0x838] sm:$0xff]
    %v387 = vld [vmem:[#allocation5 + $0x840] sm:$0xff]
    %v388 = vld [vmem:[#allocation5 + $0x848] sm:$0xff]
    %v389 = vld [vmem:[#allocation5 + $0x850] sm:$0xff]
    %v390 = vld [vmem:[#allocation5 + $0x858] sm:$0xff]
    %v391 = vld [vmem:[#allocation5 + $0x860] sm:$0xff]
    %v392 = vld [vmem:[#allocation5 + $0x868] sm:$0xff]
    %v393 = vld [vmem:[#allocation5 + $0x870] sm:$0xff]
    %v394 = vld [vmem:[#allocation5 + $0x878] sm:$0xff]
    %v395 = vld [vmem:[#allocation5 + $0x880] sm:$0xff]
    %v396 = vld [vmem:[#allocation5 + $0x888] sm:$0xff]
    %v397 = vld [vmem:[#allocation5 + $0x890] sm:$0xff]
    %v398 = vld [vmem:[#allocation5 + $0x898] sm:$0xff]
    %v399 = vld [vmem:[#allocation5 + $0x8a0] sm:$0xff]
    %v400 = vld [vmem:[#allocation5 + $0x8a8] sm:$0xff]
    %v401 = vld [vmem:[#allocation5 + $0x8b0] sm:$0xff]
    %v402 = vld [vmem:[#allocation5 + $0x8b8] sm:$0xff]
    %v403 = vld [vmem:[#allocation5 + $0x8c0] sm:$0xff]
    %v404 = vld [vmem:[#allocation5 + $0x8c8] sm:$0xff]
    %v405 = vld [vmem:[#allocation5 + $0x8d0] sm:$0xff]
    %v406 = vld [vmem:[#allocation5 + $0x8d8] sm:$0xff]
    %v407 = vld [vmem:[#allocation5 + $0x8e0] sm:$0xff]
    %v408 = vld [vmem:[#allocation5 + $0x8e8] sm:$0xff]
    %v409 = vld [vmem:[#allocation5 + $0x8f0] sm:$0xff]
    %v410 = vld [vmem:[#allocation5 + $0x8f8] sm:$0xff]
    %v411 = vld [vmem:[#allocation5 + $0x900] sm:$0xff]
    %v412 = vld [vmem:[#allocation5 + $0x908] sm:$0xff]
    %v413 = vld [vmem:[#allocation5 + $0x910] sm:$0xff]
    %v414 = vld [vmem:[#allocation5 + $0x918] sm:$0xff]
    %v415 = vld [vmem:[#allocation5 + $0x920] sm:$0xff]
    %v416 = vld [vmem:[#allocation5 + $0x928] sm:$0xff]
    %v417 = vld [vmem:[#allocation5 + $0x930] sm:$0xff]
    %v418 = vld [vmem:[#allocation5 + $0x938] sm:$0xff]
    %v419 = vld [vmem:[#allocation5 + $0x940] sm:$0xff]
    %v420 = vld [vmem:[#allocation5 + $0x948] sm:$0xff]
    %v421 = vld [vmem:[#allocation5 + $0x950] sm:$0xff]
    %v422 = vld [vmem:[#allocation5 + $0x958] sm:$0xff]
    %v423 = vld [vmem:[#allocation5 + $0x960] sm:$0xff]
    %v424 = vld [vmem:[#allocation5 + $0x968] sm:$0xff]
    %v425 = vld [vmem:[#allocation5 + $0x970] sm:$0xff]
    %v426 = vld [vmem:[#allocation5 + $0x978] sm:$0xff]
    %v427 = vld [vmem:[#allocation5 + $0x980] sm:$0xff]
    %v428 = vld [vmem:[#allocation5 + $0x988] sm:$0xff]
    %v429 = vld [vmem:[#allocation5 + $0x990] sm:$0xff]
    %v430 = vld [vmem:[#allocation5 + $0x998] sm:$0xff]
    %v431 = vld [vmem:[#allocation5 + $0x9a0] sm:$0xff]
    %v432 = vld [vmem:[#allocation5 + $0x9a8] sm:$0xff]
    %v433 = vld [vmem:[#allocation5 + $0x9b0] sm:$0xff]
    %v434 = vld [vmem:[#allocation5 + $0x9b8] sm:$0xff]
    %v435 = vld [vmem:[#allocation5 + $0x9c0] sm:$0xff]
    %v436 = vld [vmem:[#allocation5 + $0x9c8] sm:$0xff]
    %v437 = vld [vmem:[#allocation5 + $0x9d0] sm:$0xff]
    %v438 = vld [vmem:[#allocation5 + $0x9d8] sm:$0xff]
    %v439 = vld [vmem:[#allocation5 + $0x9e0] sm:$0xff]
    %v440 = vld [vmem:[#allocation5 + $0x9e8] sm:$0xff]
    %v441 = vld [vmem:[#allocation5 + $0x9f0] sm:$0xff]
    %v442 = vld [vmem:[#allocation5 + $0x9f8] sm:$0xff]
    %v443 = vld [vmem:[#allocation5 + $0xa00] sm:$0xff]
    %v444 = vld [vmem:[#allocation5 + $0xa08] sm:$0xff]
    %v445 = vld [vmem:[#allocation5 + $0xa10] sm:$0xff]
    %v446 = vld [vmem:[#allocation5 + $0xa18] sm:$0xff]
    %v447 = vld [vmem:[#allocation5 + $0xa20] sm:$0xff]
    %v448 = vld [vmem:[#allocation5 + $0xa28] sm:$0xff]
    %v449 = vld [vmem:[#allocation5 + $0xa30] sm:$0xff]
    %v450 = vld [vmem:[#allocation5 + $0xa38] sm:$0xff]
    %v451 = vld [vmem:[#allocation5 + $0xa40] sm:$0xff]
    %v452 = vld [vmem:[#allocation5 + $0xa48] sm:$0xff]
    %v453 = vld [vmem:[#allocation5 + $0xa50] sm:$0xff]
    %v454 = vld [vmem:[#allocation5 + $0xa58] sm:$0xff]
    %v455 = vld [vmem:[#allocation5 + $0xa60] sm:$0xff]
    %v456 = vld [vmem:[#allocation5 + $0xa68] sm:$0xff]
    %v457 = vld [vmem:[#allocation5 + $0xa70] sm:$0xff]
    %v458 = vld [vmem:[#allocation5 + $0xa78] sm:$0xff]
    %v459 = vld [vmem:[#allocation5 + $0xa80] sm:$0xff]
    %v460 = vld [vmem:[#allocation5 + $0xa88] sm:$0xff]
    %v461 = vld [vmem:[#allocation5 + $0xa90] sm:$0xff]
    %v462 = vld [vmem:[#allocation5 + $0xa98] sm:$0xff]
    %v463 = vld [vmem:[#allocation5 + $0xaa0] sm:$0xff]
    %v464 = vld [vmem:[#allocation5 + $0xaa8] sm:$0xff]
    %v465 = vld [vmem:[#allocation5 + $0xab0] sm:$0xff]
    %v466 = vld [vmem:[#allocation5 + $0xab8] sm:$0xff]
    %v467 = vld [vmem:[#allocation5 + $0xac0] sm:$0xff]
    %v468 = vld [vmem:[#allocation5 + $0xac8] sm:$0xff]
    %v469 = vld [vmem:[#allocation5 + $0xad0] sm:$0xff]
    %v470 = vld [vmem:[#allocation5 + $0xad8] sm:$0xff]
    %v471 = vld [vmem:[#allocation5 + $0xae0] sm:$0xff]
    %v472 = vld [vmem:[#allocation5 + $0xae8] sm:$0xff]
    %v473 = vld [vmem:[#allocation5 + $0xaf0] sm:$0xff]
    %v474 = vld [vmem:[#allocation5 + $0xaf8] sm:$0xff]
    %v475 = vld [vmem:[#allocation5 + $0xb00] sm:$0xff]
    %v476 = vld [vmem:[#allocation5 + $0xb08] sm:$0xff]
    %v477 = vld [vmem:[#allocation5 + $0xb10] sm:$0xff]
    %v478 = vld [vmem:[#allocation5 + $0xb18] sm:$0xff]
    %v479 = vld [vmem:[#allocation5 + $0xb20] sm:$0xff]
    %v480 = vld [vmem:[#allocation5 + $0xb28] sm:$0xff]
    %v481 = vld [vmem:[#allocation5 + $0xb30] sm:$0xff]
    %v482 = vld [vmem:[#allocation5 + $0xb38] sm:$0xff]
    %v483 = vld [vmem:[#allocation5 + $0xb40] sm:$0xff]
    %v484 = vld [vmem:[#allocation5 + $0xb48] sm:$0xff]
    %v485 = vld [vmem:[#allocation5 + $0xb50] sm:$0xff]
    %v486 = vld [vmem:[#allocation5 + $0xb58] sm:$0xff]
    %v487 = vld [vmem:[#allocation5 + $0xb60] sm:$0xff]
    %v488 = vld [vmem:[#allocation5 + $0xb68] sm:$0xff]
    %v489 = vld [vmem:[#allocation5 + $0xb70] sm:$0xff]
    %v490 = vld [vmem:[#allocation5 + $0xb78] sm:$0xff]
    %v491 = vld [vmem:[#allocation5 + $0xb80] sm:$0xff]
    %v492 = vld [vmem:[#allocation5 + $0xb88] sm:$0xff]
    %v493 = vld [vmem:[#allocation5 + $0xb90] sm:$0xff]
    %v494 = vld [vmem:[#allocation5 + $0xb98] sm:$0xff]
    %v495 = vld [vmem:[#allocation5 + $0xba0] sm:$0xff]
    %v496 = vld [vmem:[#allocation5 + $0xba8] sm:$0xff]
    %v497 = vld [vmem:[#allocation5 + $0xbb0] sm:$0xff]
    %v498 = vld [vmem:[#allocation5 + $0xbb8] sm:$0xff]
    %v499 = vld [vmem:[#allocation5 + $0xbc0] sm:$0xff]
    %v500 = vld [vmem:[#allocation5 + $0xbc8] sm:$0xff]
    %v501 = vld [vmem:[#allocation5 + $0xbd0] sm:$0xff]
    %v502 = vld [vmem:[#allocation5 + $0xbd8] sm:$0xff]
    %v503 = vld [vmem:[#allocation5 + $0xbe0] sm:$0xff]
    %v504 = vld [vmem:[#allocation5 + $0xbe8] sm:$0xff]
    %v505 = vld [vmem:[#allocation5 + $0xbf0] sm:$0xff]
    %v506 = vld [vmem:[#allocation5 + $0xbf8] sm:$0xff]
    %v507 = vld [vmem:[#allocation7] sm:$0xff]
    %v509 = vlaneseq
    %v510 = vshrl.u32 %v509, 7
    %v511 = vsub.s32 0, %v510
    %v512 = vrot.slane %v507, %v511
    %v513 = vlaneseq
    %v514 = vshrl.u32 %v513, 7
    %v515 = vsub.s32 1, %v514
    %v516 = vrot.slane %v507, %v515
    %v517 = vlaneseq
    %v518 = vshrl.u32 %v517, 7
    %v519 = vsub.s32 2, %v518
    %v520 = vrot.slane %v507, %v519
    %v521 = vlaneseq
    %v522 = vshrl.u32 %v521, 7
    %v523 = vsub.s32 3, %v522
    %v524 = vrot.slane %v507, %v523
    %v525 = vlaneseq
    %v526 = vshrl.u32 %v525, 7
    %v527 = vsub.s32 4, %v526
    %v528 = vrot.slane %v507, %v527
    %v529 = vlaneseq
    %v530 = vshrl.u32 %v529, 7
    %v531 = vsub.s32 5, %v530
    %v532 = vrot.slane %v507, %v531
    %v533 = vlaneseq
    %v534 = vshrl.u32 %v533, 7
    %v535 = vsub.s32 6, %v534
    %v536 = vrot.slane %v507, %v535
    %v537 = vlaneseq
    %v538 = vshrl.u32 %v537, 7
    %v539 = vsub.s32 7, %v538
    %v540 = vrot.slane %v507, %v539
    %v555 = vunpack.c.l.b16 %v117
    %v556 = vunpack.c.h.b16 %v117
    %v557 = vunpack.c.l.b16 %v118
    %v558 = vunpack.c.h.b16 %v118
    %v559 = vunpack.c.l.b16 %v119
    %v560 = vunpack.c.h.b16 %v119
    %v561 = vunpack.c.l.b16 %v120
    %v562 = vunpack.c.h.b16 %v120
    %v563 = vunpack.c.l.b16 %v121
    %v564 = vunpack.c.h.b16 %v121
    %v565 = vunpack.c.l.b16 %v122
    %v566 = vunpack.c.h.b16 %v122
    %v567 = vpack.c.b16 %v561, %v555
    %v568 = vpack.c.b16 %v562, %v556
    %v569 = vpack.c.b16 %v563, %v557
    %v570 = vpack.c.b16 %v564, %v558
    %v571 = vpack.c.b16 %v565, %v559
    %v572 = vpack.c.b16 %v566, %v560
    %v963 = vunpack.c.l.b16 %v123
    %v964 = vunpack.c.h.b16 %v123
    %v965 = vunpack.c.l.b16 %v124
    %v966 = vunpack.c.h.b16 %v124
    %v967 = vunpack.c.l.b16 %v125
    %v968 = vunpack.c.h.b16 %v125
    %v969 = vunpack.c.l.b16 %v126
    %v970 = vunpack.c.h.b16 %v126
    %v971 = vunpack.c.l.b16 %v127
    %v972 = vunpack.c.h.b16 %v127
    %v973 = vunpack.c.l.b16 %v128
    %v974 = vunpack.c.h.b16 %v128
    %v975 = vunpack.c.l.b16 %v129
    %v976 = vunpack.c.h.b16 %v129
    %v977 = vunpack.c.l.b16 %v130
    %v978 = vunpack.c.h.b16 %v130
    %v979 = vunpack.c.l.b16 %v131
    %v980 = vunpack.c.h.b16 %v131
    %v981 = vunpack.c.l.b16 %v132
    %v982 = vunpack.c.h.b16 %v132
    %v983 = vunpack.c.l.b16 %v133
    %v984 = vunpack.c.h.b16 %v133
    %v985 = vunpack.c.l.b16 %v134
    %v986 = vunpack.c.h.b16 %v134
    %v987 = vunpack.c.l.b16 %v135
    %v988 = vunpack.c.h.b16 %v135
    %v989 = vunpack.c.l.b16 %v136
    %v990 = vunpack.c.h.b16 %v136
    %v991 = vunpack.c.l.b16 %v137
    %v992 = vunpack.c.h.b16 %v137
    %v993 = vunpack.c.l.b16 %v138
    %v994 = vunpack.c.h.b16 %v138
    %v995 = vunpack.c.l.b16 %v139
    %v996 = vunpack.c.h.b16 %v139
    %v997 = vunpack.c.l.b16 %v140
    %v998 = vunpack.c.h.b16 %v140
    %v999 = vunpack.c.l.b16 %v141
    %v1000 = vunpack.c.h.b16 %v141
    %v1001 = vunpack.c.l.b16 %v142
    %v1002 = vunpack.c.h.b16 %v142
    %v1003 = vunpack.c.l.b16 %v143
    %v1004 = vunpack.c.h.b16 %v143
    %v1005 = vunpack.c.l.b16 %v144
    %v1006 = vunpack.c.h.b16 %v144
    %v1007 = vunpack.c.l.b16 %v145
    %v1008 = vunpack.c.h.b16 %v145
    %v1009 = vunpack.c.l.b16 %v146
    %v1010 = vunpack.c.h.b16 %v146
    %v1011 = vunpack.c.l.b16 %v147
    %v1012 = vunpack.c.h.b16 %v147
    %v1013 = vunpack.c.l.b16 %v148
    %v1014 = vunpack.c.h.b16 %v148
    %v1015 = vunpack.c.l.b16 %v149
    %v1016 = vunpack.c.h.b16 %v149
    %v1017 = vunpack.c.l.b16 %v150
    %v1018 = vunpack.c.h.b16 %v150
    %v1019 = vunpack.c.l.b16 %v151
    %v1020 = vunpack.c.h.b16 %v151
    %v1021 = vunpack.c.l.b16 %v152
    %v1022 = vunpack.c.h.b16 %v152
    %v1023 = vunpack.c.l.b16 %v153
    %v1024 = vunpack.c.h.b16 %v153
    %v1025 = vunpack.c.l.b16 %v154
    %v1026 = vunpack.c.h.b16 %v154
    %v1027 = vunpack.c.l.b16 %v155
    %v1028 = vunpack.c.h.b16 %v155
    %v1029 = vunpack.c.l.b16 %v156
    %v1030 = vunpack.c.h.b16 %v156
    %v1031 = vunpack.c.l.b16 %v157
    %v1032 = vunpack.c.h.b16 %v157
    %v1033 = vunpack.c.l.b16 %v158
    %v1034 = vunpack.c.h.b16 %v158
    %v1035 = vunpack.c.l.b16 %v159
    %v1036 = vunpack.c.h.b16 %v159
    %v1037 = vunpack.c.l.b16 %v160
    %v1038 = vunpack.c.h.b16 %v160
    %v1039 = vunpack.c.l.b16 %v161
    %v1040 = vunpack.c.h.b16 %v161
    %v1041 = vunpack.c.l.b16 %v162
    %v1042 = vunpack.c.h.b16 %v162
    %v1043 = vunpack.c.l.b16 %v163
    %v1044 = vunpack.c.h.b16 %v163
    %v1045 = vunpack.c.l.b16 %v164
    %v1046 = vunpack.c.h.b16 %v164
    %v1047 = vunpack.c.l.b16 %v165
    %v1048 = vunpack.c.h.b16 %v165
    %v1049 = vunpack.c.l.b16 %v166
    %v1050 = vunpack.c.h.b16 %v166
    %v1051 = vunpack.c.l.b16 %v167
    %v1052 = vunpack.c.h.b16 %v167
    %v1053 = vunpack.c.l.b16 %v168
    %v1054 = vunpack.c.h.b16 %v168
    %v1055 = vunpack.c.l.b16 %v169
    %v1056 = vunpack.c.h.b16 %v169
    %v1057 = vunpack.c.l.b16 %v170
    %v1058 = vunpack.c.h.b16 %v170
    %v1059 = vunpack.c.l.b16 %v171
    %v1060 = vunpack.c.h.b16 %v171
    %v1061 = vunpack.c.l.b16 %v172
    %v1062 = vunpack.c.h.b16 %v172
    %v1063 = vunpack.c.l.b16 %v173
    %v1064 = vunpack.c.h.b16 %v173
    %v1065 = vunpack.c.l.b16 %v174
    %v1066 = vunpack.c.h.b16 %v174
    %v1067 = vunpack.c.l.b16 %v175
    %v1068 = vunpack.c.h.b16 %v175
    %v1069 = vunpack.c.l.b16 %v176
    %v1070 = vunpack.c.h.b16 %v176
    %v1071 = vunpack.c.l.b16 %v177
    %v1072 = vunpack.c.h.b16 %v177
    %v1073 = vunpack.c.l.b16 %v178
    %v1074 = vunpack.c.h.b16 %v178
    %v1075 = vunpack.c.l.b16 %v179
    %v1076 = vunpack.c.h.b16 %v179
    %v1077 = vunpack.c.l.b16 %v180
    %v1078 = vunpack.c.h.b16 %v180
    %v1079 = vunpack.c.l.b16 %v181
    %v1080 = vunpack.c.h.b16 %v181
    %v1081 = vunpack.c.l.b16 %v182
    %v1082 = vunpack.c.h.b16 %v182
    %v1083 = vunpack.c.l.b16 %v183
    %v1084 = vunpack.c.h.b16 %v183
    %v1085 = vunpack.c.l.b16 %v184
    %v1086 = vunpack.c.h.b16 %v184
    %v1087 = vunpack.c.l.b16 %v185
    %v1088 = vunpack.c.h.b16 %v185
    %v1089 = vunpack.c.l.b16 %v186
    %v1090 = vunpack.c.h.b16 %v186
    %v1091 = vunpack.c.l.b16 %v187
    %v1092 = vunpack.c.h.b16 %v187
    %v1093 = vunpack.c.l.b16 %v188
    %v1094 = vunpack.c.h.b16 %v188
    %v1095 = vunpack.c.l.b16 %v189
    %v1096 = vunpack.c.h.b16 %v189
    %v1097 = vunpack.c.l.b16 %v190
    %v1098 = vunpack.c.h.b16 %v190
    %v1099 = vunpack.c.l.b16 %v191
    %v1100 = vunpack.c.h.b16 %v191
    %v1101 = vunpack.c.l.b16 %v192
    %v1102 = vunpack.c.h.b16 %v192
    %v1103 = vunpack.c.l.b16 %v193
    %v1104 = vunpack.c.h.b16 %v193
    %v1105 = vunpack.c.l.b16 %v194
    %v1106 = vunpack.c.h.b16 %v194
    %v1107 = vunpack.c.l.b16 %v195
    %v1108 = vunpack.c.h.b16 %v195
    %v1109 = vunpack.c.l.b16 %v196
    %v1110 = vunpack.c.h.b16 %v196
    %v1111 = vunpack.c.l.b16 %v197
    %v1112 = vunpack.c.h.b16 %v197
    %v1113 = vunpack.c.l.b16 %v198
    %v1114 = vunpack.c.h.b16 %v198
    %v1115 = vunpack.c.l.b16 %v199
    %v1116 = vunpack.c.h.b16 %v199
    %v1117 = vunpack.c.l.b16 %v200
    %v1118 = vunpack.c.h.b16 %v200
    %v1119 = vunpack.c.l.b16 %v201
    %v1120 = vunpack.c.h.b16 %v201
    %v1121 = vunpack.c.l.b16 %v202
    %v1122 = vunpack.c.h.b16 %v202
    %v1123 = vunpack.c.l.b16 %v203
    %v1124 = vunpack.c.h.b16 %v203
    %v1125 = vunpack.c.l.b16 %v204
    %v1126 = vunpack.c.h.b16 %v204
    %v1127 = vunpack.c.l.b16 %v205
    %v1128 = vunpack.c.h.b16 %v205
    %v1129 = vunpack.c.l.b16 %v206
    %v1130 = vunpack.c.h.b16 %v206
    %v1131 = vunpack.c.l.b16 %v207
    %v1132 = vunpack.c.h.b16 %v207
    %v1133 = vunpack.c.l.b16 %v208
    %v1134 = vunpack.c.h.b16 %v208
    %v1135 = vunpack.c.l.b16 %v209
    %v1136 = vunpack.c.h.b16 %v209
    %v1137 = vunpack.c.l.b16 %v210
    %v1138 = vunpack.c.h.b16 %v210
    %v1139 = vunpack.c.l.b16 %v211
    %v1140 = vunpack.c.h.b16 %v211
    %v1141 = vunpack.c.l.b16 %v212
    %v1142 = vunpack.c.h.b16 %v212
    %v1143 = vunpack.c.l.b16 %v213
    %v1144 = vunpack.c.h.b16 %v213
    %v1145 = vunpack.c.l.b16 %v214
    %v1146 = vunpack.c.h.b16 %v214
    %v1147 = vunpack.c.l.b16 %v215
    %v1148 = vunpack.c.h.b16 %v215
    %v1149 = vunpack.c.l.b16 %v216
    %v1150 = vunpack.c.h.b16 %v216
    %v1151 = vunpack.c.l.b16 %v217
    %v1152 = vunpack.c.h.b16 %v217
    %v1153 = vunpack.c.l.b16 %v218
    %v1154 = vunpack.c.h.b16 %v218
    %v1155 = vunpack.c.l.b16 %v219
    %v1156 = vunpack.c.h.b16 %v219
    %v1157 = vunpack.c.l.b16 %v220
    %v1158 = vunpack.c.h.b16 %v220
    %v1159 = vunpack.c.l.b16 %v221
    %v1160 = vunpack.c.h.b16 %v221
    %v1161 = vunpack.c.l.b16 %v222
    %v1162 = vunpack.c.h.b16 %v222
    %v1163 = vunpack.c.l.b16 %v223
    %v1164 = vunpack.c.h.b16 %v223
    %v1165 = vunpack.c.l.b16 %v224
    %v1166 = vunpack.c.h.b16 %v224
    %v1167 = vunpack.c.l.b16 %v225
    %v1168 = vunpack.c.h.b16 %v225
    %v1169 = vunpack.c.l.b16 %v226
    %v1170 = vunpack.c.h.b16 %v226
    %v1171 = vunpack.c.l.b16 %v227
    %v1172 = vunpack.c.h.b16 %v227
    %v1173 = vunpack.c.l.b16 %v228
    %v1174 = vunpack.c.h.b16 %v228
    %v1175 = vunpack.c.l.b16 %v229
    %v1176 = vunpack.c.h.b16 %v229
    %v1177 = vunpack.c.l.b16 %v230
    %v1178 = vunpack.c.h.b16 %v230
    %v1179 = vunpack.c.l.b16 %v231
    %v1180 = vunpack.c.h.b16 %v231
    %v1181 = vunpack.c.l.b16 %v232
    %v1182 = vunpack.c.h.b16 %v232
    %v1183 = vunpack.c.l.b16 %v233
    %v1184 = vunpack.c.h.b16 %v233
    %v1185 = vunpack.c.l.b16 %v234
    %v1186 = vunpack.c.h.b16 %v234
    %v1187 = vunpack.c.l.b16 %v235
    %v1188 = vunpack.c.h.b16 %v235
    %v1189 = vunpack.c.l.b16 %v236
    %v1190 = vunpack.c.h.b16 %v236
    %v1191 = vunpack.c.l.b16 %v237
    %v1192 = vunpack.c.h.b16 %v237
    %v1193 = vunpack.c.l.b16 %v238
    %v1194 = vunpack.c.h.b16 %v238
    %v1195 = vunpack.c.l.b16 %v239
    %v1196 = vunpack.c.h.b16 %v239
    %v1197 = vunpack.c.l.b16 %v240
    %v1198 = vunpack.c.h.b16 %v240
    %v1199 = vunpack.c.l.b16 %v241
    %v1200 = vunpack.c.h.b16 %v241
    %v1201 = vunpack.c.l.b16 %v242
    %v1202 = vunpack.c.h.b16 %v242
    %v1203 = vunpack.c.l.b16 %v243
    %v1204 = vunpack.c.h.b16 %v243
    %v1205 = vunpack.c.l.b16 %v244
    %v1206 = vunpack.c.h.b16 %v244
    %v1207 = vunpack.c.l.b16 %v245
    %v1208 = vunpack.c.h.b16 %v245
    %v1209 = vunpack.c.l.b16 %v246
    %v1210 = vunpack.c.h.b16 %v246
    %v1211 = vunpack.c.l.b16 %v247
    %v1212 = vunpack.c.h.b16 %v247
    %v1213 = vunpack.c.l.b16 %v248
    %v1214 = vunpack.c.h.b16 %v248
    %v1215 = vunpack.c.l.b16 %v249
    %v1216 = vunpack.c.h.b16 %v249
    %v1217 = vunpack.c.l.b16 %v250
    %v1218 = vunpack.c.h.b16 %v250
    %v1219 = vunpack.c.l.b16 %v251
    %v1220 = vunpack.c.h.b16 %v251
    %v1221 = vunpack.c.l.b16 %v252
    %v1222 = vunpack.c.h.b16 %v252
    %v1223 = vunpack.c.l.b16 %v253
    %v1224 = vunpack.c.h.b16 %v253
    %v1225 = vunpack.c.l.b16 %v254
    %v1226 = vunpack.c.h.b16 %v254
    %v1227 = vunpack.c.l.b16 %v255
    %v1228 = vunpack.c.h.b16 %v255
    %v1229 = vunpack.c.l.b16 %v256
    %v1230 = vunpack.c.h.b16 %v256
    %v1231 = vunpack.c.l.b16 %v257
    %v1232 = vunpack.c.h.b16 %v257
    %v1233 = vunpack.c.l.b16 %v258
    %v1234 = vunpack.c.h.b16 %v258
    %v1235 = vunpack.c.l.b16 %v259
    %v1236 = vunpack.c.h.b16 %v259
    %v1237 = vunpack.c.l.b16 %v260
    %v1238 = vunpack.c.h.b16 %v260
    %v1239 = vunpack.c.l.b16 %v261
    %v1240 = vunpack.c.h.b16 %v261
    %v1241 = vunpack.c.l.b16 %v262
    %v1242 = vunpack.c.h.b16 %v262
    %v1243 = vunpack.c.l.b16 %v263
    %v1244 = vunpack.c.h.b16 %v263
    %v1245 = vunpack.c.l.b16 %v264
    %v1246 = vunpack.c.h.b16 %v264
    %v1247 = vunpack.c.l.b16 %v265
    %v1248 = vunpack.c.h.b16 %v265
    %v1249 = vunpack.c.l.b16 %v266
    %v1250 = vunpack.c.h.b16 %v266
    %v1251 = vunpack.c.l.b16 %v267
    %v1252 = vunpack.c.h.b16 %v267
    %v1253 = vunpack.c.l.b16 %v268
    %v1254 = vunpack.c.h.b16 %v268
    %v1255 = vunpack.c.l.b16 %v269
    %v1256 = vunpack.c.h.b16 %v269
    %v1257 = vunpack.c.l.b16 %v270
    %v1258 = vunpack.c.h.b16 %v270
    %v1259 = vunpack.c.l.b16 %v271
    %v1260 = vunpack.c.h.b16 %v271
    %v1261 = vunpack.c.l.b16 %v272
    %v1262 = vunpack.c.h.b16 %v272
    %v1263 = vunpack.c.l.b16 %v273
    %v1264 = vunpack.c.h.b16 %v273
    %v1265 = vunpack.c.l.b16 %v274
    %v1266 = vunpack.c.h.b16 %v274
    %v1267 = vunpack.c.l.b16 %v275
    %v1268 = vunpack.c.h.b16 %v275
    %v1269 = vunpack.c.l.b16 %v276
    %v1270 = vunpack.c.h.b16 %v276
    %v1271 = vunpack.c.l.b16 %v277
    %v1272 = vunpack.c.h.b16 %v277
    %v1273 = vunpack.c.l.b16 %v278
    %v1274 = vunpack.c.h.b16 %v278
    %v1275 = vunpack.c.l.b16 %v279
    %v1276 = vunpack.c.h.b16 %v279
    %v1277 = vunpack.c.l.b16 %v280
    %v1278 = vunpack.c.h.b16 %v280
    %v1279 = vunpack.c.l.b16 %v281
    %v1280 = vunpack.c.h.b16 %v281
    %v1281 = vunpack.c.l.b16 %v282
    %v1282 = vunpack.c.h.b16 %v282
    %v1283 = vunpack.c.l.b16 %v283
    %v1284 = vunpack.c.h.b16 %v283
    %v1285 = vunpack.c.l.b16 %v284
    %v1286 = vunpack.c.h.b16 %v284
    %v1287 = vunpack.c.l.b16 %v285
    %v1288 = vunpack.c.h.b16 %v285
    %v1289 = vunpack.c.l.b16 %v286
    %v1290 = vunpack.c.h.b16 %v286
    %v1291 = vunpack.c.l.b16 %v287
    %v1292 = vunpack.c.h.b16 %v287
    %v1293 = vunpack.c.l.b16 %v288
    %v1294 = vunpack.c.h.b16 %v288
    %v1295 = vunpack.c.l.b16 %v289
    %v1296 = vunpack.c.h.b16 %v289
    %v1297 = vunpack.c.l.b16 %v290
    %v1298 = vunpack.c.h.b16 %v290
    %v1299 = vunpack.c.l.b16 %v291
    %v1300 = vunpack.c.h.b16 %v291
    %v1301 = vunpack.c.l.b16 %v292
    %v1302 = vunpack.c.h.b16 %v292
    %v1303 = vunpack.c.l.b16 %v293
    %v1304 = vunpack.c.h.b16 %v293
    %v1305 = vunpack.c.l.b16 %v294
    %v1306 = vunpack.c.h.b16 %v294
    %v1307 = vunpack.c.l.b16 %v295
    %v1308 = vunpack.c.h.b16 %v295
    %v1309 = vunpack.c.l.b16 %v296
    %v1310 = vunpack.c.h.b16 %v296
    %v1311 = vunpack.c.l.b16 %v297
    %v1312 = vunpack.c.h.b16 %v297
    %v1313 = vunpack.c.l.b16 %v298
    %v1314 = vunpack.c.h.b16 %v298
    %v1315 = vunpack.c.l.b16 %v299
    %v1316 = vunpack.c.h.b16 %v299
    %v1317 = vunpack.c.l.b16 %v300
    %v1318 = vunpack.c.h.b16 %v300
    %v1319 = vunpack.c.l.b16 %v301
    %v1320 = vunpack.c.h.b16 %v301
    %v1321 = vunpack.c.l.b16 %v302
    %v1322 = vunpack.c.h.b16 %v302
    %v1323 = vunpack.c.l.b16 %v303
    %v1324 = vunpack.c.h.b16 %v303
    %v1325 = vunpack.c.l.b16 %v304
    %v1326 = vunpack.c.h.b16 %v304
    %v1327 = vunpack.c.l.b16 %v305
    %v1328 = vunpack.c.h.b16 %v305
    %v1329 = vunpack.c.l.b16 %v306
    %v1330 = vunpack.c.h.b16 %v306
    %v1331 = vunpack.c.l.b16 %v307
    %v1332 = vunpack.c.h.b16 %v307
    %v1333 = vunpack.c.l.b16 %v308
    %v1334 = vunpack.c.h.b16 %v308
    %v1335 = vunpack.c.l.b16 %v309
    %v1336 = vunpack.c.h.b16 %v309
    %v1337 = vunpack.c.l.b16 %v310
    %v1338 = vunpack.c.h.b16 %v310
    %v1339 = vunpack.c.l.b16 %v311
    %v1340 = vunpack.c.h.b16 %v311
    %v1341 = vunpack.c.l.b16 %v312
    %v1342 = vunpack.c.h.b16 %v312
    %v1343 = vunpack.c.l.b16 %v313
    %v1344 = vunpack.c.h.b16 %v313
    %v1345 = vunpack.c.l.b16 %v314
    %v1346 = vunpack.c.h.b16 %v314
    %v1347 = vunpack.c.l.b16 %v315
    %v1348 = vunpack.c.h.b16 %v315
    %v1349 = vunpack.c.l.b16 %v316
    %v1350 = vunpack.c.h.b16 %v316
    %v1351 = vunpack.c.l.b16 %v317
    %v1352 = vunpack.c.h.b16 %v317
    %v1353 = vunpack.c.l.b16 %v318
    %v1354 = vunpack.c.h.b16 %v318
    %v1355 = vunpack.c.l.b16 %v319
    %v1356 = vunpack.c.h.b16 %v319
    %v1357 = vunpack.c.l.b16 %v320
    %v1358 = vunpack.c.h.b16 %v320
    %v1359 = vunpack.c.l.b16 %v321
    %v1360 = vunpack.c.h.b16 %v321
    %v1361 = vunpack.c.l.b16 %v322
    %v1362 = vunpack.c.h.b16 %v322
    %v1363 = vunpack.c.l.b16 %v323
    %v1364 = vunpack.c.h.b16 %v323
    %v1365 = vunpack.c.l.b16 %v324
    %v1366 = vunpack.c.h.b16 %v324
    %v1367 = vunpack.c.l.b16 %v325
    %v1368 = vunpack.c.h.b16 %v325
    %v1369 = vunpack.c.l.b16 %v326
    %v1370 = vunpack.c.h.b16 %v326
    %v1371 = vunpack.c.l.b16 %v327
    %v1372 = vunpack.c.h.b16 %v327
    %v1373 = vunpack.c.l.b16 %v328
    %v1374 = vunpack.c.h.b16 %v328
    %v1375 = vunpack.c.l.b16 %v329
    %v1376 = vunpack.c.h.b16 %v329
    %v1377 = vunpack.c.l.b16 %v330
    %v1378 = vunpack.c.h.b16 %v330
    %v1379 = vunpack.c.l.b16 %v331
    %v1380 = vunpack.c.h.b16 %v331
    %v1381 = vunpack.c.l.b16 %v332
    %v1382 = vunpack.c.h.b16 %v332
    %v1383 = vunpack.c.l.b16 %v333
    %v1384 = vunpack.c.h.b16 %v333
    %v1385 = vunpack.c.l.b16 %v334
    %v1386 = vunpack.c.h.b16 %v334
    %v1387 = vunpack.c.l.b16 %v335
    %v1388 = vunpack.c.h.b16 %v335
    %v1389 = vunpack.c.l.b16 %v336
    %v1390 = vunpack.c.h.b16 %v336
    %v1391 = vunpack.c.l.b16 %v337
    %v1392 = vunpack.c.h.b16 %v337
    %v1393 = vunpack.c.l.b16 %v338
    %v1394 = vunpack.c.h.b16 %v338
    %v1395 = vunpack.c.l.b16 %v339
    %v1396 = vunpack.c.h.b16 %v339
    %v1397 = vunpack.c.l.b16 %v340
    %v1398 = vunpack.c.h.b16 %v340
    %v1399 = vunpack.c.l.b16 %v341
    %v1400 = vunpack.c.h.b16 %v341
    %v1401 = vunpack.c.l.b16 %v342
    %v1402 = vunpack.c.h.b16 %v342
    %v1403 = vunpack.c.l.b16 %v343
    %v1404 = vunpack.c.h.b16 %v343
    %v1405 = vunpack.c.l.b16 %v344
    %v1406 = vunpack.c.h.b16 %v344
    %v1407 = vunpack.c.l.b16 %v345
    %v1408 = vunpack.c.h.b16 %v345
    %v1409 = vunpack.c.l.b16 %v346
    %v1410 = vunpack.c.h.b16 %v346
    %v1411 = vunpack.c.l.b16 %v347
    %v1412 = vunpack.c.h.b16 %v347
    %v1413 = vunpack.c.l.b16 %v348
    %v1414 = vunpack.c.h.b16 %v348
    %v1415 = vunpack.c.l.b16 %v349
    %v1416 = vunpack.c.h.b16 %v349
    %v1417 = vunpack.c.l.b16 %v350
    %v1418 = vunpack.c.h.b16 %v350
    %v1419 = vunpack.c.l.b16 %v351
    %v1420 = vunpack.c.h.b16 %v351
    %v1421 = vunpack.c.l.b16 %v352
    %v1422 = vunpack.c.h.b16 %v352
    %v1423 = vunpack.c.l.b16 %v353
    %v1424 = vunpack.c.h.b16 %v353
    %v1425 = vunpack.c.l.b16 %v354
    %v1426 = vunpack.c.h.b16 %v354
    %v1427 = vunpack.c.l.b16 %v355
    %v1428 = vunpack.c.h.b16 %v355
    %v1429 = vunpack.c.l.b16 %v356
    %v1430 = vunpack.c.h.b16 %v356
    %v1431 = vunpack.c.l.b16 %v357
    %v1432 = vunpack.c.h.b16 %v357
    %v1433 = vunpack.c.l.b16 %v358
    %v1434 = vunpack.c.h.b16 %v358
    %v1435 = vunpack.c.l.b16 %v359
    %v1436 = vunpack.c.h.b16 %v359
    %v1437 = vunpack.c.l.b16 %v360
    %v1438 = vunpack.c.h.b16 %v360
    %v1439 = vunpack.c.l.b16 %v361
    %v1440 = vunpack.c.h.b16 %v361
    %v1441 = vunpack.c.l.b16 %v362
    %v1442 = vunpack.c.h.b16 %v362
    %v1443 = vunpack.c.l.b16 %v363
    %v1444 = vunpack.c.h.b16 %v363
    %v1445 = vunpack.c.l.b16 %v364
    %v1446 = vunpack.c.h.b16 %v364
    %v1447 = vunpack.c.l.b16 %v365
    %v1448 = vunpack.c.h.b16 %v365
    %v1449 = vunpack.c.l.b16 %v366
    %v1450 = vunpack.c.h.b16 %v366
    %v1451 = vunpack.c.l.b16 %v367
    %v1452 = vunpack.c.h.b16 %v367
    %v1453 = vunpack.c.l.b16 %v368
    %v1454 = vunpack.c.h.b16 %v368
    %v1455 = vunpack.c.l.b16 %v369
    %v1456 = vunpack.c.h.b16 %v369
    %v1457 = vunpack.c.l.b16 %v370
    %v1458 = vunpack.c.h.b16 %v370
    %v1459 = vunpack.c.l.b16 %v371
    %v1460 = vunpack.c.h.b16 %v371
    %v1461 = vunpack.c.l.b16 %v372
    %v1462 = vunpack.c.h.b16 %v372
    %v1463 = vunpack.c.l.b16 %v373
    %v1464 = vunpack.c.h.b16 %v373
    %v1465 = vunpack.c.l.b16 %v374
    %v1466 = vunpack.c.h.b16 %v374
    %v1467 = vunpack.c.l.b16 %v375
    %v1468 = vunpack.c.h.b16 %v375
    %v1469 = vunpack.c.l.b16 %v376
    %v1470 = vunpack.c.h.b16 %v376
    %v1471 = vunpack.c.l.b16 %v377
    %v1472 = vunpack.c.h.b16 %v377
    %v1473 = vunpack.c.l.b16 %v378
    %v1474 = vunpack.c.h.b16 %v378
    %v1475 = vunpack.c.l.b16 %v379
    %v1476 = vunpack.c.h.b16 %v379
    %v1477 = vunpack.c.l.b16 %v380
    %v1478 = vunpack.c.h.b16 %v380
    %v1479 = vunpack.c.l.b16 %v381
    %v1480 = vunpack.c.h.b16 %v381
    %v1481 = vunpack.c.l.b16 %v382
    %v1482 = vunpack.c.h.b16 %v382
    %v1483 = vunpack.c.l.b16 %v383
    %v1484 = vunpack.c.h.b16 %v383
    %v1485 = vunpack.c.l.b16 %v384
    %v1486 = vunpack.c.h.b16 %v384
    %v1487 = vunpack.c.l.b16 %v385
    %v1488 = vunpack.c.h.b16 %v385
    %v1489 = vunpack.c.l.b16 %v386
    %v1490 = vunpack.c.h.b16 %v386
    %v1491 = vunpack.c.l.b16 %v387
    %v1492 = vunpack.c.h.b16 %v387
    %v1493 = vunpack.c.l.b16 %v388
    %v1494 = vunpack.c.h.b16 %v388
    %v1495 = vunpack.c.l.b16 %v389
    %v1496 = vunpack.c.h.b16 %v389
    %v1497 = vunpack.c.l.b16 %v390
    %v1498 = vunpack.c.h.b16 %v390
    %v1499 = vunpack.c.l.b16 %v391
    %v1500 = vunpack.c.h.b16 %v391
    %v1501 = vunpack.c.l.b16 %v392
    %v1502 = vunpack.c.h.b16 %v392
    %v1503 = vunpack.c.l.b16 %v393
    %v1504 = vunpack.c.h.b16 %v393
    %v1505 = vunpack.c.l.b16 %v394
    %v1506 = vunpack.c.h.b16 %v394
    %v1507 = vunpack.c.l.b16 %v395
    %v1508 = vunpack.c.h.b16 %v395
    %v1509 = vunpack.c.l.b16 %v396
    %v1510 = vunpack.c.h.b16 %v396
    %v1511 = vunpack.c.l.b16 %v397
    %v1512 = vunpack.c.h.b16 %v397
    %v1513 = vunpack.c.l.b16 %v398
    %v1514 = vunpack.c.h.b16 %v398
    %v1515 = vunpack.c.l.b16 %v399
    %v1516 = vunpack.c.h.b16 %v399
    %v1517 = vunpack.c.l.b16 %v400
    %v1518 = vunpack.c.h.b16 %v400
    %v1519 = vunpack.c.l.b16 %v401
    %v1520 = vunpack.c.h.b16 %v401
    %v1521 = vunpack.c.l.b16 %v402
    %v1522 = vunpack.c.h.b16 %v402
    %v1523 = vunpack.c.l.b16 %v403
    %v1524 = vunpack.c.h.b16 %v403
    %v1525 = vunpack.c.l.b16 %v404
    %v1526 = vunpack.c.h.b16 %v404
    %v1527 = vunpack.c.l.b16 %v405
    %v1528 = vunpack.c.h.b16 %v405
    %v1529 = vunpack.c.l.b16 %v406
    %v1530 = vunpack.c.h.b16 %v406
    %v1531 = vunpack.c.l.b16 %v407
    %v1532 = vunpack.c.h.b16 %v407
    %v1533 = vunpack.c.l.b16 %v408
    %v1534 = vunpack.c.h.b16 %v408
    %v1535 = vunpack.c.l.b16 %v409
    %v1536 = vunpack.c.h.b16 %v409
    %v1537 = vunpack.c.l.b16 %v410
    %v1538 = vunpack.c.h.b16 %v410
    %v1539 = vunpack.c.l.b16 %v411
    %v1540 = vunpack.c.h.b16 %v411
    %v1541 = vunpack.c.l.b16 %v412
    %v1542 = vunpack.c.h.b16 %v412
    %v1543 = vunpack.c.l.b16 %v413
    %v1544 = vunpack.c.h.b16 %v413
    %v1545 = vunpack.c.l.b16 %v414
    %v1546 = vunpack.c.h.b16 %v414
    %v1547 = vunpack.c.l.b16 %v415
    %v1548 = vunpack.c.h.b16 %v415
    %v1549 = vunpack.c.l.b16 %v416
    %v1550 = vunpack.c.h.b16 %v416
    %v1551 = vunpack.c.l.b16 %v417
    %v1552 = vunpack.c.h.b16 %v417
    %v1553 = vunpack.c.l.b16 %v418
    %v1554 = vunpack.c.h.b16 %v418
    %v1555 = vunpack.c.l.b16 %v419
    %v1556 = vunpack.c.h.b16 %v419
    %v1557 = vunpack.c.l.b16 %v420
    %v1558 = vunpack.c.h.b16 %v420
    %v1559 = vunpack.c.l.b16 %v421
    %v1560 = vunpack.c.h.b16 %v421
    %v1561 = vunpack.c.l.b16 %v422
    %v1562 = vunpack.c.h.b16 %v422
    %v1563 = vunpack.c.l.b16 %v423
    %v1564 = vunpack.c.h.b16 %v423
    %v1565 = vunpack.c.l.b16 %v424
    %v1566 = vunpack.c.h.b16 %v424
    %v1567 = vunpack.c.l.b16 %v425
    %v1568 = vunpack.c.h.b16 %v425
    %v1569 = vunpack.c.l.b16 %v426
    %v1570 = vunpack.c.h.b16 %v426
    %v1571 = vunpack.c.l.b16 %v427
    %v1572 = vunpack.c.h.b16 %v427
    %v1573 = vunpack.c.l.b16 %v428
    %v1574 = vunpack.c.h.b16 %v428
    %v1575 = vunpack.c.l.b16 %v429
    %v1576 = vunpack.c.h.b16 %v429
    %v1577 = vunpack.c.l.b16 %v430
    %v1578 = vunpack.c.h.b16 %v430
    %v1579 = vunpack.c.l.b16 %v431
    %v1580 = vunpack.c.h.b16 %v431
    %v1581 = vunpack.c.l.b16 %v432
    %v1582 = vunpack.c.h.b16 %v432
    %v1583 = vunpack.c.l.b16 %v433
    %v1584 = vunpack.c.h.b16 %v433
    %v1585 = vunpack.c.l.b16 %v434
    %v1586 = vunpack.c.h.b16 %v434
    %v1587 = vunpack.c.l.b16 %v435
    %v1588 = vunpack.c.h.b16 %v435
    %v1589 = vunpack.c.l.b16 %v436
    %v1590 = vunpack.c.h.b16 %v436
    %v1591 = vunpack.c.l.b16 %v437
    %v1592 = vunpack.c.h.b16 %v437
    %v1593 = vunpack.c.l.b16 %v438
    %v1594 = vunpack.c.h.b16 %v438
    %v1595 = vunpack.c.l.b16 %v439
    %v1596 = vunpack.c.h.b16 %v439
    %v1597 = vunpack.c.l.b16 %v440
    %v1598 = vunpack.c.h.b16 %v440
    %v1599 = vunpack.c.l.b16 %v441
    %v1600 = vunpack.c.h.b16 %v441
    %v1601 = vunpack.c.l.b16 %v442
    %v1602 = vunpack.c.h.b16 %v442
    %v1603 = vunpack.c.l.b16 %v443
    %v1604 = vunpack.c.h.b16 %v443
    %v1605 = vunpack.c.l.b16 %v444
    %v1606 = vunpack.c.h.b16 %v444
    %v1607 = vunpack.c.l.b16 %v445
    %v1608 = vunpack.c.h.b16 %v445
    %v1609 = vunpack.c.l.b16 %v446
    %v1610 = vunpack.c.h.b16 %v446
    %v1611 = vunpack.c.l.b16 %v447
    %v1612 = vunpack.c.h.b16 %v447
    %v1613 = vunpack.c.l.b16 %v448
    %v1614 = vunpack.c.h.b16 %v448
    %v1615 = vunpack.c.l.b16 %v449
    %v1616 = vunpack.c.h.b16 %v449
    %v1617 = vunpack.c.l.b16 %v450
    %v1618 = vunpack.c.h.b16 %v450
    %v1619 = vunpack.c.l.b16 %v451
    %v1620 = vunpack.c.h.b16 %v451
    %v1621 = vunpack.c.l.b16 %v452
    %v1622 = vunpack.c.h.b16 %v452
    %v1623 = vunpack.c.l.b16 %v453
    %v1624 = vunpack.c.h.b16 %v453
    %v1625 = vunpack.c.l.b16 %v454
    %v1626 = vunpack.c.h.b16 %v454
    %v1627 = vunpack.c.l.b16 %v455
    %v1628 = vunpack.c.h.b16 %v455
    %v1629 = vunpack.c.l.b16 %v456
    %v1630 = vunpack.c.h.b16 %v456
    %v1631 = vunpack.c.l.b16 %v457
    %v1632 = vunpack.c.h.b16 %v457
    %v1633 = vunpack.c.l.b16 %v458
    %v1634 = vunpack.c.h.b16 %v458
    %v1635 = vunpack.c.l.b16 %v459
    %v1636 = vunpack.c.h.b16 %v459
    %v1637 = vunpack.c.l.b16 %v460
    %v1638 = vunpack.c.h.b16 %v460
    %v1639 = vunpack.c.l.b16 %v461
    %v1640 = vunpack.c.h.b16 %v461
    %v1641 = vunpack.c.l.b16 %v462
    %v1642 = vunpack.c.h.b16 %v462
    %v1643 = vunpack.c.l.b16 %v463
    %v1644 = vunpack.c.h.b16 %v463
    %v1645 = vunpack.c.l.b16 %v464
    %v1646 = vunpack.c.h.b16 %v464
    %v1647 = vunpack.c.l.b16 %v465
    %v1648 = vunpack.c.h.b16 %v465
    %v1649 = vunpack.c.l.b16 %v466
    %v1650 = vunpack.c.h.b16 %v466
    %v1651 = vunpack.c.l.b16 %v467
    %v1652 = vunpack.c.h.b16 %v467
    %v1653 = vunpack.c.l.b16 %v468
    %v1654 = vunpack.c.h.b16 %v468
    %v1655 = vunpack.c.l.b16 %v469
    %v1656 = vunpack.c.h.b16 %v469
    %v1657 = vunpack.c.l.b16 %v470
    %v1658 = vunpack.c.h.b16 %v470
    %v1659 = vunpack.c.l.b16 %v471
    %v1660 = vunpack.c.h.b16 %v471
    %v1661 = vunpack.c.l.b16 %v472
    %v1662 = vunpack.c.h.b16 %v472
    %v1663 = vunpack.c.l.b16 %v473
    %v1664 = vunpack.c.h.b16 %v473
    %v1665 = vunpack.c.l.b16 %v474
    %v1666 = vunpack.c.h.b16 %v474
    %v1667 = vunpack.c.l.b16 %v475
    %v1668 = vunpack.c.h.b16 %v475
    %v1669 = vunpack.c.l.b16 %v476
    %v1670 = vunpack.c.h.b16 %v476
    %v1671 = vunpack.c.l.b16 %v477
    %v1672 = vunpack.c.h.b16 %v477
    %v1673 = vunpack.c.l.b16 %v478
    %v1674 = vunpack.c.h.b16 %v478
    %v1675 = vunpack.c.l.b16 %v479
    %v1676 = vunpack.c.h.b16 %v479
    %v1677 = vunpack.c.l.b16 %v480
    %v1678 = vunpack.c.h.b16 %v480
    %v1679 = vunpack.c.l.b16 %v481
    %v1680 = vunpack.c.h.b16 %v481
    %v1681 = vunpack.c.l.b16 %v482
    %v1682 = vunpack.c.h.b16 %v482
    %v1683 = vunpack.c.l.b16 %v483
    %v1684 = vunpack.c.h.b16 %v483
    %v1685 = vunpack.c.l.b16 %v484
    %v1686 = vunpack.c.h.b16 %v484
    %v1687 = vunpack.c.l.b16 %v485
    %v1688 = vunpack.c.h.b16 %v485
    %v1689 = vunpack.c.l.b16 %v486
    %v1690 = vunpack.c.h.b16 %v486
    %v1691 = vunpack.c.l.b16 %v487
    %v1692 = vunpack.c.h.b16 %v487
    %v1693 = vunpack.c.l.b16 %v488
    %v1694 = vunpack.c.h.b16 %v488
    %v1695 = vunpack.c.l.b16 %v489
    %v1696 = vunpack.c.h.b16 %v489
    %v1697 = vunpack.c.l.b16 %v490
    %v1698 = vunpack.c.h.b16 %v490
    %v1699 = vunpack.c.l.b16 %v491
    %v1700 = vunpack.c.h.b16 %v491
    %v1701 = vunpack.c.l.b16 %v492
    %v1702 = vunpack.c.h.b16 %v492
    %v1703 = vunpack.c.l.b16 %v493
    %v1704 = vunpack.c.h.b16 %v493
    %v1705 = vunpack.c.l.b16 %v494
    %v1706 = vunpack.c.h.b16 %v494
    %v1707 = vunpack.c.l.b16 %v495
    %v1708 = vunpack.c.h.b16 %v495
    %v1709 = vunpack.c.l.b16 %v496
    %v1710 = vunpack.c.h.b16 %v496
    %v1711 = vunpack.c.l.b16 %v497
    %v1712 = vunpack.c.h.b16 %v497
    %v1713 = vunpack.c.l.b16 %v498
    %v1714 = vunpack.c.h.b16 %v498
    %v1715 = vunpack.c.l.b16 %v499
    %v1716 = vunpack.c.h.b16 %v499
    %v1717 = vunpack.c.l.b16 %v500
    %v1718 = vunpack.c.h.b16 %v500
    %v1719 = vunpack.c.l.b16 %v501
    %v1720 = vunpack.c.h.b16 %v501
    %v1721 = vunpack.c.l.b16 %v502
    %v1722 = vunpack.c.h.b16 %v502
    %v1723 = vunpack.c.l.b16 %v503
    %v1724 = vunpack.c.h.b16 %v503
    %v1725 = vunpack.c.l.b16 %v504
    %v1726 = vunpack.c.h.b16 %v504
    %v1727 = vunpack.c.l.b16 %v505
    %v1728 = vunpack.c.h.b16 %v505
    %v1729 = vunpack.c.l.b16 %v506
    %v1730 = vunpack.c.h.b16 %v506
    %v1731 = vpack.c.b16 %v971, %v963
    %v1732 = vpack.c.b16 %v972, %v964
    %v1733 = vpack.c.b16 %v973, %v965
    %v1734 = vpack.c.b16 %v974, %v966
    %v1735 = vpack.c.b16 %v975, %v967
    %v1736 = vpack.c.b16 %v976, %v968
    %v1737 = vpack.c.b16 %v977, %v969
    %v1738 = vpack.c.b16 %v978, %v970
    %v1739 = vpack.c.b16 %v987, %v979
    %v1740 = vpack.c.b16 %v988, %v980
    %v1741 = vpack.c.b16 %v989, %v981
    %v1742 = vpack.c.b16 %v990, %v982
    %v1743 = vpack.c.b16 %v991, %v983
    %v1744 = vpack.c.b16 %v992, %v984
    %v1745 = vpack.c.b16 %v993, %v985
    %v1746 = vpack.c.b16 %v994, %v986
    %v1747 = vpack.c.b16 %v1003, %v995
    %v1748 = vpack.c.b16 %v1004, %v996
    %v1749 = vpack.c.b16 %v1005, %v997
    %v1750 = vpack.c.b16 %v1006, %v998
    %v1751 = vpack.c.b16 %v1007, %v999
    %v1752 = vpack.c.b16 %v1008, %v1000
    %v1753 = vpack.c.b16 %v1009, %v1001
    %v1754 = vpack.c.b16 %v1010, %v1002
    %v1755 = vpack.c.b16 %v1019, %v1011
    %v1756 = vpack.c.b16 %v1020, %v1012
    %v1757 = vpack.c.b16 %v1021, %v1013
    %v1758 = vpack.c.b16 %v1022, %v1014
    %v1759 = vpack.c.b16 %v1023, %v1015
    %v1760 = vpack.c.b16 %v1024, %v1016
    %v1761 = vpack.c.b16 %v1025, %v1017
    %v1762 = vpack.c.b16 %v1026, %v1018
    %v1763 = vpack.c.b16 %v1035, %v1027
    %v1764 = vpack.c.b16 %v1036, %v1028
    %v1765 = vpack.c.b16 %v1037, %v1029
    %v1766 = vpack.c.b16 %v1038, %v1030
    %v1767 = vpack.c.b16 %v1039, %v1031
    %v1768 = vpack.c.b16 %v1040, %v1032
    %v1769 = vpack.c.b16 %v1041, %v1033
    %v1770 = vpack.c.b16 %v1042, %v1034
    %v1771 = vpack.c.b16 %v1051, %v1043
    %v1772 = vpack.c.b16 %v1052, %v1044
    %v1773 = vpack.c.b16 %v1053, %v1045
    %v1774 = vpack.c.b16 %v1054, %v1046
    %v1775 = vpack.c.b16 %v1055, %v1047
    %v1776 = vpack.c.b16 %v1056, %v1048
    %v1777 = vpack.c.b16 %v1057, %v1049
    %v1778 = vpack.c.b16 %v1058, %v1050
    %v1779 = vpack.c.b16 %v1067, %v1059
    %v1780 = vpack.c.b16 %v1068, %v1060
    %v1781 = vpack.c.b16 %v1069, %v1061
    %v1782 = vpack.c.b16 %v1070, %v1062
    %v1783 = vpack.c.b16 %v1071, %v1063
    %v1784 = vpack.c.b16 %v1072, %v1064
    %v1785 = vpack.c.b16 %v1073, %v1065
    %v1786 = vpack.c.b16 %v1074, %v1066
    %v1787 = vpack.c.b16 %v1083, %v1075
    %v1788 = vpack.c.b16 %v1084, %v1076
    %v1789 = vpack.c.b16 %v1085, %v1077
    %v1790 = vpack.c.b16 %v1086, %v1078
    %v1791 = vpack.c.b16 %v1087, %v1079
    %v1792 = vpack.c.b16 %v1088, %v1080
    %v1793 = vpack.c.b16 %v1089, %v1081
    %v1794 = vpack.c.b16 %v1090, %v1082
    %v1795 = vpack.c.b16 %v1099, %v1091
    %v1796 = vpack.c.b16 %v1100, %v1092
    %v1797 = vpack.c.b16 %v1101, %v1093
    %v1798 = vpack.c.b16 %v1102, %v1094
    %v1799 = vpack.c.b16 %v1103, %v1095
    %v1800 = vpack.c.b16 %v1104, %v1096
    %v1801 = vpack.c.b16 %v1105, %v1097
    %v1802 = vpack.c.b16 %v1106, %v1098
    %v1803 = vpack.c.b16 %v1115, %v1107
    %v1804 = vpack.c.b16 %v1116, %v1108
    %v1805 = vpack.c.b16 %v1117, %v1109
    %v1806 = vpack.c.b16 %v1118, %v1110
    %v1807 = vpack.c.b16 %v1119, %v1111
    %v1808 = vpack.c.b16 %v1120, %v1112
    %v1809 = vpack.c.b16 %v1121, %v1113
    %v1810 = vpack.c.b16 %v1122, %v1114
    %v1811 = vpack.c.b16 %v1131, %v1123
    %v1812 = vpack.c.b16 %v1132, %v1124
    %v1813 = vpack.c.b16 %v1133, %v1125
    %v1814 = vpack.c.b16 %v1134, %v1126
    %v1815 = vpack.c.b16 %v1135, %v1127
    %v1816 = vpack.c.b16 %v1136, %v1128
    %v1817 = vpack.c.b16 %v1137, %v1129
    %v1818 = vpack.c.b16 %v1138, %v1130
    %v1819 = vpack.c.b16 %v1147, %v1139
    %v1820 = vpack.c.b16 %v1148, %v1140
    %v1821 = vpack.c.b16 %v1149, %v1141
    %v1822 = vpack.c.b16 %v1150, %v1142
    %v1823 = vpack.c.b16 %v1151, %v1143
    %v1824 = vpack.c.b16 %v1152, %v1144
    %v1825 = vpack.c.b16 %v1153, %v1145
    %v1826 = vpack.c.b16 %v1154, %v1146
    %v1827 = vpack.c.b16 %v1163, %v1155
    %v1828 = vpack.c.b16 %v1164, %v1156
    %v1829 = vpack.c.b16 %v1165, %v1157
    %v1830 = vpack.c.b16 %v1166, %v1158
    %v1831 = vpack.c.b16 %v1167, %v1159
    %v1832 = vpack.c.b16 %v1168, %v1160
    %v1833 = vpack.c.b16 %v1169, %v1161
    %v1834 = vpack.c.b16 %v1170, %v1162
    %v1835 = vpack.c.b16 %v1179, %v1171
    %v1836 = vpack.c.b16 %v1180, %v1172
    %v1837 = vpack.c.b16 %v1181, %v1173
    %v1838 = vpack.c.b16 %v1182, %v1174
    %v1839 = vpack.c.b16 %v1183, %v1175
    %v1840 = vpack.c.b16 %v1184, %v1176
    %v1841 = vpack.c.b16 %v1185, %v1177
    %v1842 = vpack.c.b16 %v1186, %v1178
    %v1843 = vpack.c.b16 %v1195, %v1187
    %v1844 = vpack.c.b16 %v1196, %v1188
    %v1845 = vpack.c.b16 %v1197, %v1189
    %v1846 = vpack.c.b16 %v1198, %v1190
    %v1847 = vpack.c.b16 %v1199, %v1191
    %v1848 = vpack.c.b16 %v1200, %v1192
    %v1849 = vpack.c.b16 %v1201, %v1193
    %v1850 = vpack.c.b16 %v1202, %v1194
    %v1851 = vpack.c.b16 %v1211, %v1203
    %v1852 = vpack.c.b16 %v1212, %v1204
    %v1853 = vpack.c.b16 %v1213, %v1205
    %v1854 = vpack.c.b16 %v1214, %v1206
    %v1855 = vpack.c.b16 %v1215, %v1207
    %v1856 = vpack.c.b16 %v1216, %v1208
    %v1857 = vpack.c.b16 %v1217, %v1209
    %v1858 = vpack.c.b16 %v1218, %v1210
    %v1859 = vpack.c.b16 %v1227, %v1219
    %v1860 = vpack.c.b16 %v1228, %v1220
    %v1861 = vpack.c.b16 %v1229, %v1221
    %v1862 = vpack.c.b16 %v1230, %v1222
    %v1863 = vpack.c.b16 %v1231, %v1223
    %v1864 = vpack.c.b16 %v1232, %v1224
    %v1865 = vpack.c.b16 %v1233, %v1225
    %v1866 = vpack.c.b16 %v1234, %v1226
    %v1867 = vpack.c.b16 %v1243, %v1235
    %v1868 = vpack.c.b16 %v1244, %v1236
    %v1869 = vpack.c.b16 %v1245, %v1237
    %v1870 = vpack.c.b16 %v1246, %v1238
    %v1871 = vpack.c.b16 %v1247, %v1239
    %v1872 = vpack.c.b16 %v1248, %v1240
    %v1873 = vpack.c.b16 %v1249, %v1241
    %v1874 = vpack.c.b16 %v1250, %v1242
    %v1875 = vpack.c.b16 %v1259, %v1251
    %v1876 = vpack.c.b16 %v1260, %v1252
    %v1877 = vpack.c.b16 %v1261, %v1253
    %v1878 = vpack.c.b16 %v1262, %v1254
    %v1879 = vpack.c.b16 %v1263, %v1255
    %v1880 = vpack.c.b16 %v1264, %v1256
    %v1881 = vpack.c.b16 %v1265, %v1257
    %v1882 = vpack.c.b16 %v1266, %v1258
    %v1883 = vpack.c.b16 %v1275, %v1267
    %v1884 = vpack.c.b16 %v1276, %v1268
    %v1885 = vpack.c.b16 %v1277, %v1269
    %v1886 = vpack.c.b16 %v1278, %v1270
    %v1887 = vpack.c.b16 %v1279, %v1271
    %v1888 = vpack.c.b16 %v1280, %v1272
    %v1889 = vpack.c.b16 %v1281, %v1273
    %v1890 = vpack.c.b16 %v1282, %v1274
    %v1891 = vpack.c.b16 %v1291, %v1283
    %v1892 = vpack.c.b16 %v1292, %v1284
    %v1893 = vpack.c.b16 %v1293, %v1285
    %v1894 = vpack.c.b16 %v1294, %v1286
    %v1895 = vpack.c.b16 %v1295, %v1287
    %v1896 = vpack.c.b16 %v1296, %v1288
    %v1897 = vpack.c.b16 %v1297, %v1289
    %v1898 = vpack.c.b16 %v1298, %v1290
    %v1899 = vpack.c.b16 %v1307, %v1299
    %v1900 = vpack.c.b16 %v1308, %v1300
    %v1901 = vpack.c.b16 %v1309, %v1301
    %v1902 = vpack.c.b16 %v1310, %v1302
    %v1903 = vpack.c.b16 %v1311, %v1303
    %v1904 = vpack.c.b16 %v1312, %v1304
    %v1905 = vpack.c.b16 %v1313, %v1305
    %v1906 = vpack.c.b16 %v1314, %v1306
    %v1907 = vpack.c.b16 %v1323, %v1315
    %v1908 = vpack.c.b16 %v1324, %v1316
    %v1909 = vpack.c.b16 %v1325, %v1317
    %v1910 = vpack.c.b16 %v1326, %v1318
    %v1911 = vpack.c.b16 %v1327, %v1319
    %v1912 = vpack.c.b16 %v1328, %v1320
    %v1913 = vpack.c.b16 %v1329, %v1321
    %v1914 = vpack.c.b16 %v1330, %v1322
    %v1915 = vpack.c.b16 %v1339, %v1331
    %v1916 = vpack.c.b16 %v1340, %v1332
    %v1917 = vpack.c.b16 %v1341, %v1333
    %v1918 = vpack.c.b16 %v1342, %v1334
    %v1919 = vpack.c.b16 %v1343, %v1335
    %v1920 = vpack.c.b16 %v1344, %v1336
    %v1921 = vpack.c.b16 %v1345, %v1337
    %v1922 = vpack.c.b16 %v1346, %v1338
    %v1923 = vpack.c.b16 %v1355, %v1347
    %v1924 = vpack.c.b16 %v1356, %v1348
    %v1925 = vpack.c.b16 %v1357, %v1349
    %v1926 = vpack.c.b16 %v1358, %v1350
    %v1927 = vpack.c.b16 %v1359, %v1351
    %v1928 = vpack.c.b16 %v1360, %v1352
    %v1929 = vpack.c.b16 %v1361, %v1353
    %v1930 = vpack.c.b16 %v1362, %v1354
    %v1931 = vpack.c.b16 %v1371, %v1363
    %v1932 = vpack.c.b16 %v1372, %v1364
    %v1933 = vpack.c.b16 %v1373, %v1365
    %v1934 = vpack.c.b16 %v1374, %v1366
    %v1935 = vpack.c.b16 %v1375, %v1367
    %v1936 = vpack.c.b16 %v1376, %v1368
    %v1937 = vpack.c.b16 %v1377, %v1369
    %v1938 = vpack.c.b16 %v1378, %v1370
    %v1939 = vpack.c.b16 %v1387, %v1379
    %v1940 = vpack.c.b16 %v1388, %v1380
    %v1941 = vpack.c.b16 %v1389, %v1381
    %v1942 = vpack.c.b16 %v1390, %v1382
    %v1943 = vpack.c.b16 %v1391, %v1383
    %v1944 = vpack.c.b16 %v1392, %v1384
    %v1945 = vpack.c.b16 %v1393, %v1385
    %v1946 = vpack.c.b16 %v1394, %v1386
    %v1947 = vpack.c.b16 %v1403, %v1395
    %v1948 = vpack.c.b16 %v1404, %v1396
    %v1949 = vpack.c.b16 %v1405, %v1397
    %v1950 = vpack.c.b16 %v1406, %v1398
    %v1951 = vpack.c.b16 %v1407, %v1399
    %v1952 = vpack.c.b16 %v1408, %v1400
    %v1953 = vpack.c.b16 %v1409, %v1401
    %v1954 = vpack.c.b16 %v1410, %v1402
    %v1955 = vpack.c.b16 %v1419, %v1411
    %v1956 = vpack.c.b16 %v1420, %v1412
    %v1957 = vpack.c.b16 %v1421, %v1413
    %v1958 = vpack.c.b16 %v1422, %v1414
    %v1959 = vpack.c.b16 %v1423, %v1415
    %v1960 = vpack.c.b16 %v1424, %v1416
    %v1961 = vpack.c.b16 %v1425, %v1417
    %v1962 = vpack.c.b16 %v1426, %v1418
    %v1963 = vpack.c.b16 %v1435, %v1427
    %v1964 = vpack.c.b16 %v1436, %v1428
    %v1965 = vpack.c.b16 %v1437, %v1429
    %v1966 = vpack.c.b16 %v1438, %v1430
    %v1967 = vpack.c.b16 %v1439, %v1431
    %v1968 = vpack.c.b16 %v1440, %v1432
    %v1969 = vpack.c.b16 %v1441, %v1433
    %v1970 = vpack.c.b16 %v1442, %v1434
    %v1971 = vpack.c.b16 %v1451, %v1443
    %v1972 = vpack.c.b16 %v1452, %v1444
    %v1973 = vpack.c.b16 %v1453, %v1445
    %v1974 = vpack.c.b16 %v1454, %v1446
    %v1975 = vpack.c.b16 %v1455, %v1447
    %v1976 = vpack.c.b16 %v1456, %v1448
    %v1977 = vpack.c.b16 %v1457, %v1449
    %v1978 = vpack.c.b16 %v1458, %v1450
    %v1979 = vpack.c.b16 %v1467, %v1459
    %v1980 = vpack.c.b16 %v1468, %v1460
    %v1981 = vpack.c.b16 %v1469, %v1461
    %v1982 = vpack.c.b16 %v1470, %v1462
    %v1983 = vpack.c.b16 %v1471, %v1463
    %v1984 = vpack.c.b16 %v1472, %v1464
    %v1985 = vpack.c.b16 %v1473, %v1465
    %v1986 = vpack.c.b16 %v1474, %v1466
    %v1987 = vpack.c.b16 %v1483, %v1475
    %v1988 = vpack.c.b16 %v1484, %v1476
    %v1989 = vpack.c.b16 %v1485, %v1477
    %v1990 = vpack.c.b16 %v1486, %v1478
    %v1991 = vpack.c.b16 %v1487, %v1479
    %v1992 = vpack.c.b16 %v1488, %v1480
    %v1993 = vpack.c.b16 %v1489, %v1481
    %v1994 = vpack.c.b16 %v1490, %v1482
    %v1995 = vpack.c.b16 %v1499, %v1491
    %v1996 = vpack.c.b16 %v1500, %v1492
    %v1997 = vpack.c.b16 %v1501, %v1493
    %v1998 = vpack.c.b16 %v1502, %v1494
    %v1999 = vpack.c.b16 %v1503, %v1495
    %v2000 = vpack.c.b16 %v1504, %v1496
    %v2001 = vpack.c.b16 %v1505, %v1497
    %v2002 = vpack.c.b16 %v1506, %v1498
    %v2003 = vpack.c.b16 %v1515, %v1507
    %v2004 = vpack.c.b16 %v1516, %v1508
    %v2005 = vpack.c.b16 %v1517, %v1509
    %v2006 = vpack.c.b16 %v1518, %v1510
    %v2007 = vpack.c.b16 %v1519, %v1511
    %v2008 = vpack.c.b16 %v1520, %v1512
    %v2009 = vpack.c.b16 %v1521, %v1513
    %v2010 = vpack.c.b16 %v1522, %v1514
    %v2011 = vpack.c.b16 %v1531, %v1523
    %v2012 = vpack.c.b16 %v1532, %v1524
    %v2013 = vpack.c.b16 %v1533, %v1525
    %v2014 = vpack.c.b16 %v1534, %v1526
    %v2015 = vpack.c.b16 %v1535, %v1527
    %v2016 = vpack.c.b16 %v1536, %v1528
    %v2017 = vpack.c.b16 %v1537, %v1529
    %v2018 = vpack.c.b16 %v1538, %v1530
    %v2019 = vpack.c.b16 %v1547, %v1539
    %v2020 = vpack.c.b16 %v1548, %v1540
    %v2021 = vpack.c.b16 %v1549, %v1541
    %v2022 = vpack.c.b16 %v1550, %v1542
    %v2023 = vpack.c.b16 %v1551, %v1543
    %v2024 = vpack.c.b16 %v1552, %v1544
    %v2025 = vpack.c.b16 %v1553, %v1545
    %v2026 = vpack.c.b16 %v1554, %v1546
    %v2027 = vpack.c.b16 %v1563, %v1555
    %v2028 = vpack.c.b16 %v1564, %v1556
    %v2029 = vpack.c.b16 %v1565, %v1557
    %v2030 = vpack.c.b16 %v1566, %v1558
    %v2031 = vpack.c.b16 %v1567, %v1559
    %v2032 = vpack.c.b16 %v1568, %v1560
    %v2033 = vpack.c.b16 %v1569, %v1561
    %v2034 = vpack.c.b16 %v1570, %v1562
    %v2035 = vpack.c.b16 %v1579, %v1571
    %v2036 = vpack.c.b16 %v1580, %v1572
    %v2037 = vpack.c.b16 %v1581, %v1573
    %v2038 = vpack.c.b16 %v1582, %v1574
    %v2039 = vpack.c.b16 %v1583, %v1575
    %v2040 = vpack.c.b16 %v1584, %v1576
    %v2041 = vpack.c.b16 %v1585, %v1577
    %v2042 = vpack.c.b16 %v1586, %v1578
    %v2043 = vpack.c.b16 %v1595, %v1587
    %v2044 = vpack.c.b16 %v1596, %v1588
    %v2045 = vpack.c.b16 %v1597, %v1589
    %v2046 = vpack.c.b16 %v1598, %v1590
    %v2047 = vpack.c.b16 %v1599, %v1591
    %v2048 = vpack.c.b16 %v1600, %v1592
    %v2049 = vpack.c.b16 %v1601, %v1593
    %v2050 = vpack.c.b16 %v1602, %v1594
    %v2051 = vpack.c.b16 %v1611, %v1603
    %v2052 = vpack.c.b16 %v1612, %v1604
    %v2053 = vpack.c.b16 %v1613, %v1605
    %v2054 = vpack.c.b16 %v1614, %v1606
    %v2055 = vpack.c.b16 %v1615, %v1607
    %v2056 = vpack.c.b16 %v1616, %v1608
    %v2057 = vpack.c.b16 %v1617, %v1609
    %v2058 = vpack.c.b16 %v1618, %v1610
    %v2059 = vpack.c.b16 %v1627, %v1619
    %v2060 = vpack.c.b16 %v1628, %v1620
    %v2061 = vpack.c.b16 %v1629, %v1621
    %v2062 = vpack.c.b16 %v1630, %v1622
    %v2063 = vpack.c.b16 %v1631, %v1623
    %v2064 = vpack.c.b16 %v1632, %v1624
    %v2065 = vpack.c.b16 %v1633, %v1625
    %v2066 = vpack.c.b16 %v1634, %v1626
    %v2067 = vpack.c.b16 %v1643, %v1635
    %v2068 = vpack.c.b16 %v1644, %v1636
    %v2069 = vpack.c.b16 %v1645, %v1637
    %v2070 = vpack.c.b16 %v1646, %v1638
    %v2071 = vpack.c.b16 %v1647, %v1639
    %v2072 = vpack.c.b16 %v1648, %v1640
    %v2073 = vpack.c.b16 %v1649, %v1641
    %v2074 = vpack.c.b16 %v1650, %v1642
    %v2075 = vpack.c.b16 %v1659, %v1651
    %v2076 = vpack.c.b16 %v1660, %v1652
    %v2077 = vpack.c.b16 %v1661, %v1653
    %v2078 = vpack.c.b16 %v1662, %v1654
    %v2079 = vpack.c.b16 %v1663, %v1655
    %v2080 = vpack.c.b16 %v1664, %v1656
    %v2081 = vpack.c.b16 %v1665, %v1657
    %v2082 = vpack.c.b16 %v1666, %v1658
    %v2083 = vpack.c.b16 %v1675, %v1667
    %v2084 = vpack.c.b16 %v1676, %v1668
    %v2085 = vpack.c.b16 %v1677, %v1669
    %v2086 = vpack.c.b16 %v1678, %v1670
    %v2087 = vpack.c.b16 %v1679, %v1671
    %v2088 = vpack.c.b16 %v1680, %v1672
    %v2089 = vpack.c.b16 %v1681, %v1673
    %v2090 = vpack.c.b16 %v1682, %v1674
    %v2091 = vpack.c.b16 %v1691, %v1683
    %v2092 = vpack.c.b16 %v1692, %v1684
    %v2093 = vpack.c.b16 %v1693, %v1685
    %v2094 = vpack.c.b16 %v1694, %v1686
    %v2095 = vpack.c.b16 %v1695, %v1687
    %v2096 = vpack.c.b16 %v1696, %v1688
    %v2097 = vpack.c.b16 %v1697, %v1689
    %v2098 = vpack.c.b16 %v1698, %v1690
    %v2099 = vpack.c.b16 %v1707, %v1699
    %v2100 = vpack.c.b16 %v1708, %v1700
    %v2101 = vpack.c.b16 %v1709, %v1701
    %v2102 = vpack.c.b16 %v1710, %v1702
    %v2103 = vpack.c.b16 %v1711, %v1703
    %v2104 = vpack.c.b16 %v1712, %v1704
    %v2105 = vpack.c.b16 %v1713, %v1705
    %v2106 = vpack.c.b16 %v1714, %v1706
    %v2107 = vpack.c.b16 %v1723, %v1715
    %v2108 = vpack.c.b16 %v1724, %v1716
    %v2109 = vpack.c.b16 %v1725, %v1717
    %v2110 = vpack.c.b16 %v1726, %v1718
    %v2111 = vpack.c.b16 %v1727, %v1719
    %v2112 = vpack.c.b16 %v1728, %v1720
    %v2113 = vpack.c.b16 %v1729, %v1721
    %v2114 = vpack.c.b16 %v1730, %v1722
    %2499 = vmatprep.subr.bf16.mxu0 %v1732
    %2500 = vmatpush1.bf16.msra.mxu0 %v1731
    %2501 = vmatprep.subr.bf16.mxu0 %v1740
    %2502 = vmatpush1.bf16.msra.mxu0 %v1739
    %2503 = vmatprep.subr.bf16.mxu0 %v1748
    %2504 = vmatpush1.bf16.msra.mxu0 %v1747
    %2505 = vmatprep.subr.bf16.mxu0 %v1756
    %2506 = vmatpush1.bf16.msra.mxu0 %v1755
    %2507 = vmatprep.subr.bf16.mxu0 %v1764
    %2508 = vmatpush1.bf16.msra.mxu0 %v1763
    %2509 = vmatprep.subr.bf16.mxu0 %v1772
    %2510 = vmatpush1.bf16.msra.mxu0 %v1771
    %2511 = vmatprep.subr.bf16.mxu0 %v1780
    %2512 = vmatpush1.bf16.msra.mxu0 %v1779
    %2513 = vmatprep.subr.bf16.mxu0 %v1788
    %2514 = vmatpush1.bf16.msra.mxu0 %v1787
    %2515 = vmatprep.subr.bf16.mxu0 %v1796
    %2516 = vmatpush1.bf16.msra.mxu0 %v1795
    %2517 = vmatprep.subr.bf16.mxu0 %v1804
    %2518 = vmatpush1.bf16.msra.mxu0 %v1803
    %2519 = vmatprep.subr.bf16.mxu0 %v1812
    %2520 = vmatpush1.bf16.msra.mxu0 %v1811
    %2521 = vmatprep.subr.bf16.mxu0 %v1820
    %2522 = vmatpush1.bf16.msra.mxu0 %v1819
    %2523 = vmatprep.subr.bf16.mxu0 %v1828
    %2524 = vmatpush1.bf16.msra.mxu0 %v1827
    %2525 = vmatprep.subr.bf16.mxu0 %v1836
    %2526 = vmatpush1.bf16.msra.mxu0 %v1835
    %2527 = vmatprep.subr.bf16.mxu0 %v1844
    %2528 = vmatpush1.bf16.msra.mxu0 %v1843
    %2529 = vmatprep.subr.bf16.mxu0 %v1852
    %2530 = vmatpush1.bf16.msra.mxu0 %v1851
    %2531 = vmatprep.mubr.bf16.mxu0 %v568
    %2532 = vmatmul.mubr.bf16.gmra.mrb[0].mxu0 %v567
    %v2533 = vpop.f32.mrb[0].mxu0
    %v2534 = vadd.f32 %v512, %v2533
    %v2535 = vpop.f32.mrb[0].mxu0
    %v2536 = vadd.f32 %v516, %v2535
    %v2537 = vpop.f32.mrb[0].mxu0
    %v2538 = vadd.f32 %v512, %v2537
    %v2539 = vpop.f32.mrb[0].mxu0
    %v2540 = vadd.f32 %v516, %v2539
    %2541 = vdwg.mxu0
    %2542 = vmatprep.subr.bf16.mxu0 %v1860
    %2543 = vmatpush1.bf16.msra.mxu0 %v1859
    %2544 = vmatprep.subr.bf16.mxu0 %v1868
    %2545 = vmatpush1.bf16.msra.mxu0 %v1867
    %2546 = vmatprep.subr.bf16.mxu0 %v1876
    %2547 = vmatpush1.bf16.msra.mxu0 %v1875
    %2548 = vmatprep.subr.bf16.mxu0 %v1884
    %2549 = vmatpush1.bf16.msra.mxu0 %v1883
    %2550 = vmatprep.subr.bf16.mxu0 %v1892
    %2551 = vmatpush1.bf16.msra.mxu0 %v1891
    %2552 = vmatprep.subr.bf16.mxu0 %v1900
    %2553 = vmatpush1.bf16.msra.mxu0 %v1899
    %2554 = vmatprep.subr.bf16.mxu0 %v1908
    %2555 = vmatpush1.bf16.msra.mxu0 %v1907
    %2556 = vmatprep.subr.bf16.mxu0 %v1916
    %2557 = vmatpush1.bf16.msra.mxu0 %v1915
    %2558 = vmatprep.subr.bf16.mxu0 %v1924
    %2559 = vmatpush1.bf16.msra.mxu0 %v1923
    %2560 = vmatprep.subr.bf16.mxu0 %v1932
    %2561 = vmatpush1.bf16.msra.mxu0 %v1931
    %2562 = vmatprep.subr.bf16.mxu0 %v1940
    %2563 = vmatpush1.bf16.msra.mxu0 %v1939
    %2564 = vmatprep.subr.bf16.mxu0 %v1948
    %2565 = vmatpush1.bf16.msra.mxu0 %v1947
    %2566 = vmatprep.subr.bf16.mxu0 %v1956
    %2567 = vmatpush1.bf16.msra.mxu0 %v1955
    %2568 = vmatprep.subr.bf16.mxu0 %v1964
    %2569 = vmatpush1.bf16.msra.mxu0 %v1963
    %2570 = vmatprep.subr.bf16.mxu0 %v1972
    %2571 = vmatpush1.bf16.msra.mxu0 %v1971
    %2572 = vmatprep.subr.bf16.mxu0 %v1980
    %2573 = vmatpush1.bf16.msra.mxu0 %v1979
    %2574 = vmatprep.mubr.bf16.mxu0 %v570
    %2575 = vmatmul.mubr.bf16.gmra.mrb[0].mxu0 %v569
    %v2576 = vpop.f32.mrb[0].mxu0
    %v2577 = vadd.f32 %v2534, %v2576
    %v2578 = vpop.f32.mrb[0].mxu0
    %v2579 = vadd.f32 %v2536, %v2578
    %v2580 = vpop.f32.mrb[0].mxu0
    %v2581 = vadd.f32 %v2538, %v2580
    %v2582 = vpop.f32.mrb[0].mxu0
    %v2583 = vadd.f32 %v2540, %v2582
    %2584 = vdwg.mxu0
    %2585 = vmatprep.subr.bf16.mxu0 %v1988
    %2586 = vmatpush1.bf16.msra.mxu0 %v1987
    %2587 = vmatprep.subr.bf16.mxu0 %v1996
    %2588 = vmatpush1.bf16.msra.mxu0 %v1995
    %2589 = vmatprep.subr.bf16.mxu0 %v2004
    %2590 = vmatpush1.bf16.msra.mxu0 %v2003
    %2591 = vmatprep.subr.bf16.mxu0 %v2012
    %2592 = vmatpush1.bf16.msra.mxu0 %v2011
    %2593 = vmatprep.subr.bf16.mxu0 %v2020
    %2594 = vmatpush1.bf16.msra.mxu0 %v2019
    %2595 = vmatprep.subr.bf16.mxu0 %v2028
    %2596 = vmatpush1.bf16.msra.mxu0 %v2027
    %2597 = vmatprep.subr.bf16.mxu0 %v2036
    %2598 = vmatpush1.bf16.msra.mxu0 %v2035
    %2599 = vmatprep.subr.bf16.mxu0 %v2044
    %2600 = vmatpush1.bf16.msra.mxu0 %v2043
    %2601 = vmatprep.subr.bf16.mxu0 %v2052
    %2602 = vmatpush1.bf16.msra.mxu0 %v2051
    %2603 = vmatprep.subr.bf16.mxu0 %v2060
    %2604 = vmatpush1.bf16.msra.mxu0 %v2059
    %2605 = vmatprep.subr.bf16.mxu0 %v2068
    %2606 = vmatpush1.bf16.msra.mxu0 %v2067
    %2607 = vmatprep.subr.bf16.mxu0 %v2076
    %2608 = vmatpush1.bf16.msra.mxu0 %v2075
    %2609 = vmatprep.subr.bf16.mxu0 %v2084
    %2610 = vmatpush1.bf16.msra.mxu0 %v2083
    %2611 = vmatprep.subr.bf16.mxu0 %v2092
    %2612 = vmatpush1.bf16.msra.mxu0 %v2091
    %2613 = vmatprep.subr.bf16.mxu0 %v2100
    %2614 = vmatpush1.bf16.msra.mxu0 %v2099
    %2615 = vmatprep.subr.bf16.mxu0 %v2108
    %2616 = vmatpush1.bf16.msra.mxu0 %v2107
    %2617 = vmatprep.mubr.bf16.mxu0 %v572
    %2618 = vmatmul.mubr.bf16.gmra.mrb[0].mxu0 %v571
    %v2619 = vpop.f32.mrb[0].mxu0
    %v2620 = vadd.f32 %v2577, %v2619
    %v2621 = vpop.f32.mrb[0].mxu0
    %v2622 = vadd.f32 %v2579, %v2621
    %v2623 = vpop.f32.mrb[0].mxu0
    %v2624 = vadd.f32 %v2581, %v2623
    %v2625 = vpop.f32.mrb[0].mxu0
    %v2626 = vadd.f32 %v2583, %v2625
    %2627 = vdwg.mxu0
    %2628 = vmatprep.subr.bf16.mxu0 %v1734
    %2629 = vmatpush1.bf16.msra.mxu0 %v1733
    %2630 = vmatprep.subr.bf16.mxu0 %v1742
    %2631 = vmatpush1.bf16.msra.mxu0 %v1741
    %2632 = vmatprep.subr.bf16.mxu0 %v1750
    %2633 = vmatpush1.bf16.msra.mxu0 %v1749
    %2634 = vmatprep.subr.bf16.mxu0 %v1758
    %2635 = vmatpush1.bf16.msra.mxu0 %v1757
    %2636 = vmatprep.subr.bf16.mxu0 %v1766
    %2637 = vmatpush1.bf16.msra.mxu0 %v1765
    %2638 = vmatprep.subr.bf16.mxu0 %v1774
    %2639 = vmatpush1.bf16.msra.mxu0 %v1773
    %2640 = vmatprep.subr.bf16.mxu0 %v1782
    %2641 = vmatpush1.bf16.msra.mxu0 %v1781
    %2642 = vmatprep.subr.bf16.mxu0 %v1790
    %2643 = vmatpush1.bf16.msra.mxu0 %v1789
    %2644 = vmatprep.subr.bf16.mxu0 %v1798
    %2645 = vmatpush1.bf16.msra.mxu0 %v1797
    %2646 = vmatprep.subr.bf16.mxu0 %v1806
    %2647 = vmatpush1.bf16.msra.mxu0 %v1805
    %2648 = vmatprep.subr.bf16.mxu0 %v1814
    %2649 = vmatpush1.bf16.msra.mxu0 %v1813
    %2650 = vmatprep.subr.bf16.mxu0 %v1822
    %2651 = vmatpush1.bf16.msra.mxu0 %v1821
    %2652 = vmatprep.subr.bf16.mxu0 %v1830
    %2653 = vmatpush1.bf16.msra.mxu0 %v1829
    %2654 = vmatprep.subr.bf16.mxu0 %v1838
    %2655 = vmatpush1.bf16.msra.mxu0 %v1837
    %2656 = vmatprep.subr.bf16.mxu0 %v1846
    %2657 = vmatpush1.bf16.msra.mxu0 %v1845
    %2658 = vmatprep.subr.bf16.mxu0 %v1854
    %2659 = vmatpush1.bf16.msra.mxu0 %v1853
    %2660 = vmatprep.mubr.bf16.mxu0 %v568
    %2661 = vmatmul.mubr.bf16.gmra.mrb[0].mxu0 %v567
    %v2662 = vpop.f32.mrb[0].mxu0
    %v2663 = vadd.f32 %v520, %v2662
    %v2664 = vpop.f32.mrb[0].mxu0
    %v2665 = vadd.f32 %v524, %v2664
    %v2666 = vpop.f32.mrb[0].mxu0
    %v2667 = vadd.f32 %v520, %v2666
    %v2668 = vpop.f32.mrb[0].mxu0
    %v2669 = vadd.f32 %v524, %v2668
    %2670 = vdwg.mxu0
    %2671 = vmatprep.subr.bf16.mxu0 %v1862
    %2672 = vmatpush1.bf16.msra.mxu0 %v1861
    %2673 = vmatprep.subr.bf16.mxu0 %v1870
    %2674 = vmatpush1.bf16.msra.mxu0 %v1869
    %2675 = vmatprep.subr.bf16.mxu0 %v1878
    %2676 = vmatpush1.bf16.msra.mxu0 %v1877
    %2677 = vmatprep.subr.bf16.mxu0 %v1886
    %2678 = vmatpush1.bf16.msra.mxu0 %v1885
    %2679 = vmatprep.subr.bf16.mxu0 %v1894
    %2680 = vmatpush1.bf16.msra.mxu0 %v1893
    %2681 = vmatprep.subr.bf16.mxu0 %v1902
    %2682 = vmatpush1.bf16.msra.mxu0 %v1901
    %2683 = vmatprep.subr.bf16.mxu0 %v1910
    %2684 = vmatpush1.bf16.msra.mxu0 %v1909
    %2685 = vmatprep.subr.bf16.mxu0 %v1918
    %2686 = vmatpush1.bf16.msra.mxu0 %v1917
    %2687 = vmatprep.subr.bf16.mxu0 %v1926
    %2688 = vmatpush1.bf16.msra.mxu0 %v1925
    %2689 = vmatprep.subr.bf16.mxu0 %v1934
    %2690 = vmatpush1.bf16.msra.mxu0 %v1933
    %2691 = vmatprep.subr.bf16.mxu0 %v1942
    %2692 = vmatpush1.bf16.msra.mxu0 %v1941
    %2693 = vmatprep.subr.bf16.mxu0 %v1950
    %2694 = vmatpush1.bf16.msra.mxu0 %v1949
    %2695 = vmatprep.subr.bf16.mxu0 %v1958
    %2696 = vmatpush1.bf16.msra.mxu0 %v1957
    %2697 = vmatprep.subr.bf16.mxu0 %v1966
    %2698 = vmatpush1.bf16.msra.mxu0 %v1965
    %2699 = vmatprep.subr.bf16.mxu0 %v1974
    %2700 = vmatpush1.bf16.msra.mxu0 %v1973
    %2701 = vmatprep.subr.bf16.mxu0 %v1982
    %2702 = vmatpush1.bf16.msra.mxu0 %v1981
    %2703 = vmatprep.mubr.bf16.mxu0 %v570
    %2704 = vmatmul.mubr.bf16.gmra.mrb[0].mxu0 %v569
    %v2705 = vpop.f32.mrb[0].mxu0
    %v2706 = vadd.f32 %v2663, %v2705
    %v2707 = vpop.f32.mrb[0].mxu0
    %v2708 = vadd.f32 %v2665, %v2707
    %v2709 = vpop.f32.mrb[0].mxu0
    %v2710 = vadd.f32 %v2667, %v2709
    %v2711 = vpop.f32.mrb[0].mxu0
    %v2712 = vadd.f32 %v2669, %v2711
    %2713 = vdwg.mxu0
    %2714 = vmatprep.subr.bf16.mxu0 %v1990
    %2715 = vmatpush1.bf16.msra.mxu0 %v1989
    %2716 = vmatprep.subr.bf16.mxu0 %v1998
    %2717 = vmatpush1.bf16.msra.mxu0 %v1997
    %2718 = vmatprep.subr.bf16.mxu0 %v2006
    %2719 = vmatpush1.bf16.msra.mxu0 %v2005
    %2720 = vmatprep.subr.bf16.mxu0 %v2014
    %2721 = vmatpush1.bf16.msra.mxu0 %v2013
    %2722 = vmatprep.subr.bf16.mxu0 %v2022
    %2723 = vmatpush1.bf16.msra.mxu0 %v2021
    %2724 = vmatprep.subr.bf16.mxu0 %v2030
    %2725 = vmatpush1.bf16.msra.mxu0 %v2029
    %2726 = vmatprep.subr.bf16.mxu0 %v2038
    %2727 = vmatpush1.bf16.msra.mxu0 %v2037
    %2728 = vmatprep.subr.bf16.mxu0 %v2046
    %2729 = vmatpush1.bf16.msra.mxu0 %v2045
    %2730 = vmatprep.subr.bf16.mxu0 %v2054
    %2731 = vmatpush1.bf16.msra.mxu0 %v2053
    %2732 = vmatprep.subr.bf16.mxu0 %v2062
    %2733 = vmatpush1.bf16.msra.mxu0 %v2061
    %2734 = vmatprep.subr.bf16.mxu0 %v2070
    %2735 = vmatpush1.bf16.msra.mxu0 %v2069
    %2736 = vmatprep.subr.bf16.mxu0 %v2078
    %2737 = vmatpush1.bf16.msra.mxu0 %v2077
    %2738 = vmatprep.subr.bf16.mxu0 %v2086
    %2739 = vmatpush1.bf16.msra.mxu0 %v2085
    %2740 = vmatprep.subr.bf16.mxu0 %v2094
    %2741 = vmatpush1.bf16.msra.mxu0 %v2093
    %2742 = vmatprep.subr.bf16.mxu0 %v2102
    %2743 = vmatpush1.bf16.msra.mxu0 %v2101
    %2744 = vmatprep.subr.bf16.mxu0 %v2110
    %2745 = vmatpush1.bf16.msra.mxu0 %v2109
    %2746 = vmatprep.mubr.bf16.mxu0 %v572
    %2747 = vmatmul.mubr.bf16.gmra.mrb[0].mxu0 %v571
    %v2748 = vpop.f32.mrb[0].mxu0
    %v2749 = vadd.f32 %v2706, %v2748
    %v2750 = vpop.f32.mrb[0].mxu0
    %v2751 = vadd.f32 %v2708, %v2750
    %v2752 = vpop.f32.mrb[0].mxu0
    %v2753 = vadd.f32 %v2710, %v2752
    %v2754 = vpop.f32.mrb[0].mxu0
    %v2755 = vadd.f32 %v2712, %v2754
    %2756 = vdwg.mxu0
    %2757 = vmatprep.subr.bf16.mxu0 %v1736
    %2758 = vmatpush1.bf16.msra.mxu0 %v1735
    %2759 = vmatprep.subr.bf16.mxu0 %v1744
    %2760 = vmatpush1.bf16.msra.mxu0 %v1743
    %2761 = vmatprep.subr.bf16.mxu0 %v1752
    %2762 = vmatpush1.bf16.msra.mxu0 %v1751
    %2763 = vmatprep.subr.bf16.mxu0 %v1760
    %2764 = vmatpush1.bf16.msra.mxu0 %v1759
    %2765 = vmatprep.subr.bf16.mxu0 %v1768
    %2766 = vmatpush1.bf16.msra.mxu0 %v1767
    %2767 = vmatprep.subr.bf16.mxu0 %v1776
    %2768 = vmatpush1.bf16.msra.mxu0 %v1775
    %2769 = vmatprep.subr.bf16.mxu0 %v1784
    %2770 = vmatpush1.bf16.msra.mxu0 %v1783
    %2771 = vmatprep.subr.bf16.mxu0 %v1792
    %2772 = vmatpush1.bf16.msra.mxu0 %v1791
    %2773 = vmatprep.subr.bf16.mxu0 %v1800
    %2774 = vmatpush1.bf16.msra.mxu0 %v1799
    %2775 = vmatprep.subr.bf16.mxu0 %v1808
    %2776 = vmatpush1.bf16.msra.mxu0 %v1807
    %2777 = vmatprep.subr.bf16.mxu0 %v1816
    %2778 = vmatpush1.bf16.msra.mxu0 %v1815
    %2779 = vmatprep.subr.bf16.mxu0 %v1824
    %2780 = vmatpush1.bf16.msra.mxu0 %v1823
    %2781 = vmatprep.subr.bf16.mxu0 %v1832
    %2782 = vmatpush1.bf16.msra.mxu0 %v1831
    %2783 = vmatprep.subr.bf16.mxu0 %v1840
    %2784 = vmatpush1.bf16.msra.mxu0 %v1839
    %2785 = vmatprep.subr.bf16.mxu0 %v1848
    %2786 = vmatpush1.bf16.msra.mxu0 %v1847
    %2787 = vmatprep.subr.bf16.mxu0 %v1856
    %2788 = vmatpush1.bf16.msra.mxu0 %v1855
    %2789 = vmatprep.mubr.bf16.mxu0 %v568
    %2790 = vmatmul.mubr.bf16.gmra.mrb[0].mxu0 %v567
    %v2791 = vpop.f32.mrb[0].mxu0
    %v2792 = vadd.f32 %v528, %v2791
    %v2793 = vpop.f32.mrb[0].mxu0
    %v2794 = vadd.f32 %v532, %v2793
    %v2795 = vpop.f32.mrb[0].mxu0
    %v2796 = vadd.f32 %v528, %v2795
    %v2797 = vpop.f32.mrb[0].mxu0
    %v2798 = vadd.f32 %v532, %v2797
    %2799 = vdwg.mxu0
    %2800 = vmatprep.subr.bf16.mxu0 %v1864
    %2801 = vmatpush1.bf16.msra.mxu0 %v1863
    %2802 = vmatprep.subr.bf16.mxu0 %v1872
    %2803 = vmatpush1.bf16.msra.mxu0 %v1871
    %2804 = vmatprep.subr.bf16.mxu0 %v1880
    %2805 = vmatpush1.bf16.msra.mxu0 %v1879
    %2806 = vmatprep.subr.bf16.mxu0 %v1888
    %2807 = vmatpush1.bf16.msra.mxu0 %v1887
    %2808 = vmatprep.subr.bf16.mxu0 %v1896
    %2809 = vmatpush1.bf16.msra.mxu0 %v1895
    %2810 = vmatprep.subr.bf16.mxu0 %v1904
    %2811 = vmatpush1.bf16.msra.mxu0 %v1903
    %2812 = vmatprep.subr.bf16.mxu0 %v1912
    %2813 = vmatpush1.bf16.msra.mxu0 %v1911
    %2814 = vmatprep.subr.bf16.mxu0 %v1920
    %2815 = vmatpush1.bf16.msra.mxu0 %v1919
    %2816 = vmatprep.subr.bf16.mxu0 %v1928
    %2817 = vmatpush1.bf16.msra.mxu0 %v1927
    %2818 = vmatprep.subr.bf16.mxu0 %v1936
    %2819 = vmatpush1.bf16.msra.mxu0 %v1935
    %2820 = vmatprep.subr.bf16.mxu0 %v1944
    %2821 = vmatpush1.bf16.msra.mxu0 %v1943
    %2822 = vmatprep.subr.bf16.mxu0 %v1952
    %2823 = vmatpush1.bf16.msra.mxu0 %v1951
    %2824 = vmatprep.subr.bf16.mxu0 %v1960
    %2825 = vmatpush1.bf16.msra.mxu0 %v1959
    %2826 = vmatprep.subr.bf16.mxu0 %v1968
    %2827 = vmatpush1.bf16.msra.mxu0 %v1967
    %2828 = vmatprep.subr.bf16.mxu0 %v1976
    %2829 = vmatpush1.bf16.msra.mxu0 %v1975
    %2830 = vmatprep.subr.bf16.mxu0 %v1984
    %2831 = vmatpush1.bf16.msra.mxu0 %v1983
    %2832 = vmatprep.mubr.bf16.mxu0 %v570
    %2833 = vmatmul.mubr.bf16.gmra.mrb[0].mxu0 %v569
    %v2834 = vpop.f32.mrb[0].mxu0
    %v2835 = vadd.f32 %v2792, %v2834
    %v2836 = vpop.f32.mrb[0].mxu0
    %v2837 = vadd.f32 %v2794, %v2836
    %v2838 = vpop.f32.mrb[0].mxu0
    %v2839 = vadd.f32 %v2796, %v2838
    %v2840 = vpop.f32.mrb[0].mxu0
    %v2841 = vadd.f32 %v2798, %v2840
    %2842 = vdwg.mxu0
    %2843 = vmatprep.subr.bf16.mxu0 %v1992
    %2844 = vmatpush1.bf16.msra.mxu0 %v1991
    %2845 = vmatprep.subr.bf16.mxu0 %v2000
    %2846 = vmatpush1.bf16.msra.mxu0 %v1999
    %2847 = vmatprep.subr.bf16.mxu0 %v2008
    %2848 = vmatpush1.bf16.msra.mxu0 %v2007
    %2849 = vmatprep.subr.bf16.mxu0 %v2016
    %2850 = vmatpush1.bf16.msra.mxu0 %v2015
    %2851 = vmatprep.subr.bf16.mxu0 %v2024
    %2852 = vmatpush1.bf16.msra.mxu0 %v2023
    %2853 = vmatprep.subr.bf16.mxu0 %v2032
    %2854 = vmatpush1.bf16.msra.mxu0 %v2031
    %2855 = vmatprep.subr.bf16.mxu0 %v2040
    %2856 = vmatpush1.bf16.msra.mxu0 %v2039
    %2857 = vmatprep.subr.bf16.mxu0 %v2048
    %2858 = vmatpush1.bf16.msra.mxu0 %v2047
    %2859 = vmatprep.subr.bf16.mxu0 %v2056
    %2860 = vmatpush1.bf16.msra.mxu0 %v2055
    %2861 = vmatprep.subr.bf16.mxu0 %v2064
    %2862 = vmatpush1.bf16.msra.mxu0 %v2063
    %2863 = vmatprep.subr.bf16.mxu0 %v2072
    %2864 = vmatpush1.bf16.msra.mxu0 %v2071
    %2865 = vmatprep.subr.bf16.mxu0 %v2080
    %2866 = vmatpush1.bf16.msra.mxu0 %v2079
    %2867 = vmatprep.subr.bf16.mxu0 %v2088
    %2868 = vmatpush1.bf16.msra.mxu0 %v2087
    %2869 = vmatprep.subr.bf16.mxu0 %v2096
    %2870 = vmatpush1.bf16.msra.mxu0 %v2095
    %2871 = vmatprep.subr.bf16.mxu0 %v2104
    %2872 = vmatpush1.bf16.msra.mxu0 %v2103
    %2873 = vmatprep.subr.bf16.mxu0 %v2112
    %2874 = vmatpush1.bf16.msra.mxu0 %v2111
    %2875 = vmatprep.mubr.bf16.mxu0 %v572
    %2876 = vmatmul.mubr.bf16.gmra.mrb[0].mxu0 %v571
    %v2877 = vpop.f32.mrb[0].mxu0
    %v2878 = vadd.f32 %v2835, %v2877
    %v2879 = vpop.f32.mrb[0].mxu0
    %v2880 = vadd.f32 %v2837, %v2879
    %v2881 = vpop.f32.mrb[0].mxu0
    %v2882 = vadd.f32 %v2839, %v2881
    %v2883 = vpop.f32.mrb[0].mxu0
    %v2884 = vadd.f32 %v2841, %v2883
    %2885 = vdwg.mxu0
    %2886 = vmatprep.subr.bf16.mxu0 %v1738
    %2887 = vmatpush1.bf16.msra.mxu0 %v1737
    %2888 = vmatprep.subr.bf16.mxu0 %v1746
    %2889 = vmatpush1.bf16.msra.mxu0 %v1745
    %2890 = vmatprep.subr.bf16.mxu0 %v1754
    %2891 = vmatpush1.bf16.msra.mxu0 %v1753
    %2892 = vmatprep.subr.bf16.mxu0 %v1762
    %2893 = vmatpush1.bf16.msra.mxu0 %v1761
    %2894 = vmatprep.subr.bf16.mxu0 %v1770
    %2895 = vmatpush1.bf16.msra.mxu0 %v1769
    %2896 = vmatprep.subr.bf16.mxu0 %v1778
    %2897 = vmatpush1.bf16.msra.mxu0 %v1777
    %2898 = vmatprep.subr.bf16.mxu0 %v1786
    %2899 = vmatpush1.bf16.msra.mxu0 %v1785
    %2900 = vmatprep.subr.bf16.mxu0 %v1794
    %2901 = vmatpush1.bf16.msra.mxu0 %v1793
    %2902 = vmatprep.subr.bf16.mxu0 %v1802
    %2903 = vmatpush1.bf16.msra.mxu0 %v1801
    %2904 = vmatprep.subr.bf16.mxu0 %v1810
    %2905 = vmatpush1.bf16.msra.mxu0 %v1809
    %2906 = vmatprep.subr.bf16.mxu0 %v1818
    %2907 = vmatpush1.bf16.msra.mxu0 %v1817
    %2908 = vmatprep.subr.bf16.mxu0 %v1826
    %2909 = vmatpush1.bf16.msra.mxu0 %v1825
    %2910 = vmatprep.subr.bf16.mxu0 %v1834
    %2911 = vmatpush1.bf16.msra.mxu0 %v1833
    %2912 = vmatprep.subr.bf16.mxu0 %v1842
    %2913 = vmatpush1.bf16.msra.mxu0 %v1841
    %2914 = vmatprep.subr.bf16.mxu0 %v1850
    %2915 = vmatpush1.bf16.msra.mxu0 %v1849
    %2916 = vmatprep.subr.bf16.mxu0 %v1858
    %2917 = vmatpush1.bf16.msra.mxu0 %v1857
    %2918 = vmatprep.mubr.bf16.mxu0 %v568
    %2919 = vmatmul.mubr.bf16.gmra.mrb[0].mxu0 %v567
    %v2920 = vpop.f32.mrb[0].mxu0
    %v2921 = vadd.f32 %v536, %v2920
    %v2922 = vpop.f32.mrb[0].mxu0
    %v2923 = vadd.f32 %v540, %v2922
    %v2924 = vpop.f32.mrb[0].mxu0
    %v2925 = vadd.f32 %v536, %v2924
    %v2926 = vpop.f32.mrb[0].mxu0
    %v2927 = vadd.f32 %v540, %v2926
    %2928 = vdwg.mxu0
    %2929 = vmatprep.subr.bf16.mxu0 %v1866
    %2930 = vmatpush1.bf16.msra.mxu0 %v1865
    %2931 = vmatprep.subr.bf16.mxu0 %v1874
    %2932 = vmatpush1.bf16.msra.mxu0 %v1873
    %2933 = vmatprep.subr.bf16.mxu0 %v1882
    %2934 = vmatpush1.bf16.msra.mxu0 %v1881
    %2935 = vmatprep.subr.bf16.mxu0 %v1890
    %2936 = vmatpush1.bf16.msra.mxu0 %v1889
    %2937 = vmatprep.subr.bf16.mxu0 %v1898
    %2938 = vmatpush1.bf16.msra.mxu0 %v1897
    %2939 = vmatprep.subr.bf16.mxu0 %v1906
    %2940 = vmatpush1.bf16.msra.mxu0 %v1905
    %2941 = vmatprep.subr.bf16.mxu0 %v1914
    %2942 = vmatpush1.bf16.msra.mxu0 %v1913
    %2943 = vmatprep.subr.bf16.mxu0 %v1922
    %2944 = vmatpush1.bf16.msra.mxu0 %v1921
    %2945 = vmatprep.subr.bf16.mxu0 %v1930
    %2946 = vmatpush1.bf16.msra.mxu0 %v1929
    %2947 = vmatprep.subr.bf16.mxu0 %v1938
    %2948 = vmatpush1.bf16.msra.mxu0 %v1937
    %2949 = vmatprep.subr.bf16.mxu0 %v1946
    %2950 = vmatpush1.bf16.msra.mxu0 %v1945
    %2951 = vmatprep.subr.bf16.mxu0 %v1954
    %2952 = vmatpush1.bf16.msra.mxu0 %v1953
    %2953 = vmatprep.subr.bf16.mxu0 %v1962
    %2954 = vmatpush1.bf16.msra.mxu0 %v1961
    %2955 = vmatprep.subr.bf16.mxu0 %v1970
    %2956 = vmatpush1.bf16.msra.mxu0 %v1969
    %2957 = vmatprep.subr.bf16.mxu0 %v1978
    %2958 = vmatpush1.bf16.msra.mxu0 %v1977
    %2959 = vmatprep.subr.bf16.mxu0 %v1986
    %2960 = vmatpush1.bf16.msra.mxu0 %v1985
    %2961 = vmatprep.mubr.bf16.mxu0 %v570
    %2962 = vmatmul.mubr.bf16.gmra.mrb[0].mxu0 %v569
    %v2963 = vpop.f32.mrb[0].mxu0
    %v2964 = vadd.f32 %v2921, %v2963
    %v2965 = vpop.f32.mrb[0].mxu0
    %v2966 = vadd.f32 %v2923, %v2965
    %v2967 = vpop.f32.mrb[0].mxu0
    %v2968 = vadd.f32 %v2925, %v2967
    %v2969 = vpop.f32.mrb[0].mxu0
    %v2970 = vadd.f32 %v2927, %v2969
    %2971 = vdwg.mxu0
    %2972 = vmatprep.subr.bf16.mxu0 %v1994
    %2973 = vmatpush1.bf16.msra.mxu0 %v1993
    %2974 = vmatprep.subr.bf16.mxu0 %v2002
    %2975 = vmatpush1.bf16.msra.mxu0 %v2001
    %2976 = vmatprep.subr.bf16.mxu0 %v2010
    %2977 = vmatpush1.bf16.msra.mxu0 %v2009
    %2978 = vmatprep.subr.bf16.mxu0 %v2018
    %2979 = vmatpush1.bf16.msra.mxu0 %v2017
    %2980 = vmatprep.subr.bf16.mxu0 %v2026
    %2981 = vmatpush1.bf16.msra.mxu0 %v2025
    %2982 = vmatprep.subr.bf16.mxu0 %v2034
    %2983 = vmatpush1.bf16.msra.mxu0 %v2033
    %2984 = vmatprep.subr.bf16.mxu0 %v2042
    %2985 = vmatpush1.bf16.msra.mxu0 %v2041
    %2986 = vmatprep.subr.bf16.mxu0 %v2050
    %2987 = vmatpush1.bf16.msra.mxu0 %v2049
    %2988 = vmatprep.subr.bf16.mxu0 %v2058
    %2989 = vmatpush1.bf16.msra.mxu0 %v2057
    %2990 = vmatprep.subr.bf16.mxu0 %v2066
    %2991 = vmatpush1.bf16.msra.mxu0 %v2065
    %2992 = vmatprep.subr.bf16.mxu0 %v2074
    %2993 = vmatpush1.bf16.msra.mxu0 %v2073
    %2994 = vmatprep.subr.bf16.mxu0 %v2082
    %2995 = vmatpush1.bf16.msra.mxu0 %v2081
    %2996 = vmatprep.subr.bf16.mxu0 %v2090
    %2997 = vmatpush1.bf16.msra.mxu0 %v2089
    %2998 = vmatprep.subr.bf16.mxu0 %v2098
    %2999 = vmatpush1.bf16.msra.mxu0 %v2097
    %3000 = vmatprep.subr.bf16.mxu0 %v2106
    %3001 = vmatpush1.bf16.msra.mxu0 %v2105
    %3002 = vmatprep.subr.bf16.mxu0 %v2114
    %3003 = vmatpush1.bf16.msra.mxu0 %v2113
    %3004 = vmatprep.mubr.bf16.mxu0 %v572
    %3005 = vmatmul.mubr.bf16.gmra.mrb[0].mxu0 %v571
    %v3006 = vpop.f32.mrb[0].mxu0
    %v3007 = vadd.f32 %v2964, %v3006
    %v3008 = vpop.f32.mrb[0].mxu0
    %v3009 = vadd.f32 %v2966, %v3008
    %v3010 = vpop.f32.mrb[0].mxu0
    %v3011 = vadd.f32 %v2968, %v3010
    %v3012 = vpop.f32.mrb[0].mxu0
    %v3013 = vadd.f32 %v2970, %v3012
    %3014 = vdwg.mxu0
    %v3015 = vmax.f32 %v2620, 0.0
    %v3016 = vmax.f32 %v2622, 0.0
    %v3017 = vmax.f32 %v2749, 0.0
    %v3018 = vmax.f32 %v2751, 0.0
    %v3019 = vmax.f32 %v2878, 0.0
    %v3020 = vmax.f32 %v2880, 0.0
    %v3021 = vmax.f32 %v3007, 0.0
    %v3022 = vmax.f32 %v3009, 0.0
    %v3023 = vmax.f32 %v2624, 0.0
    %v3024 = vmax.f32 %v2626, 0.0
    %v3025 = vmax.f32 %v2753, 0.0
    %v3026 = vmax.f32 %v2755, 0.0
    %v3027 = vmax.f32 %v2882, 0.0
    %v3028 = vmax.f32 %v2884, 0.0
    %v3029 = vmax.f32 %v3011, 0.0
    %v3030 = vmax.f32 %v3013, 0.0
    %v3031 = vpack.c.bf16 %v3023, %v3015
    %v3032 = vpack.c.bf16 %v3024, %v3016
    %v3033 = vpack.c.bf16 %v3025, %v3017
    %v3034 = vpack.c.bf16 %v3026, %v3018
    %v3035 = vpack.c.bf16 %v3027, %v3019
    %v3036 = vpack.c.bf16 %v3028, %v3020
    %v3037 = vpack.c.bf16 %v3029, %v3021
    %v3038 = vpack.c.bf16 %v3030, %v3022
    %v3039 = vld [vmem:[#allocation8] sm:$0xff]
    %v3040 = vld [vmem:[#allocation8 + $0x8] sm:$0xff]
    %v3041 = vld [vmem:[#allocation8 + $0x10] sm:$0xff]
    %v3042 = vld [vmem:[#allocation8 + $0x18] sm:$0xff]
    %v3043 = vld [vmem:[#allocation8 + $0x20] sm:$0xff]
    %v3044 = vld [vmem:[#allocation8 + $0x28] sm:$0xff]
    %v3045 = vld [vmem:[#allocation8 + $0x30] sm:$0xff]
    %v3046 = vld [vmem:[#allocation8 + $0x38] sm:$0xff]
    %v3047 = vld [vmem:[#allocation8 + $0x40] sm:$0xff]
    %v3048 = vld [vmem:[#allocation8 + $0x48] sm:$0xff]
    %v3049 = vld [vmem:[#allocation8 + $0x50] sm:$0xff]
    %v3050 = vld [vmem:[#allocation8 + $0x58] sm:$0xff]
    %v3051 = vld [vmem:[#allocation8 + $0x60] sm:$0xff]
    %v3052 = vld [vmem:[#allocation8 + $0x68] sm:$0xff]
    %v3053 = vld [vmem:[#allocation8 + $0x70] sm:$0xff]
    %v3054 = vld [vmem:[#allocation8 + $0x78] sm:$0xff]
    %v3055 = vld [vmem:[#allocation8 + $0x80] sm:$0xff]
    %v3056 = vld [vmem:[#allocation8 + $0x88] sm:$0xff]
    %v3057 = vld [vmem:[#allocation8 + $0x90] sm:$0xff]
    %v3058 = vld [vmem:[#allocation8 + $0x98] sm:$0xff]
    %v3059 = vld [vmem:[#allocation8 + $0xa0] sm:$0xff]
    %v3060 = vld [vmem:[#allocation8 + $0xa8] sm:$0xff]
    %v3061 = vld [vmem:[#allocation8 + $0xb0] sm:$0xff]
    %v3062 = vld [vmem:[#allocation8 + $0xb8] sm:$0xff]
    %v3063 = vld [vmem:[#allocation8 + $0xc0] sm:$0xff]
    %v3064 = vld [vmem:[#allocation8 + $0xc8] sm:$0xff]
    %v3065 = vld [vmem:[#allocation8 + $0xd0] sm:$0xff]
    %v3066 = vld [vmem:[#allocation8 + $0xd8] sm:$0xff]
    %v3067 = vld [vmem:[#allocation8 + $0xe0] sm:$0xff]
    %v3068 = vld [vmem:[#allocation8 + $0xe8] sm:$0xff]
    %v3069 = vld [vmem:[#allocation8 + $0xf0] sm:$0xff]
    %v3070 = vld [vmem:[#allocation8 + $0xf8] sm:$0xff]
    %v3071 = vld [vmem:[#allocation8 + $0x100] sm:$0xff]
    %v3072 = vld [vmem:[#allocation8 + $0x108] sm:$0xff]
    %v3073 = vld [vmem:[#allocation8 + $0x110] sm:$0xff]
    %v3074 = vld [vmem:[#allocation8 + $0x118] sm:$0xff]
    %v3075 = vld [vmem:[#allocation8 + $0x120] sm:$0xff]
    %v3076 = vld [vmem:[#allocation8 + $0x128] sm:$0xff]
    %v3077 = vld [vmem:[#allocation8 + $0x130] sm:$0xff]
    %v3078 = vld [vmem:[#allocation8 + $0x138] sm:$0xff]
    %v3079 = vld [vmem:[#allocation8 + $0x140] sm:$0xff]
    %v3080 = vld [vmem:[#allocation8 + $0x148] sm:$0xff]
    %v3081 = vld [vmem:[#allocation8 + $0x150] sm:$0xff]
    %v3082 = vld [vmem:[#allocation8 + $0x158] sm:$0xff]
    %v3083 = vld [vmem:[#allocation8 + $0x160] sm:$0xff]
    %v3084 = vld [vmem:[#allocation8 + $0x168] sm:$0xff]
    %v3085 = vld [vmem:[#allocation8 + $0x170] sm:$0xff]
    %v3086 = vld [vmem:[#allocation8 + $0x178] sm:$0xff]
    %v3087 = vld [vmem:[#allocation8 + $0x180] sm:$0xff]
    %v3088 = vld [vmem:[#allocation8 + $0x188] sm:$0xff]
    %v3089 = vld [vmem:[#allocation8 + $0x190] sm:$0xff]
    %v3090 = vld [vmem:[#allocation8 + $0x198] sm:$0xff]
    %v3091 = vld [vmem:[#allocation8 + $0x1a0] sm:$0xff]
    %v3092 = vld [vmem:[#allocation8 + $0x1a8] sm:$0xff]
    %v3093 = vld [vmem:[#allocation8 + $0x1b0] sm:$0xff]
    %v3094 = vld [vmem:[#allocation8 + $0x1b8] sm:$0xff]
    %v3095 = vld [vmem:[#allocation8 + $0x1c0] sm:$0xff]
    %v3096 = vld [vmem:[#allocation8 + $0x1c8] sm:$0xff]
    %v3097 = vld [vmem:[#allocation8 + $0x1d0] sm:$0xff]
    %v3098 = vld [vmem:[#allocation8 + $0x1d8] sm:$0xff]
    %v3099 = vld [vmem:[#allocation8 + $0x1e0] sm:$0xff]
    %v3100 = vld [vmem:[#allocation8 + $0x1e8] sm:$0xff]
    %v3101 = vld [vmem:[#allocation8 + $0x1f0] sm:$0xff]
    %v3102 = vld [vmem:[#allocation8 + $0x1f8] sm:$0xff]
    %v3103 = vld [vmem:[#allocation8 + $0x200] sm:$0xff]
    %v3104 = vld [vmem:[#allocation8 + $0x208] sm:$0xff]
    %v3105 = vld [vmem:[#allocation8 + $0x210] sm:$0xff]
    %v3106 = vld [vmem:[#allocation8 + $0x218] sm:$0xff]
    %v3107 = vld [vmem:[#allocation8 + $0x220] sm:$0xff]
    %v3108 = vld [vmem:[#allocation8 + $0x228] sm:$0xff]
    %v3109 = vld [vmem:[#allocation8 + $0x230] sm:$0xff]
    %v3110 = vld [vmem:[#allocation8 + $0x238] sm:$0xff]
    %v3111 = vld [vmem:[#allocation8 + $0x240] sm:$0xff]
    %v3112 = vld [vmem:[#allocation8 + $0x248] sm:$0xff]
    %v3113 = vld [vmem:[#allocation8 + $0x250] sm:$0xff]
    %v3114 = vld [vmem:[#allocation8 + $0x258] sm:$0xff]
    %v3115 = vld [vmem:[#allocation8 + $0x260] sm:$0xff]
    %v3116 = vld [vmem:[#allocation8 + $0x268] sm:$0xff]
    %v3117 = vld [vmem:[#allocation8 + $0x270] sm:$0xff]
    %v3118 = vld [vmem:[#allocation8 + $0x278] sm:$0xff]
    %v3119 = vld [vmem:[#allocation8 + $0x280] sm:$0xff]
    %v3120 = vld [vmem:[#allocation8 + $0x288] sm:$0xff]
    %v3121 = vld [vmem:[#allocation8 + $0x290] sm:$0xff]
    %v3122 = vld [vmem:[#allocation8 + $0x298] sm:$0xff]
    %v3123 = vld [vmem:[#allocation8 + $0x2a0] sm:$0xff]
    %v3124 = vld [vmem:[#allocation8 + $0x2a8] sm:$0xff]
    %v3125 = vld [vmem:[#allocation8 + $0x2b0] sm:$0xff]
    %v3126 = vld [vmem:[#allocation8 + $0x2b8] sm:$0xff]
    %v3127 = vld [vmem:[#allocation8 + $0x2c0] sm:$0xff]
    %v3128 = vld [vmem:[#allocation8 + $0x2c8] sm:$0xff]
    %v3129 = vld [vmem:[#allocation8 + $0x2d0] sm:$0xff]
    %v3130 = vld [vmem:[#allocation8 + $0x2d8] sm:$0xff]
    %v3131 = vld [vmem:[#allocation8 + $0x2e0] sm:$0xff]
    %v3132 = vld [vmem:[#allocation8 + $0x2e8] sm:$0xff]
    %v3133 = vld [vmem:[#allocation8 + $0x2f0] sm:$0xff]
    %v3134 = vld [vmem:[#allocation8 + $0x2f8] sm:$0xff]
    %v3135 = vld [vmem:[#allocation8 + $0x300] sm:$0xff]
    %v3136 = vld [vmem:[#allocation8 + $0x308] sm:$0xff]
    %v3137 = vld [vmem:[#allocation8 + $0x310] sm:$0xff]
    %v3138 = vld [vmem:[#allocation8 + $0x318] sm:$0xff]
    %v3139 = vld [vmem:[#allocation8 + $0x320] sm:$0xff]
    %v3140 = vld [vmem:[#allocation8 + $0x328] sm:$0xff]
    %v3141 = vld [vmem:[#allocation8 + $0x330] sm:$0xff]
    %v3142 = vld [vmem:[#allocation8 + $0x338] sm:$0xff]
    %v3143 = vld [vmem:[#allocation8 + $0x340] sm:$0xff]
    %v3144 = vld [vmem:[#allocation8 + $0x348] sm:$0xff]
    %v3145 = vld [vmem:[#allocation8 + $0x350] sm:$0xff]
    %v3146 = vld [vmem:[#allocation8 + $0x358] sm:$0xff]
    %v3147 = vld [vmem:[#allocation8 + $0x360] sm:$0xff]
    %v3148 = vld [vmem:[#allocation8 + $0x368] sm:$0xff]
    %v3149 = vld [vmem:[#allocation8 + $0x370] sm:$0xff]
    %v3150 = vld [vmem:[#allocation8 + $0x378] sm:$0xff]
    %v3151 = vld [vmem:[#allocation8 + $0x380] sm:$0xff]
    %v3152 = vld [vmem:[#allocation8 + $0x388] sm:$0xff]
    %v3153 = vld [vmem:[#allocation8 + $0x390] sm:$0xff]
    %v3154 = vld [vmem:[#allocation8 + $0x398] sm:$0xff]
    %v3155 = vld [vmem:[#allocation8 + $0x3a0] sm:$0xff]
    %v3156 = vld [vmem:[#allocation8 + $0x3a8] sm:$0xff]
    %v3157 = vld [vmem:[#allocation8 + $0x3b0] sm:$0xff]
    %v3158 = vld [vmem:[#allocation8 + $0x3b8] sm:$0xff]
    %v3159 = vld [vmem:[#allocation8 + $0x3c0] sm:$0xff]
    %v3160 = vld [vmem:[#allocation8 + $0x3c8] sm:$0xff]
    %v3161 = vld [vmem:[#allocation8 + $0x3d0] sm:$0xff]
    %v3162 = vld [vmem:[#allocation8 + $0x3d8] sm:$0xff]
    %v3163 = vld [vmem:[#allocation8 + $0x3e0] sm:$0xff]
    %v3164 = vld [vmem:[#allocation8 + $0x3e8] sm:$0xff]
    %v3165 = vld [vmem:[#allocation8 + $0x3f0] sm:$0xff]
    %v3166 = vld [vmem:[#allocation8 + $0x3f8] sm:$0xff]
    %v3167 = vld [vmem:[#allocation8 + $0x400] sm:$0xff]
    %v3168 = vld [vmem:[#allocation8 + $0x408] sm:$0xff]
    %v3169 = vld [vmem:[#allocation8 + $0x410] sm:$0xff]
    %v3170 = vld [vmem:[#allocation8 + $0x418] sm:$0xff]
    %v3171 = vld [vmem:[#allocation8 + $0x420] sm:$0xff]
    %v3172 = vld [vmem:[#allocation8 + $0x428] sm:$0xff]
    %v3173 = vld [vmem:[#allocation8 + $0x430] sm:$0xff]
    %v3174 = vld [vmem:[#allocation8 + $0x438] sm:$0xff]
    %v3175 = vld [vmem:[#allocation8 + $0x440] sm:$0xff]
    %v3176 = vld [vmem:[#allocation8 + $0x448] sm:$0xff]
    %v3177 = vld [vmem:[#allocation8 + $0x450] sm:$0xff]
    %v3178 = vld [vmem:[#allocation8 + $0x458] sm:$0xff]
    %v3179 = vld [vmem:[#allocation8 + $0x460] sm:$0xff]
    %v3180 = vld [vmem:[#allocation8 + $0x468] sm:$0xff]
    %v3181 = vld [vmem:[#allocation8 + $0x470] sm:$0xff]
    %v3182 = vld [vmem:[#allocation8 + $0x478] sm:$0xff]
    %v3183 = vld [vmem:[#allocation8 + $0x480] sm:$0xff]
    %v3184 = vld [vmem:[#allocation8 + $0x488] sm:$0xff]
    %v3185 = vld [vmem:[#allocation8 + $0x490] sm:$0xff]
    %v3186 = vld [vmem:[#allocation8 + $0x498] sm:$0xff]
    %v3187 = vld [vmem:[#allocation8 + $0x4a0] sm:$0xff]
    %v3188 = vld [vmem:[#allocation8 + $0x4a8] sm:$0xff]
    %v3189 = vld [vmem:[#allocation8 + $0x4b0] sm:$0xff]
    %v3190 = vld [vmem:[#allocation8 + $0x4b8] sm:$0xff]
    %v3191 = vld [vmem:[#allocation8 + $0x4c0] sm:$0xff]
    %v3192 = vld [vmem:[#allocation8 + $0x4c8] sm:$0xff]
    %v3193 = vld [vmem:[#allocation8 + $0x4d0] sm:$0xff]
    %v3194 = vld [vmem:[#allocation8 + $0x4d8] sm:$0xff]
    %v3195 = vld [vmem:[#allocation8 + $0x4e0] sm:$0xff]
    %v3196 = vld [vmem:[#allocation8 + $0x4e8] sm:$0xff]
    %v3197 = vld [vmem:[#allocation8 + $0x4f0] sm:$0xff]
    %v3198 = vld [vmem:[#allocation8 + $0x4f8] sm:$0xff]
    %v3199 = vld [vmem:[#allocation8 + $0x500] sm:$0xff]
    %v3200 = vld [vmem:[#allocation8 + $0x508] sm:$0xff]
    %v3201 = vld [vmem:[#allocation8 + $0x510] sm:$0xff]
    %v3202 = vld [vmem:[#allocation8 + $0x518] sm:$0xff]
    %v3203 = vld [vmem:[#allocation8 + $0x520] sm:$0xff]
    %v3204 = vld [vmem:[#allocation8 + $0x528] sm:$0xff]
    %v3205 = vld [vmem:[#allocation8 + $0x530] sm:$0xff]
    %v3206 = vld [vmem:[#allocation8 + $0x538] sm:$0xff]
    %v3207 = vld [vmem:[#allocation8 + $0x540] sm:$0xff]
    %v3208 = vld [vmem:[#allocation8 + $0x548] sm:$0xff]
    %v3209 = vld [vmem:[#allocation8 + $0x550] sm:$0xff]
    %v3210 = vld [vmem:[#allocation8 + $0x558] sm:$0xff]
    %v3211 = vld [vmem:[#allocation8 + $0x560] sm:$0xff]
    %v3212 = vld [vmem:[#allocation8 + $0x568] sm:$0xff]
    %v3213 = vld [vmem:[#allocation8 + $0x570] sm:$0xff]
    %v3214 = vld [vmem:[#allocation8 + $0x578] sm:$0xff]
    %v3215 = vld [vmem:[#allocation8 + $0x580] sm:$0xff]
    %v3216 = vld [vmem:[#allocation8 + $0x588] sm:$0xff]
    %v3217 = vld [vmem:[#allocation8 + $0x590] sm:$0xff]
    %v3218 = vld [vmem:[#allocation8 + $0x598] sm:$0xff]
    %v3219 = vld [vmem:[#allocation8 + $0x5a0] sm:$0xff]
    %v3220 = vld [vmem:[#allocation8 + $0x5a8] sm:$0xff]
    %v3221 = vld [vmem:[#allocation8 + $0x5b0] sm:$0xff]
    %v3222 = vld [vmem:[#allocation8 + $0x5b8] sm:$0xff]
    %v3223 = vld [vmem:[#allocation8 + $0x5c0] sm:$0xff]
    %v3224 = vld [vmem:[#allocation8 + $0x5c8] sm:$0xff]
    %v3225 = vld [vmem:[#allocation8 + $0x5d0] sm:$0xff]
    %v3226 = vld [vmem:[#allocation8 + $0x5d8] sm:$0xff]
    %v3227 = vld [vmem:[#allocation8 + $0x5e0] sm:$0xff]
    %v3228 = vld [vmem:[#allocation8 + $0x5e8] sm:$0xff]
    %v3229 = vld [vmem:[#allocation8 + $0x5f0] sm:$0xff]
    %v3230 = vld [vmem:[#allocation8 + $0x5f8] sm:$0xff]
    %v3231 = vld [vmem:[#allocation8 + $0x600] sm:$0xff]
    %v3232 = vld [vmem:[#allocation8 + $0x608] sm:$0xff]
    %v3233 = vld [vmem:[#allocation8 + $0x610] sm:$0xff]
    %v3234 = vld [vmem:[#allocation8 + $0x618] sm:$0xff]
    %v3235 = vld [vmem:[#allocation8 + $0x620] sm:$0xff]
    %v3236 = vld [vmem:[#allocation8 + $0x628] sm:$0xff]
    %v3237 = vld [vmem:[#allocation8 + $0x630] sm:$0xff]
    %v3238 = vld [vmem:[#allocation8 + $0x638] sm:$0xff]
    %v3239 = vld [vmem:[#allocation8 + $0x640] sm:$0xff]
    %v3240 = vld [vmem:[#allocation8 + $0x648] sm:$0xff]
    %v3241 = vld [vmem:[#allocation8 + $0x650] sm:$0xff]
    %v3242 = vld [vmem:[#allocation8 + $0x658] sm:$0xff]
    %v3243 = vld [vmem:[#allocation8 + $0x660] sm:$0xff]
    %v3244 = vld [vmem:[#allocation8 + $0x668] sm:$0xff]
    %v3245 = vld [vmem:[#allocation8 + $0x670] sm:$0xff]
    %v3246 = vld [vmem:[#allocation8 + $0x678] sm:$0xff]
    %v3247 = vld [vmem:[#allocation8 + $0x680] sm:$0xff]
    %v3248 = vld [vmem:[#allocation8 + $0x688] sm:$0xff]
    %v3249 = vld [vmem:[#allocation8 + $0x690] sm:$0xff]
    %v3250 = vld [vmem:[#allocation8 + $0x698] sm:$0xff]
    %v3251 = vld [vmem:[#allocation8 + $0x6a0] sm:$0xff]
    %v3252 = vld [vmem:[#allocation8 + $0x6a8] sm:$0xff]
    %v3253 = vld [vmem:[#allocation8 + $0x6b0] sm:$0xff]
    %v3254 = vld [vmem:[#allocation8 + $0x6b8] sm:$0xff]
    %v3255 = vld [vmem:[#allocation8 + $0x6c0] sm:$0xff]
    %v3256 = vld [vmem:[#allocation8 + $0x6c8] sm:$0xff]
    %v3257 = vld [vmem:[#allocation8 + $0x6d0] sm:$0xff]
    %v3258 = vld [vmem:[#allocation8 + $0x6d8] sm:$0xff]
    %v3259 = vld [vmem:[#allocation8 + $0x6e0] sm:$0xff]
    %v3260 = vld [vmem:[#allocation8 + $0x6e8] sm:$0xff]
    %v3261 = vld [vmem:[#allocation8 + $0x6f0] sm:$0xff]
    %v3262 = vld [vmem:[#allocation8 + $0x6f8] sm:$0xff]
    %v3263 = vld [vmem:[#allocation8 + $0x700] sm:$0xff]
    %v3264 = vld [vmem:[#allocation8 + $0x708] sm:$0xff]
    %v3265 = vld [vmem:[#allocation8 + $0x710] sm:$0xff]
    %v3266 = vld [vmem:[#allocation8 + $0x718] sm:$0xff]
    %v3267 = vld [vmem:[#allocation8 + $0x720] sm:$0xff]
    %v3268 = vld [vmem:[#allocation8 + $0x728] sm:$0xff]
    %v3269 = vld [vmem:[#allocation8 + $0x730] sm:$0xff]
    %v3270 = vld [vmem:[#allocation8 + $0x738] sm:$0xff]
    %v3271 = vld [vmem:[#allocation8 + $0x740] sm:$0xff]
    %v3272 = vld [vmem:[#allocation8 + $0x748] sm:$0xff]
    %v3273 = vld [vmem:[#allocation8 + $0x750] sm:$0xff]
    %v3274 = vld [vmem:[#allocation8 + $0x758] sm:$0xff]
    %v3275 = vld [vmem:[#allocation8 + $0x760] sm:$0xff]
    %v3276 = vld [vmem:[#allocation8 + $0x768] sm:$0xff]
    %v3277 = vld [vmem:[#allocation8 + $0x770] sm:$0xff]
    %v3278 = vld [vmem:[#allocation8 + $0x778] sm:$0xff]
    %v3279 = vld [vmem:[#allocation8 + $0x780] sm:$0xff]
    %v3280 = vld [vmem:[#allocation8 + $0x788] sm:$0xff]
    %v3281 = vld [vmem:[#allocation8 + $0x790] sm:$0xff]
    %v3282 = vld [vmem:[#allocation8 + $0x798] sm:$0xff]
    %v3283 = vld [vmem:[#allocation8 + $0x7a0] sm:$0xff]
    %v3284 = vld [vmem:[#allocation8 + $0x7a8] sm:$0xff]
    %v3285 = vld [vmem:[#allocation8 + $0x7b0] sm:$0xff]
    %v3286 = vld [vmem:[#allocation8 + $0x7b8] sm:$0xff]
    %v3287 = vld [vmem:[#allocation8 + $0x7c0] sm:$0xff]
    %v3288 = vld [vmem:[#allocation8 + $0x7c8] sm:$0xff]
    %v3289 = vld [vmem:[#allocation8 + $0x7d0] sm:$0xff]
    %v3290 = vld [vmem:[#allocation8 + $0x7d8] sm:$0xff]
    %v3291 = vld [vmem:[#allocation8 + $0x7e0] sm:$0xff]
    %v3292 = vld [vmem:[#allocation8 + $0x7e8] sm:$0xff]
    %v3293 = vld [vmem:[#allocation8 + $0x7f0] sm:$0xff]
    %v3294 = vld [vmem:[#allocation8 + $0x7f8] sm:$0xff]
    %v3295 = vld [vmem:[#allocation8 + $0x800] sm:$0xff]
    %v3296 = vld [vmem:[#allocation8 + $0x808] sm:$0xff]
    %v3297 = vld [vmem:[#allocation8 + $0x810] sm:$0xff]
    %v3298 = vld [vmem:[#allocation8 + $0x818] sm:$0xff]
    %v3299 = vld [vmem:[#allocation8 + $0x820] sm:$0xff]
    %v3300 = vld [vmem:[#allocation8 + $0x828] sm:$0xff]
    %v3301 = vld [vmem:[#allocation8 + $0x830] sm:$0xff]
    %v3302 = vld [vmem:[#allocation8 + $0x838] sm:$0xff]
    %v3303 = vld [vmem:[#allocation8 + $0x840] sm:$0xff]
    %v3304 = vld [vmem:[#allocation8 + $0x848] sm:$0xff]
    %v3305 = vld [vmem:[#allocation8 + $0x850] sm:$0xff]
    %v3306 = vld [vmem:[#allocation8 + $0x858] sm:$0xff]
    %v3307 = vld [vmem:[#allocation8 + $0x860] sm:$0xff]
    %v3308 = vld [vmem:[#allocation8 + $0x868] sm:$0xff]
    %v3309 = vld [vmem:[#allocation8 + $0x870] sm:$0xff]
    %v3310 = vld [vmem:[#allocation8 + $0x878] sm:$0xff]
    %v3311 = vld [vmem:[#allocation8 + $0x880] sm:$0xff]
    %v3312 = vld [vmem:[#allocation8 + $0x888] sm:$0xff]
    %v3313 = vld [vmem:[#allocation8 + $0x890] sm:$0xff]
    %v3314 = vld [vmem:[#allocation8 + $0x898] sm:$0xff]
    %v3315 = vld [vmem:[#allocation8 + $0x8a0] sm:$0xff]
    %v3316 = vld [vmem:[#allocation8 + $0x8a8] sm:$0xff]
    %v3317 = vld [vmem:[#allocation8 + $0x8b0] sm:$0xff]
    %v3318 = vld [vmem:[#allocation8 + $0x8b8] sm:$0xff]
    %v3319 = vld [vmem:[#allocation8 + $0x8c0] sm:$0xff]
    %v3320 = vld [vmem:[#allocation8 + $0x8c8] sm:$0xff]
    %v3321 = vld [vmem:[#allocation8 + $0x8d0] sm:$0xff]
    %v3322 = vld [vmem:[#allocation8 + $0x8d8] sm:$0xff]
    %v3323 = vld [vmem:[#allocation8 + $0x8e0] sm:$0xff]
    %v3324 = vld [vmem:[#allocation8 + $0x8e8] sm:$0xff]
    %v3325 = vld [vmem:[#allocation8 + $0x8f0] sm:$0xff]
    %v3326 = vld [vmem:[#allocation8 + $0x8f8] sm:$0xff]
    %v3327 = vld [vmem:[#allocation8 + $0x900] sm:$0xff]
    %v3328 = vld [vmem:[#allocation8 + $0x908] sm:$0xff]
    %v3329 = vld [vmem:[#allocation8 + $0x910] sm:$0xff]
    %v3330 = vld [vmem:[#allocation8 + $0x918] sm:$0xff]
    %v3331 = vld [vmem:[#allocation8 + $0x920] sm:$0xff]
    %v3332 = vld [vmem:[#allocation8 + $0x928] sm:$0xff]
    %v3333 = vld [vmem:[#allocation8 + $0x930] sm:$0xff]
    %v3334 = vld [vmem:[#allocation8 + $0x938] sm:$0xff]
    %v3335 = vld [vmem:[#allocation8 + $0x940] sm:$0xff]
    %v3336 = vld [vmem:[#allocation8 + $0x948] sm:$0xff]
    %v3337 = vld [vmem:[#allocation8 + $0x950] sm:$0xff]
    %v3338 = vld [vmem:[#allocation8 + $0x958] sm:$0xff]
    %v3339 = vld [vmem:[#allocation8 + $0x960] sm:$0xff]
    %v3340 = vld [vmem:[#allocation8 + $0x968] sm:$0xff]
    %v3341 = vld [vmem:[#allocation8 + $0x970] sm:$0xff]
    %v3342 = vld [vmem:[#allocation8 + $0x978] sm:$0xff]
    %v3343 = vld [vmem:[#allocation8 + $0x980] sm:$0xff]
    %v3344 = vld [vmem:[#allocation8 + $0x988] sm:$0xff]
    %v3345 = vld [vmem:[#allocation8 + $0x990] sm:$0xff]
    %v3346 = vld [vmem:[#allocation8 + $0x998] sm:$0xff]
    %v3347 = vld [vmem:[#allocation8 + $0x9a0] sm:$0xff]
    %v3348 = vld [vmem:[#allocation8 + $0x9a8] sm:$0xff]
    %v3349 = vld [vmem:[#allocation8 + $0x9b0] sm:$0xff]
    %v3350 = vld [vmem:[#allocation8 + $0x9b8] sm:$0xff]
    %v3351 = vld [vmem:[#allocation8 + $0x9c0] sm:$0xff]
    %v3352 = vld [vmem:[#allocation8 + $0x9c8] sm:$0xff]
    %v3353 = vld [vmem:[#allocation8 + $0x9d0] sm:$0xff]
    %v3354 = vld [vmem:[#allocation8 + $0x9d8] sm:$0xff]
    %v3355 = vld [vmem:[#allocation8 + $0x9e0] sm:$0xff]
    %v3356 = vld [vmem:[#allocation8 + $0x9e8] sm:$0xff]
    %v3357 = vld [vmem:[#allocation8 + $0x9f0] sm:$0xff]
    %v3358 = vld [vmem:[#allocation8 + $0x9f8] sm:$0xff]
    %v3359 = vld [vmem:[#allocation8 + $0xa00] sm:$0xff]
    %v3360 = vld [vmem:[#allocation8 + $0xa08] sm:$0xff]
    %v3361 = vld [vmem:[#allocation8 + $0xa10] sm:$0xff]
    %v3362 = vld [vmem:[#allocation8 + $0xa18] sm:$0xff]
    %v3363 = vld [vmem:[#allocation8 + $0xa20] sm:$0xff]
    %v3364 = vld [vmem:[#allocation8 + $0xa28] sm:$0xff]
    %v3365 = vld [vmem:[#allocation8 + $0xa30] sm:$0xff]
    %v3366 = vld [vmem:[#allocation8 + $0xa38] sm:$0xff]
    %v3367 = vld [vmem:[#allocation8 + $0xa40] sm:$0xff]
    %v3368 = vld [vmem:[#allocation8 + $0xa48] sm:$0xff]
    %v3369 = vld [vmem:[#allocation8 + $0xa50] sm:$0xff]
    %v3370 = vld [vmem:[#allocation8 + $0xa58] sm:$0xff]
    %v3371 = vld [vmem:[#allocation8 + $0xa60] sm:$0xff]
    %v3372 = vld [vmem:[#allocation8 + $0xa68] sm:$0xff]
    %v3373 = vld [vmem:[#allocation8 + $0xa70] sm:$0xff]
    %v3374 = vld [vmem:[#allocation8 + $0xa78] sm:$0xff]
    %v3375 = vld [vmem:[#allocation8 + $0xa80] sm:$0xff]
    %v3376 = vld [vmem:[#allocation8 + $0xa88] sm:$0xff]
    %v3377 = vld [vmem:[#allocation8 + $0xa90] sm:$0xff]
    %v3378 = vld [vmem:[#allocation8 + $0xa98] sm:$0xff]
    %v3379 = vld [vmem:[#allocation8 + $0xaa0] sm:$0xff]
    %v3380 = vld [vmem:[#allocation8 + $0xaa8] sm:$0xff]
    %v3381 = vld [vmem:[#allocation8 + $0xab0] sm:$0xff]
    %v3382 = vld [vmem:[#allocation8 + $0xab8] sm:$0xff]
    %v3383 = vld [vmem:[#allocation8 + $0xac0] sm:$0xff]
    %v3384 = vld [vmem:[#allocation8 + $0xac8] sm:$0xff]
    %v3385 = vld [vmem:[#allocation8 + $0xad0] sm:$0xff]
    %v3386 = vld [vmem:[#allocation8 + $0xad8] sm:$0xff]
    %v3387 = vld [vmem:[#allocation8 + $0xae0] sm:$0xff]
    %v3388 = vld [vmem:[#allocation8 + $0xae8] sm:$0xff]
    %v3389 = vld [vmem:[#allocation8 + $0xaf0] sm:$0xff]
    %v3390 = vld [vmem:[#allocation8 + $0xaf8] sm:$0xff]
    %v3391 = vld [vmem:[#allocation8 + $0xb00] sm:$0xff]
    %v3392 = vld [vmem:[#allocation8 + $0xb08] sm:$0xff]
    %v3393 = vld [vmem:[#allocation8 + $0xb10] sm:$0xff]
    %v3394 = vld [vmem:[#allocation8 + $0xb18] sm:$0xff]
    %v3395 = vld [vmem:[#allocation8 + $0xb20] sm:$0xff]
    %v3396 = vld [vmem:[#allocation8 + $0xb28] sm:$0xff]
    %v3397 = vld [vmem:[#allocation8 + $0xb30] sm:$0xff]
    %v3398 = vld [vmem:[#allocation8 + $0xb38] sm:$0xff]
    %v3399 = vld [vmem:[#allocation8 + $0xb40] sm:$0xff]
    %v3400 = vld [vmem:[#allocation8 + $0xb48] sm:$0xff]
    %v3401 = vld [vmem:[#allocation8 + $0xb50] sm:$0xff]
    %v3402 = vld [vmem:[#allocation8 + $0xb58] sm:$0xff]
    %v3403 = vld [vmem:[#allocation8 + $0xb60] sm:$0xff]
    %v3404 = vld [vmem:[#allocation8 + $0xb68] sm:$0xff]
    %v3405 = vld [vmem:[#allocation8 + $0xb70] sm:$0xff]
    %v3406 = vld [vmem:[#allocation8 + $0xb78] sm:$0xff]
    %v3407 = vld [vmem:[#allocation8 + $0xb80] sm:$0xff]
    %v3408 = vld [vmem:[#allocation8 + $0xb88] sm:$0xff]
    %v3409 = vld [vmem:[#allocation8 + $0xb90] sm:$0xff]
    %v3410 = vld [vmem:[#allocation8 + $0xb98] sm:$0xff]
    %v3411 = vld [vmem:[#allocation8 + $0xba0] sm:$0xff]
    %v3412 = vld [vmem:[#allocation8 + $0xba8] sm:$0xff]
    %v3413 = vld [vmem:[#allocation8 + $0xbb0] sm:$0xff]
    %v3414 = vld [vmem:[#allocation8 + $0xbb8] sm:$0xff]
    %v3415 = vld [vmem:[#allocation8 + $0xbc0] sm:$0xff]
    %v3416 = vld [vmem:[#allocation8 + $0xbc8] sm:$0xff]
    %v3417 = vld [vmem:[#allocation8 + $0xbd0] sm:$0xff]
    %v3418 = vld [vmem:[#allocation8 + $0xbd8] sm:$0xff]
    %v3419 = vld [vmem:[#allocation8 + $0xbe0] sm:$0xff]
    %v3420 = vld [vmem:[#allocation8 + $0xbe8] sm:$0xff]
    %v3421 = vld [vmem:[#allocation8 + $0xbf0] sm:$0xff]
    %v3422 = vld [vmem:[#allocation8 + $0xbf8] sm:$0xff]
    %v3423 = vld [vmem:[#allocation8 + $0xc00] sm:$0xff]
    %v3424 = vld [vmem:[#allocation8 + $0xc08] sm:$0xff]
    %v3425 = vld [vmem:[#allocation8 + $0xc10] sm:$0xff]
    %v3426 = vld [vmem:[#allocation8 + $0xc18] sm:$0xff]
    %v3427 = vld [vmem:[#allocation8 + $0xc20] sm:$0xff]
    %v3428 = vld [vmem:[#allocation8 + $0xc28] sm:$0xff]
    %v3429 = vld [vmem:[#allocation8 + $0xc30] sm:$0xff]
    %v3430 = vld [vmem:[#allocation8 + $0xc38] sm:$0xff]
    %v3431 = vld [vmem:[#allocation8 + $0xc40] sm:$0xff]
    %v3432 = vld [vmem:[#allocation8 + $0xc48] sm:$0xff]
    %v3433 = vld [vmem:[#allocation8 + $0xc50] sm:$0xff]
    %v3434 = vld [vmem:[#allocation8 + $0xc58] sm:$0xff]
    %v3435 = vld [vmem:[#allocation8 + $0xc60] sm:$0xff]
    %v3436 = vld [vmem:[#allocation8 + $0xc68] sm:$0xff]
    %v3437 = vld [vmem:[#allocation8 + $0xc70] sm:$0xff]
    %v3438 = vld [vmem:[#allocation8 + $0xc78] sm:$0xff]
    %v3439 = vld [vmem:[#allocation8 + $0xc80] sm:$0xff]
    %v3440 = vld [vmem:[#allocation8 + $0xc88] sm:$0xff]
    %v3441 = vld [vmem:[#allocation8 + $0xc90] sm:$0xff]
    %v3442 = vld [vmem:[#allocation8 + $0xc98] sm:$0xff]
    %v3443 = vld [vmem:[#allocation8 + $0xca0] sm:$0xff]
    %v3444 = vld [vmem:[#allocation8 + $0xca8] sm:$0xff]
    %v3445 = vld [vmem:[#allocation8 + $0xcb0] sm:$0xff]
    %v3446 = vld [vmem:[#allocation8 + $0xcb8] sm:$0xff]
    %v3447 = vld [vmem:[#allocation8 + $0xcc0] sm:$0xff]
    %v3448 = vld [vmem:[#allocation8 + $0xcc8] sm:$0xff]
    %v3449 = vld [vmem:[#allocation8 + $0xcd0] sm:$0xff]
    %v3450 = vld [vmem:[#allocation8 + $0xcd8] sm:$0xff]
    %v3451 = vld [vmem:[#allocation8 + $0xce0] sm:$0xff]
    %v3452 = vld [vmem:[#allocation8 + $0xce8] sm:$0xff]
    %v3453 = vld [vmem:[#allocation8 + $0xcf0] sm:$0xff]
    %v3454 = vld [vmem:[#allocation8 + $0xcf8] sm:$0xff]
    %v3455 = vld [vmem:[#allocation8 + $0xd00] sm:$0xff]
    %v3456 = vld [vmem:[#allocation8 + $0xd08] sm:$0xff]
    %v3457 = vld [vmem:[#allocation8 + $0xd10] sm:$0xff]
    %v3458 = vld [vmem:[#allocation8 + $0xd18] sm:$0xff]
    %v3459 = vld [vmem:[#allocation8 + $0xd20] sm:$0xff]
    %v3460 = vld [vmem:[#allocation8 + $0xd28] sm:$0xff]
    %v3461 = vld [vmem:[#allocation8 + $0xd30] sm:$0xff]
    %v3462 = vld [vmem:[#allocation8 + $0xd38] sm:$0xff]
    %v3463 = vld [vmem:[#allocation8 + $0xd40] sm:$0xff]
    %v3464 = vld [vmem:[#allocation8 + $0xd48] sm:$0xff]
    %v3465 = vld [vmem:[#allocation8 + $0xd50] sm:$0xff]
    %v3466 = vld [vmem:[#allocation8 + $0xd58] sm:$0xff]
    %v3467 = vld [vmem:[#allocation8 + $0xd60] sm:$0xff]
    %v3468 = vld [vmem:[#allocation8 + $0xd68] sm:$0xff]
    %v3469 = vld [vmem:[#allocation8 + $0xd70] sm:$0xff]
    %v3470 = vld [vmem:[#allocation8 + $0xd78] sm:$0xff]
    %v3471 = vld [vmem:[#allocation8 + $0xd80] sm:$0xff]
    %v3472 = vld [vmem:[#allocation8 + $0xd88] sm:$0xff]
    %v3473 = vld [vmem:[#allocation8 + $0xd90] sm:$0xff]
    %v3474 = vld [vmem:[#allocation8 + $0xd98] sm:$0xff]
    %v3475 = vld [vmem:[#allocation8 + $0xda0] sm:$0xff]
    %v3476 = vld [vmem:[#allocation8 + $0xda8] sm:$0xff]
    %v3477 = vld [vmem:[#allocation8 + $0xdb0] sm:$0xff]
    %v3478 = vld [vmem:[#allocation8 + $0xdb8] sm:$0xff]
    %v3479 = vld [vmem:[#allocation8 + $0xdc0] sm:$0xff]
    %v3480 = vld [vmem:[#allocation8 + $0xdc8] sm:$0xff]
    %v3481 = vld [vmem:[#allocation8 + $0xdd0] sm:$0xff]
    %v3482 = vld [vmem:[#allocation8 + $0xdd8] sm:$0xff]
    %v3483 = vld [vmem:[#allocation8 + $0xde0] sm:$0xff]
    %v3484 = vld [vmem:[#allocation8 + $0xde8] sm:$0xff]
    %v3485 = vld [vmem:[#allocation8 + $0xdf0] sm:$0xff]
    %v3486 = vld [vmem:[#allocation8 + $0xdf8] sm:$0xff]
    %v3487 = vld [vmem:[#allocation8 + $0xe00] sm:$0xff]
    %v3488 = vld [vmem:[#allocation8 + $0xe08] sm:$0xff]
    %v3489 = vld [vmem:[#allocation8 + $0xe10] sm:$0xff]
    %v3490 = vld [vmem:[#allocation8 + $0xe18] sm:$0xff]
    %v3491 = vld [vmem:[#allocation8 + $0xe20] sm:$0xff]
    %v3492 = vld [vmem:[#allocation8 + $0xe28] sm:$0xff]
    %v3493 = vld [vmem:[#allocation8 + $0xe30] sm:$0xff]
    %v3494 = vld [vmem:[#allocation8 + $0xe38] sm:$0xff]
    %v3495 = vld [vmem:[#allocation8 + $0xe40] sm:$0xff]
    %v3496 = vld [vmem:[#allocation8 + $0xe48] sm:$0xff]
    %v3497 = vld [vmem:[#allocation8 + $0xe50] sm:$0xff]
    %v3498 = vld [vmem:[#allocation8 + $0xe58] sm:$0xff]
    %v3499 = vld [vmem:[#allocation8 + $0xe60] sm:$0xff]
    %v3500 = vld [vmem:[#allocation8 + $0xe68] sm:$0xff]
    %v3501 = vld [vmem:[#allocation8 + $0xe70] sm:$0xff]
    %v3502 = vld [vmem:[#allocation8 + $0xe78] sm:$0xff]
    %v3503 = vld [vmem:[#allocation8 + $0xe80] sm:$0xff]
    %v3504 = vld [vmem:[#allocation8 + $0xe88] sm:$0xff]
    %v3505 = vld [vmem:[#allocation8 + $0xe90] sm:$0xff]
    %v3506 = vld [vmem:[#allocation8 + $0xe98] sm:$0xff]
    %v3507 = vld [vmem:[#allocation8 + $0xea0] sm:$0xff]
    %v3508 = vld [vmem:[#allocation8 + $0xea8] sm:$0xff]
    %v3509 = vld [vmem:[#allocation8 + $0xeb0] sm:$0xff]
    %v3510 = vld [vmem:[#allocation8 + $0xeb8] sm:$0xff]
    %v3511 = vld [vmem:[#allocation8 + $0xec0] sm:$0xff]
    %v3512 = vld [vmem:[#allocation8 + $0xec8] sm:$0xff]
    %v3513 = vld [vmem:[#allocation8 + $0xed0] sm:$0xff]
    %v3514 = vld [vmem:[#allocation8 + $0xed8] sm:$0xff]
    %v3515 = vld [vmem:[#allocation8 + $0xee0] sm:$0xff]
    %v3516 = vld [vmem:[#allocation8 + $0xee8] sm:$0xff]
    %v3517 = vld [vmem:[#allocation8 + $0xef0] sm:$0xff]
    %v3518 = vld [vmem:[#allocation8 + $0xef8] sm:$0xff]
    %v3519 = vld [vmem:[#allocation8 + $0xf00] sm:$0xff]
    %v3520 = vld [vmem:[#allocation8 + $0xf08] sm:$0xff]
    %v3521 = vld [vmem:[#allocation8 + $0xf10] sm:$0xff]
    %v3522 = vld [vmem:[#allocation8 + $0xf18] sm:$0xff]
    %v3523 = vld [vmem:[#allocation8 + $0xf20] sm:$0xff]
    %v3524 = vld [vmem:[#allocation8 + $0xf28] sm:$0xff]
    %v3525 = vld [vmem:[#allocation8 + $0xf30] sm:$0xff]
    %v3526 = vld [vmem:[#allocation8 + $0xf38] sm:$0xff]
    %v3527 = vld [vmem:[#allocation8 + $0xf40] sm:$0xff]
    %v3528 = vld [vmem:[#allocation8 + $0xf48] sm:$0xff]
    %v3529 = vld [vmem:[#allocation8 + $0xf50] sm:$0xff]
    %v3530 = vld [vmem:[#allocation8 + $0xf58] sm:$0xff]
    %v3531 = vld [vmem:[#allocation8 + $0xf60] sm:$0xff]
    %v3532 = vld [vmem:[#allocation8 + $0xf68] sm:$0xff]
    %v3533 = vld [vmem:[#allocation8 + $0xf70] sm:$0xff]
    %v3534 = vld [vmem:[#allocation8 + $0xf78] sm:$0xff]
    %v3535 = vld [vmem:[#allocation8 + $0xf80] sm:$0xff]
    %v3536 = vld [vmem:[#allocation8 + $0xf88] sm:$0xff]
    %v3537 = vld [vmem:[#allocation8 + $0xf90] sm:$0xff]
    %v3538 = vld [vmem:[#allocation8 + $0xf98] sm:$0xff]
    %v3539 = vld [vmem:[#allocation8 + $0xfa0] sm:$0xff]
    %v3540 = vld [vmem:[#allocation8 + $0xfa8] sm:$0xff]
    %v3541 = vld [vmem:[#allocation8 + $0xfb0] sm:$0xff]
    %v3542 = vld [vmem:[#allocation8 + $0xfb8] sm:$0xff]
    %v3543 = vld [vmem:[#allocation8 + $0xfc0] sm:$0xff]
    %v3544 = vld [vmem:[#allocation8 + $0xfc8] sm:$0xff]
    %v3545 = vld [vmem:[#allocation8 + $0xfd0] sm:$0xff]
    %v3546 = vld [vmem:[#allocation8 + $0xfd8] sm:$0xff]
    %v3547 = vld [vmem:[#allocation8 + $0xfe0] sm:$0xff]
    %v3548 = vld [vmem:[#allocation8 + $0xfe8] sm:$0xff]
    %v3549 = vld [vmem:[#allocation8 + $0xff0] sm:$0xff]
    %v3550 = vld [vmem:[#allocation8 + $0xff8] sm:$0xff]
    %v3551 = vld [vmem:[#allocation10] sm:$0xff]
    %v3553 = vlaneseq
    %v3554 = vshrl.u32 %v3553, 7
    %v3555 = vsub.s32 0, %v3554
    %v3556 = vrot.slane %v3551, %v3555
    %v3557 = vlaneseq
    %v3558 = vshrl.u32 %v3557, 7
    %v3559 = vsub.s32 1, %v3558
    %v3560 = vrot.slane %v3551, %v3559
    %v3561 = vlaneseq
    %v3562 = vshrl.u32 %v3561, 7
    %v3563 = vsub.s32 2, %v3562
    %v3564 = vrot.slane %v3551, %v3563
    %v3565 = vlaneseq
    %v3566 = vshrl.u32 %v3565, 7
    %v3567 = vsub.s32 3, %v3566
    %v3568 = vrot.slane %v3551, %v3567
    %v3569 = vlaneseq
    %v3570 = vshrl.u32 %v3569, 7
    %v3571 = vsub.s32 4, %v3570
    %v3572 = vrot.slane %v3551, %v3571
    %v3573 = vlaneseq
    %v3574 = vshrl.u32 %v3573, 7
    %v3575 = vsub.s32 5, %v3574
    %v3576 = vrot.slane %v3551, %v3575
    %v3577 = vlaneseq
    %v3578 = vshrl.u32 %v3577, 7
    %v3579 = vsub.s32 6, %v3578
    %v3580 = vrot.slane %v3551, %v3579
    %v3581 = vlaneseq
    %v3582 = vshrl.u32 %v3581, 7
    %v3583 = vsub.s32 7, %v3582
    %v3584 = vrot.slane %v3551, %v3583
    %v4105 = vunpack.c.l.b16 %v3039
    %v4106 = vunpack.c.h.b16 %v3039
    %v4107 = vunpack.c.l.b16 %v3040
    %v4108 = vunpack.c.h.b16 %v3040
    %v4109 = vunpack.c.l.b16 %v3041
    %v4110 = vunpack.c.h.b16 %v3041
    %v4111 = vunpack.c.l.b16 %v3042
    %v4112 = vunpack.c.h.b16 %v3042
    %v4113 = vunpack.c.l.b16 %v3043
    %v4114 = vunpack.c.h.b16 %v3043
    %v4115 = vunpack.c.l.b16 %v3044
    %v4116 = vunpack.c.h.b16 %v3044
    %v4117 = vunpack.c.l.b16 %v3045
    %v4118 = vunpack.c.h.b16 %v3045
    %v4119 = vunpack.c.l.b16 %v3046
    %v4120 = vunpack.c.h.b16 %v3046
    %v4121 = vunpack.c.l.b16 %v3047
    %v4122 = vunpack.c.h.b16 %v3047
    %v4123 = vunpack.c.l.b16 %v3048
    %v4124 = vunpack.c.h.b16 %v3048
    %v4125 = vunpack.c.l.b16 %v3049
    %v4126 = vunpack.c.h.b16 %v3049
    %v4127 = vunpack.c.l.b16 %v3050
    %v4128 = vunpack.c.h.b16 %v3050
    %v4129 = vunpack.c.l.b16 %v3051
    %v4130 = vunpack.c.h.b16 %v3051
    %v4131 = vunpack.c.l.b16 %v3052
    %v4132 = vunpack.c.h.b16 %v3052
    %v4133 = vunpack.c.l.b16 %v3053
    %v4134 = vunpack.c.h.b16 %v3053
    %v4135 = vunpack.c.l.b16 %v3054
    %v4136 = vunpack.c.h.b16 %v3054
    %v4137 = vunpack.c.l.b16 %v3055
    %v4138 = vunpack.c.h.b16 %v3055
    %v4139 = vunpack.c.l.b16 %v3056
    %v4140 = vunpack.c.h.b16 %v3056
    %v4141 = vunpack.c.l.b16 %v3057
    %v4142 = vunpack.c.h.b16 %v3057
    %v4143 = vunpack.c.l.b16 %v3058
    %v4144 = vunpack.c.h.b16 %v3058
    %v4145 = vunpack.c.l.b16 %v3059
    %v4146 = vunpack.c.h.b16 %v3059
    %v4147 = vunpack.c.l.b16 %v3060
    %v4148 = vunpack.c.h.b16 %v3060
    %v4149 = vunpack.c.l.b16 %v3061
    %v4150 = vunpack.c.h.b16 %v3061
    %v4151 = vunpack.c.l.b16 %v3062
    %v4152 = vunpack.c.h.b16 %v3062
    %v4153 = vunpack.c.l.b16 %v3063
    %v4154 = vunpack.c.h.b16 %v3063
    %v4155 = vunpack.c.l.b16 %v3064
    %v4156 = vunpack.c.h.b16 %v3064
    %v4157 = vunpack.c.l.b16 %v3065
    %v4158 = vunpack.c.h.b16 %v3065
    %v4159 = vunpack.c.l.b16 %v3066
    %v4160 = vunpack.c.h.b16 %v3066
    %v4161 = vunpack.c.l.b16 %v3067
    %v4162 = vunpack.c.h.b16 %v3067
    %v4163 = vunpack.c.l.b16 %v3068
    %v4164 = vunpack.c.h.b16 %v3068
    %v4165 = vunpack.c.l.b16 %v3069
    %v4166 = vunpack.c.h.b16 %v3069
    %v4167 = vunpack.c.l.b16 %v3070
    %v4168 = vunpack.c.h.b16 %v3070
    %v4169 = vunpack.c.l.b16 %v3071
    %v4170 = vunpack.c.h.b16 %v3071
    %v4171 = vunpack.c.l.b16 %v3072
    %v4172 = vunpack.c.h.b16 %v3072
    %v4173 = vunpack.c.l.b16 %v3073
    %v4174 = vunpack.c.h.b16 %v3073
    %v4175 = vunpack.c.l.b16 %v3074
    %v4176 = vunpack.c.h.b16 %v3074
    %v4177 = vunpack.c.l.b16 %v3075
    %v4178 = vunpack.c.h.b16 %v3075
    %v4179 = vunpack.c.l.b16 %v3076
    %v4180 = vunpack.c.h.b16 %v3076
    %v4181 = vunpack.c.l.b16 %v3077
    %v4182 = vunpack.c.h.b16 %v3077
    %v4183 = vunpack.c.l.b16 %v3078
    %v4184 = vunpack.c.h.b16 %v3078
    %v4185 = vunpack.c.l.b16 %v3079
    %v4186 = vunpack.c.h.b16 %v3079
    %v4187 = vunpack.c.l.b16 %v3080
    %v4188 = vunpack.c.h.b16 %v3080
    %v4189 = vunpack.c.l.b16 %v3081
    %v4190 = vunpack.c.h.b16 %v3081
    %v4191 = vunpack.c.l.b16 %v3082
    %v4192 = vunpack.c.h.b16 %v3082
    %v4193 = vunpack.c.l.b16 %v3083
    %v4194 = vunpack.c.h.b16 %v3083
    %v4195 = vunpack.c.l.b16 %v3084
    %v4196 = vunpack.c.h.b16 %v3084
    %v4197 = vunpack.c.l.b16 %v3085
    %v4198 = vunpack.c.h.b16 %v3085
    %v4199 = vunpack.c.l.b16 %v3086
    %v4200 = vunpack.c.h.b16 %v3086
    %v4201 = vunpack.c.l.b16 %v3087
    %v4202 = vunpack.c.h.b16 %v3087
    %v4203 = vunpack.c.l.b16 %v3088
    %v4204 = vunpack.c.h.b16 %v3088
    %v4205 = vunpack.c.l.b16 %v3089
    %v4206 = vunpack.c.h.b16 %v3089
    %v4207 = vunpack.c.l.b16 %v3090
    %v4208 = vunpack.c.h.b16 %v3090
    %v4209 = vunpack.c.l.b16 %v3091
    %v4210 = vunpack.c.h.b16 %v3091
    %v4211 = vunpack.c.l.b16 %v3092
    %v4212 = vunpack.c.h.b16 %v3092
    %v4213 = vunpack.c.l.b16 %v3093
    %v4214 = vunpack.c.h.b16 %v3093
    %v4215 = vunpack.c.l.b16 %v3094
    %v4216 = vunpack.c.h.b16 %v3094
    %v4217 = vunpack.c.l.b16 %v3095
    %v4218 = vunpack.c.h.b16 %v3095
    %v4219 = vunpack.c.l.b16 %v3096
    %v4220 = vunpack.c.h.b16 %v3096
    %v4221 = vunpack.c.l.b16 %v3097
    %v4222 = vunpack.c.h.b16 %v3097
    %v4223 = vunpack.c.l.b16 %v3098
    %v4224 = vunpack.c.h.b16 %v3098
    %v4225 = vunpack.c.l.b16 %v3099
    %v4226 = vunpack.c.h.b16 %v3099
    %v4227 = vunpack.c.l.b16 %v3100
    %v4228 = vunpack.c.h.b16 %v3100
    %v4229 = vunpack.c.l.b16 %v3101
    %v4230 = vunpack.c.h.b16 %v3101
    %v4231 = vunpack.c.l.b16 %v3102
    %v4232 = vunpack.c.h.b16 %v3102
    %v4233 = vunpack.c.l.b16 %v3103
    %v4234 = vunpack.c.h.b16 %v3103
    %v4235 = vunpack.c.l.b16 %v3104
    %v4236 = vunpack.c.h.b16 %v3104
    %v4237 = vunpack.c.l.b16 %v3105
    %v4238 = vunpack.c.h.b16 %v3105
    %v4239 = vunpack.c.l.b16 %v3106
    %v4240 = vunpack.c.h.b16 %v3106
    %v4241 = vunpack.c.l.b16 %v3107
    %v4242 = vunpack.c.h.b16 %v3107
    %v4243 = vunpack.c.l.b16 %v3108
    %v4244 = vunpack.c.h.b16 %v3108
    %v4245 = vunpack.c.l.b16 %v3109
    %v4246 = vunpack.c.h.b16 %v3109
    %v4247 = vunpack.c.l.b16 %v3110
    %v4248 = vunpack.c.h.b16 %v3110
    %v4249 = vunpack.c.l.b16 %v3111
    %v4250 = vunpack.c.h.b16 %v3111
    %v4251 = vunpack.c.l.b16 %v3112
    %v4252 = vunpack.c.h.b16 %v3112
    %v4253 = vunpack.c.l.b16 %v3113
    %v4254 = vunpack.c.h.b16 %v3113
    %v4255 = vunpack.c.l.b16 %v3114
    %v4256 = vunpack.c.h.b16 %v3114
    %v4257 = vunpack.c.l.b16 %v3115
    %v4258 = vunpack.c.h.b16 %v3115
    %v4259 = vunpack.c.l.b16 %v3116
    %v4260 = vunpack.c.h.b16 %v3116
    %v4261 = vunpack.c.l.b16 %v3117
    %v4262 = vunpack.c.h.b16 %v3117
    %v4263 = vunpack.c.l.b16 %v3118
    %v4264 = vunpack.c.h.b16 %v3118
    %v4265 = vunpack.c.l.b16 %v3119
    %v4266 = vunpack.c.h.b16 %v3119
    %v4267 = vunpack.c.l.b16 %v3120
    %v4268 = vunpack.c.h.b16 %v3120
    %v4269 = vunpack.c.l.b16 %v3121
    %v4270 = vunpack.c.h.b16 %v3121
    %v4271 = vunpack.c.l.b16 %v3122
    %v4272 = vunpack.c.h.b16 %v3122
    %v4273 = vunpack.c.l.b16 %v3123
    %v4274 = vunpack.c.h.b16 %v3123
    %v4275 = vunpack.c.l.b16 %v3124
    %v4276 = vunpack.c.h.b16 %v3124
    %v4277 = vunpack.c.l.b16 %v3125
    %v4278 = vunpack.c.h.b16 %v3125
    %v4279 = vunpack.c.l.b16 %v3126
    %v4280 = vunpack.c.h.b16 %v3126
    %v4281 = vunpack.c.l.b16 %v3127
    %v4282 = vunpack.c.h.b16 %v3127
    %v4283 = vunpack.c.l.b16 %v3128
    %v4284 = vunpack.c.h.b16 %v3128
    %v4285 = vunpack.c.l.b16 %v3129
    %v4286 = vunpack.c.h.b16 %v3129
    %v4287 = vunpack.c.l.b16 %v3130
    %v4288 = vunpack.c.h.b16 %v3130
    %v4289 = vunpack.c.l.b16 %v3131
    %v4290 = vunpack.c.h.b16 %v3131
    %v4291 = vunpack.c.l.b16 %v3132
    %v4292 = vunpack.c.h.b16 %v3132
    %v4293 = vunpack.c.l.b16 %v3133
    %v4294 = vunpack.c.h.b16 %v3133
    %v4295 = vunpack.c.l.b16 %v3134
    %v4296 = vunpack.c.h.b16 %v3134
    %v4297 = vunpack.c.l.b16 %v3135
    %v4298 = vunpack.c.h.b16 %v3135
    %v4299 = vunpack.c.l.b16 %v3136
    %v4300 = vunpack.c.h.b16 %v3136
    %v4301 = vunpack.c.l.b16 %v3137
    %v4302 = vunpack.c.h.b16 %v3137
    %v4303 = vunpack.c.l.b16 %v3138
    %v4304 = vunpack.c.h.b16 %v3138
    %v4305 = vunpack.c.l.b16 %v3139
    %v4306 = vunpack.c.h.b16 %v3139
    %v4307 = vunpack.c.l.b16 %v3140
    %v4308 = vunpack.c.h.b16 %v3140
    %v4309 = vunpack.c.l.b16 %v3141
    %v4310 = vunpack.c.h.b16 %v3141
    %v4311 = vunpack.c.l.b16 %v3142
    %v4312 = vunpack.c.h.b16 %v3142
    %v4313 = vunpack.c.l.b16 %v3143
    %v4314 = vunpack.c.h.b16 %v3143
    %v4315 = vunpack.c.l.b16 %v3144
    %v4316 = vunpack.c.h.b16 %v3144
    %v4317 = vunpack.c.l.b16 %v3145
    %v4318 = vunpack.c.h.b16 %v3145
    %v4319 = vunpack.c.l.b16 %v3146
    %v4320 = vunpack.c.h.b16 %v3146
    %v4321 = vunpack.c.l.b16 %v3147
    %v4322 = vunpack.c.h.b16 %v3147
    %v4323 = vunpack.c.l.b16 %v3148
    %v4324 = vunpack.c.h.b16 %v3148
    %v4325 = vunpack.c.l.b16 %v3149
    %v4326 = vunpack.c.h.b16 %v3149
    %v4327 = vunpack.c.l.b16 %v3150
    %v4328 = vunpack.c.h.b16 %v3150
    %v4329 = vunpack.c.l.b16 %v3151
    %v4330 = vunpack.c.h.b16 %v3151
    %v4331 = vunpack.c.l.b16 %v3152
    %v4332 = vunpack.c.h.b16 %v3152
    %v4333 = vunpack.c.l.b16 %v3153
    %v4334 = vunpack.c.h.b16 %v3153
    %v4335 = vunpack.c.l.b16 %v3154
    %v4336 = vunpack.c.h.b16 %v3154
    %v4337 = vunpack.c.l.b16 %v3155
    %v4338 = vunpack.c.h.b16 %v3155
    %v4339 = vunpack.c.l.b16 %v3156
    %v4340 = vunpack.c.h.b16 %v3156
    %v4341 = vunpack.c.l.b16 %v3157
    %v4342 = vunpack.c.h.b16 %v3157
    %v4343 = vunpack.c.l.b16 %v3158
    %v4344 = vunpack.c.h.b16 %v3158
    %v4345 = vunpack.c.l.b16 %v3159
    %v4346 = vunpack.c.h.b16 %v3159
    %v4347 = vunpack.c.l.b16 %v3160
    %v4348 = vunpack.c.h.b16 %v3160
    %v4349 = vunpack.c.l.b16 %v3161
    %v4350 = vunpack.c.h.b16 %v3161
    %v4351 = vunpack.c.l.b16 %v3162
    %v4352 = vunpack.c.h.b16 %v3162
    %v4353 = vunpack.c.l.b16 %v3163
    %v4354 = vunpack.c.h.b16 %v3163
    %v4355 = vunpack.c.l.b16 %v3164
    %v4356 = vunpack.c.h.b16 %v3164
    %v4357 = vunpack.c.l.b16 %v3165
    %v4358 = vunpack.c.h.b16 %v3165
    %v4359 = vunpack.c.l.b16 %v3166
    %v4360 = vunpack.c.h.b16 %v3166
    %v4361 = vunpack.c.l.b16 %v3167
    %v4362 = vunpack.c.h.b16 %v3167
    %v4363 = vunpack.c.l.b16 %v3168
    %v4364 = vunpack.c.h.b16 %v3168
    %v4365 = vunpack.c.l.b16 %v3169
    %v4366 = vunpack.c.h.b16 %v3169
    %v4367 = vunpack.c.l.b16 %v3170
    %v4368 = vunpack.c.h.b16 %v3170
    %v4369 = vunpack.c.l.b16 %v3171
    %v4370 = vunpack.c.h.b16 %v3171
    %v4371 = vunpack.c.l.b16 %v3172
    %v4372 = vunpack.c.h.b16 %v3172
    %v4373 = vunpack.c.l.b16 %v3173
    %v4374 = vunpack.c.h.b16 %v3173
    %v4375 = vunpack.c.l.b16 %v3174
    %v4376 = vunpack.c.h.b16 %v3174
    %v4377 = vunpack.c.l.b16 %v3175
    %v4378 = vunpack.c.h.b16 %v3175
    %v4379 = vunpack.c.l.b16 %v3176
    %v4380 = vunpack.c.h.b16 %v3176
    %v4381 = vunpack.c.l.b16 %v3177
    %v4382 = vunpack.c.h.b16 %v3177
    %v4383 = vunpack.c.l.b16 %v3178
    %v4384 = vunpack.c.h.b16 %v3178
    %v4385 = vunpack.c.l.b16 %v3179
    %v4386 = vunpack.c.h.b16 %v3179
    %v4387 = vunpack.c.l.b16 %v3180
    %v4388 = vunpack.c.h.b16 %v3180
    %v4389 = vunpack.c.l.b16 %v3181
    %v4390 = vunpack.c.h.b16 %v3181
    %v4391 = vunpack.c.l.b16 %v3182
    %v4392 = vunpack.c.h.b16 %v3182
    %v4393 = vunpack.c.l.b16 %v3183
    %v4394 = vunpack.c.h.b16 %v3183
    %v4395 = vunpack.c.l.b16 %v3184
    %v4396 = vunpack.c.h.b16 %v3184
    %v4397 = vunpack.c.l.b16 %v3185
    %v4398 = vunpack.c.h.b16 %v3185
    %v4399 = vunpack.c.l.b16 %v3186
    %v4400 = vunpack.c.h.b16 %v3186
    %v4401 = vunpack.c.l.b16 %v3187
    %v4402 = vunpack.c.h.b16 %v3187
    %v4403 = vunpack.c.l.b16 %v3188
    %v4404 = vunpack.c.h.b16 %v3188
    %v4405 = vunpack.c.l.b16 %v3189
    %v4406 = vunpack.c.h.b16 %v3189
    %v4407 = vunpack.c.l.b16 %v3190
    %v4408 = vunpack.c.h.b16 %v3190
    %v4409 = vunpack.c.l.b16 %v3191
    %v4410 = vunpack.c.h.b16 %v3191
    %v4411 = vunpack.c.l.b16 %v3192
    %v4412 = vunpack.c.h.b16 %v3192
    %v4413 = vunpack.c.l.b16 %v3193
    %v4414 = vunpack.c.h.b16 %v3193
    %v4415 = vunpack.c.l.b16 %v3194
    %v4416 = vunpack.c.h.b16 %v3194
    %v4417 = vunpack.c.l.b16 %v3195
    %v4418 = vunpack.c.h.b16 %v3195
    %v4419 = vunpack.c.l.b16 %v3196
    %v4420 = vunpack.c.h.b16 %v3196
    %v4421 = vunpack.c.l.b16 %v3197
    %v4422 = vunpack.c.h.b16 %v3197
    %v4423 = vunpack.c.l.b16 %v3198
    %v4424 = vunpack.c.h.b16 %v3198
    %v4425 = vunpack.c.l.b16 %v3199
    %v4426 = vunpack.c.h.b16 %v3199
    %v4427 = vunpack.c.l.b16 %v3200
    %v4428 = vunpack.c.h.b16 %v3200
    %v4429 = vunpack.c.l.b16 %v3201
    %v4430 = vunpack.c.h.b16 %v3201
    %v4431 = vunpack.c.l.b16 %v3202
    %v4432 = vunpack.c.h.b16 %v3202
    %v4433 = vunpack.c.l.b16 %v3203
    %v4434 = vunpack.c.h.b16 %v3203
    %v4435 = vunpack.c.l.b16 %v3204
    %v4436 = vunpack.c.h.b16 %v3204
    %v4437 = vunpack.c.l.b16 %v3205
    %v4438 = vunpack.c.h.b16 %v3205
    %v4439 = vunpack.c.l.b16 %v3206
    %v4440 = vunpack.c.h.b16 %v3206
    %v4441 = vunpack.c.l.b16 %v3207
    %v4442 = vunpack.c.h.b16 %v3207
    %v4443 = vunpack.c.l.b16 %v3208
    %v4444 = vunpack.c.h.b16 %v3208
    %v4445 = vunpack.c.l.b16 %v3209
    %v4446 = vunpack.c.h.b16 %v3209
    %v4447 = vunpack.c.l.b16 %v3210
    %v4448 = vunpack.c.h.b16 %v3210
    %v4449 = vunpack.c.l.b16 %v3211
    %v4450 = vunpack.c.h.b16 %v3211
    %v4451 = vunpack.c.l.b16 %v3212
    %v4452 = vunpack.c.h.b16 %v3212
    %v4453 = vunpack.c.l.b16 %v3213
    %v4454 = vunpack.c.h.b16 %v3213
    %v4455 = vunpack.c.l.b16 %v3214
    %v4456 = vunpack.c.h.b16 %v3214
    %v4457 = vunpack.c.l.b16 %v3215
    %v4458 = vunpack.c.h.b16 %v3215
    %v4459 = vunpack.c.l.b16 %v3216
    %v4460 = vunpack.c.h.b16 %v3216
    %v4461 = vunpack.c.l.b16 %v3217
    %v4462 = vunpack.c.h.b16 %v3217
    %v4463 = vunpack.c.l.b16 %v3218
    %v4464 = vunpack.c.h.b16 %v3218
    %v4465 = vunpack.c.l.b16 %v3219
    %v4466 = vunpack.c.h.b16 %v3219
    %v4467 = vunpack.c.l.b16 %v3220
    %v4468 = vunpack.c.h.b16 %v3220
    %v4469 = vunpack.c.l.b16 %v3221
    %v4470 = vunpack.c.h.b16 %v3221
    %v4471 = vunpack.c.l.b16 %v3222
    %v4472 = vunpack.c.h.b16 %v3222
    %v4473 = vunpack.c.l.b16 %v3223
    %v4474 = vunpack.c.h.b16 %v3223
    %v4475 = vunpack.c.l.b16 %v3224
    %v4476 = vunpack.c.h.b16 %v3224
    %v4477 = vunpack.c.l.b16 %v3225
    %v4478 = vunpack.c.h.b16 %v3225
    %v4479 = vunpack.c.l.b16 %v3226
    %v4480 = vunpack.c.h.b16 %v3226
    %v4481 = vunpack.c.l.b16 %v3227
    %v4482 = vunpack.c.h.b16 %v3227
    %v4483 = vunpack.c.l.b16 %v3228
    %v4484 = vunpack.c.h.b16 %v3228
    %v4485 = vunpack.c.l.b16 %v3229
    %v4486 = vunpack.c.h.b16 %v3229
    %v4487 = vunpack.c.l.b16 %v3230
    %v4488 = vunpack.c.h.b16 %v3230
    %v4489 = vunpack.c.l.b16 %v3231
    %v4490 = vunpack.c.h.b16 %v3231
    %v4491 = vunpack.c.l.b16 %v3232
    %v4492 = vunpack.c.h.b16 %v3232
    %v4493 = vunpack.c.l.b16 %v3233
    %v4494 = vunpack.c.h.b16 %v3233
    %v4495 = vunpack.c.l.b16 %v3234
    %v4496 = vunpack.c.h.b16 %v3234
    %v4497 = vunpack.c.l.b16 %v3235
    %v4498 = vunpack.c.h.b16 %v3235
    %v4499 = vunpack.c.l.b16 %v3236
    %v4500 = vunpack.c.h.b16 %v3236
    %v4501 = vunpack.c.l.b16 %v3237
    %v4502 = vunpack.c.h.b16 %v3237
    %v4503 = vunpack.c.l.b16 %v3238
    %v4504 = vunpack.c.h.b16 %v3238
    %v4505 = vunpack.c.l.b16 %v3239
    %v4506 = vunpack.c.h.b16 %v3239
    %v4507 = vunpack.c.l.b16 %v3240
    %v4508 = vunpack.c.h.b16 %v3240
    %v4509 = vunpack.c.l.b16 %v3241
    %v4510 = vunpack.c.h.b16 %v3241
    %v4511 = vunpack.c.l.b16 %v3242
    %v4512 = vunpack.c.h.b16 %v3242
    %v4513 = vunpack.c.l.b16 %v3243
    %v4514 = vunpack.c.h.b16 %v3243
    %v4515 = vunpack.c.l.b16 %v3244
    %v4516 = vunpack.c.h.b16 %v3244
    %v4517 = vunpack.c.l.b16 %v3245
    %v4518 = vunpack.c.h.b16 %v3245
    %v4519 = vunpack.c.l.b16 %v3246
    %v4520 = vunpack.c.h.b16 %v3246
    %v4521 = vunpack.c.l.b16 %v3247
    %v4522 = vunpack.c.h.b16 %v3247
    %v4523 = vunpack.c.l.b16 %v3248
    %v4524 = vunpack.c.h.b16 %v3248
    %v4525 = vunpack.c.l.b16 %v3249
    %v4526 = vunpack.c.h.b16 %v3249
    %v4527 = vunpack.c.l.b16 %v3250
    %v4528 = vunpack.c.h.b16 %v3250
    %v4529 = vunpack.c.l.b16 %v3251
    %v4530 = vunpack.c.h.b16 %v3251
    %v4531 = vunpack.c.l.b16 %v3252
    %v4532 = vunpack.c.h.b16 %v3252
    %v4533 = vunpack.c.l.b16 %v3253
    %v4534 = vunpack.c.h.b16 %v3253
    %v4535 = vunpack.c.l.b16 %v3254
    %v4536 = vunpack.c.h.b16 %v3254
    %v4537 = vunpack.c.l.b16 %v3255
    %v4538 = vunpack.c.h.b16 %v3255
    %v4539 = vunpack.c.l.b16 %v3256
    %v4540 = vunpack.c.h.b16 %v3256
    %v4541 = vunpack.c.l.b16 %v3257
    %v4542 = vunpack.c.h.b16 %v3257
    %v4543 = vunpack.c.l.b16 %v3258
    %v4544 = vunpack.c.h.b16 %v3258
    %v4545 = vunpack.c.l.b16 %v3259
    %v4546 = vunpack.c.h.b16 %v3259
    %v4547 = vunpack.c.l.b16 %v3260
    %v4548 = vunpack.c.h.b16 %v3260
    %v4549 = vunpack.c.l.b16 %v3261
    %v4550 = vunpack.c.h.b16 %v3261
    %v4551 = vunpack.c.l.b16 %v3262
    %v4552 = vunpack.c.h.b16 %v3262
    %v4553 = vunpack.c.l.b16 %v3263
    %v4554 = vunpack.c.h.b16 %v3263
    %v4555 = vunpack.c.l.b16 %v3264
    %v4556 = vunpack.c.h.b16 %v3264
    %v4557 = vunpack.c.l.b16 %v3265
    %v4558 = vunpack.c.h.b16 %v3265
    %v4559 = vunpack.c.l.b16 %v3266
    %v4560 = vunpack.c.h.b16 %v3266
    %v4561 = vunpack.c.l.b16 %v3267
    %v4562 = vunpack.c.h.b16 %v3267
    %v4563 = vunpack.c.l.b16 %v3268
    %v4564 = vunpack.c.h.b16 %v3268
    %v4565 = vunpack.c.l.b16 %v3269
    %v4566 = vunpack.c.h.b16 %v3269
    %v4567 = vunpack.c.l.b16 %v3270
    %v4568 = vunpack.c.h.b16 %v3270
    %v4569 = vunpack.c.l.b16 %v3271
    %v4570 = vunpack.c.h.b16 %v3271
    %v4571 = vunpack.c.l.b16 %v3272
    %v4572 = vunpack.c.h.b16 %v3272
    %v4573 = vunpack.c.l.b16 %v3273
    %v4574 = vunpack.c.h.b16 %v3273
    %v4575 = vunpack.c.l.b16 %v3274
    %v4576 = vunpack.c.h.b16 %v3274
    %v4577 = vunpack.c.l.b16 %v3275
    %v4578 = vunpack.c.h.b16 %v3275
    %v4579 = vunpack.c.l.b16 %v3276
    %v4580 = vunpack.c.h.b16 %v3276
    %v4581 = vunpack.c.l.b16 %v3277
    %v4582 = vunpack.c.h.b16 %v3277
    %v4583 = vunpack.c.l.b16 %v3278
    %v4584 = vunpack.c.h.b16 %v3278
    %v4585 = vunpack.c.l.b16 %v3279
    %v4586 = vunpack.c.h.b16 %v3279
    %v4587 = vunpack.c.l.b16 %v3280
    %v4588 = vunpack.c.h.b16 %v3280
    %v4589 = vunpack.c.l.b16 %v3281
    %v4590 = vunpack.c.h.b16 %v3281
    %v4591 = vunpack.c.l.b16 %v3282
    %v4592 = vunpack.c.h.b16 %v3282
    %v4593 = vunpack.c.l.b16 %v3283
    %v4594 = vunpack.c.h.b16 %v3283
    %v4595 = vunpack.c.l.b16 %v3284
    %v4596 = vunpack.c.h.b16 %v3284
    %v4597 = vunpack.c.l.b16 %v3285
    %v4598 = vunpack.c.h.b16 %v3285
    %v4599 = vunpack.c.l.b16 %v3286
    %v4600 = vunpack.c.h.b16 %v3286
    %v4601 = vunpack.c.l.b16 %v3287
    %v4602 = vunpack.c.h.b16 %v3287
    %v4603 = vunpack.c.l.b16 %v3288
    %v4604 = vunpack.c.h.b16 %v3288
    %v4605 = vunpack.c.l.b16 %v3289
    %v4606 = vunpack.c.h.b16 %v3289
    %v4607 = vunpack.c.l.b16 %v3290
    %v4608 = vunpack.c.h.b16 %v3290
    %v4609 = vunpack.c.l.b16 %v3291
    %v4610 = vunpack.c.h.b16 %v3291
    %v4611 = vunpack.c.l.b16 %v3292
    %v4612 = vunpack.c.h.b16 %v3292
    %v4613 = vunpack.c.l.b16 %v3293
    %v4614 = vunpack.c.h.b16 %v3293
    %v4615 = vunpack.c.l.b16 %v3294
    %v4616 = vunpack.c.h.b16 %v3294
    %v4617 = vunpack.c.l.b16 %v3295
    %v4618 = vunpack.c.h.b16 %v3295
    %v4619 = vunpack.c.l.b16 %v3296
    %v4620 = vunpack.c.h.b16 %v3296
    %v4621 = vunpack.c.l.b16 %v3297
    %v4622 = vunpack.c.h.b16 %v3297
    %v4623 = vunpack.c.l.b16 %v3298
    %v4624 = vunpack.c.h.b16 %v3298
    %v4625 = vunpack.c.l.b16 %v3299
    %v4626 = vunpack.c.h.b16 %v3299
    %v4627 = vunpack.c.l.b16 %v3300
    %v4628 = vunpack.c.h.b16 %v3300
    %v4629 = vunpack.c.l.b16 %v3301
    %v4630 = vunpack.c.h.b16 %v3301
    %v4631 = vunpack.c.l.b16 %v3302
    %v4632 = vunpack.c.h.b16 %v3302
    %v4633 = vunpack.c.l.b16 %v3303
    %v4634 = vunpack.c.h.b16 %v3303
    %v4635 = vunpack.c.l.b16 %v3304
    %v4636 = vunpack.c.h.b16 %v3304
    %v4637 = vunpack.c.l.b16 %v3305
    %v4638 = vunpack.c.h.b16 %v3305
    %v4639 = vunpack.c.l.b16 %v3306
    %v4640 = vunpack.c.h.b16 %v3306
    %v4641 = vunpack.c.l.b16 %v3307
    %v4642 = vunpack.c.h.b16 %v3307
    %v4643 = vunpack.c.l.b16 %v3308
    %v4644 = vunpack.c.h.b16 %v3308
    %v4645 = vunpack.c.l.b16 %v3309
    %v4646 = vunpack.c.h.b16 %v3309
    %v4647 = vunpack.c.l.b16 %v3310
    %v4648 = vunpack.c.h.b16 %v3310
    %v4649 = vunpack.c.l.b16 %v3311
    %v4650 = vunpack.c.h.b16 %v3311
    %v4651 = vunpack.c.l.b16 %v3312
    %v4652 = vunpack.c.h.b16 %v3312
    %v4653 = vunpack.c.l.b16 %v3313
    %v4654 = vunpack.c.h.b16 %v3313
    %v4655 = vunpack.c.l.b16 %v3314
    %v4656 = vunpack.c.h.b16 %v3314
    %v4657 = vunpack.c.l.b16 %v3315
    %v4658 = vunpack.c.h.b16 %v3315
    %v4659 = vunpack.c.l.b16 %v3316
    %v4660 = vunpack.c.h.b16 %v3316
    %v4661 = vunpack.c.l.b16 %v3317
    %v4662 = vunpack.c.h.b16 %v3317
    %v4663 = vunpack.c.l.b16 %v3318
    %v4664 = vunpack.c.h.b16 %v3318
    %v4665 = vunpack.c.l.b16 %v3319
    %v4666 = vunpack.c.h.b16 %v3319
    %v4667 = vunpack.c.l.b16 %v3320
    %v4668 = vunpack.c.h.b16 %v3320
    %v4669 = vunpack.c.l.b16 %v3321
    %v4670 = vunpack.c.h.b16 %v3321
    %v4671 = vunpack.c.l.b16 %v3322
    %v4672 = vunpack.c.h.b16 %v3322
    %v4673 = vunpack.c.l.b16 %v3323
    %v4674 = vunpack.c.h.b16 %v3323
    %v4675 = vunpack.c.l.b16 %v3324
    %v4676 = vunpack.c.h.b16 %v3324
    %v4677 = vunpack.c.l.b16 %v3325
    %v4678 = vunpack.c.h.b16 %v3325
    %v4679 = vunpack.c.l.b16 %v3326
    %v4680 = vunpack.c.h.b16 %v3326
    %v4681 = vunpack.c.l.b16 %v3327
    %v4682 = vunpack.c.h.b16 %v3327
    %v4683 = vunpack.c.l.b16 %v3328
    %v4684 = vunpack.c.h.b16 %v3328
    %v4685 = vunpack.c.l.b16 %v3329
    %v4686 = vunpack.c.h.b16 %v3329
    %v4687 = vunpack.c.l.b16 %v3330
    %v4688 = vunpack.c.h.b16 %v3330
    %v4689 = vunpack.c.l.b16 %v3331
    %v4690 = vunpack.c.h.b16 %v3331
    %v4691 = vunpack.c.l.b16 %v3332
    %v4692 = vunpack.c.h.b16 %v3332
    %v4693 = vunpack.c.l.b16 %v3333
    %v4694 = vunpack.c.h.b16 %v3333
    %v4695 = vunpack.c.l.b16 %v3334
    %v4696 = vunpack.c.h.b16 %v3334
    %v4697 = vunpack.c.l.b16 %v3335
    %v4698 = vunpack.c.h.b16 %v3335
    %v4699 = vunpack.c.l.b16 %v3336
    %v4700 = vunpack.c.h.b16 %v3336
    %v4701 = vunpack.c.l.b16 %v3337
    %v4702 = vunpack.c.h.b16 %v3337
    %v4703 = vunpack.c.l.b16 %v3338
    %v4704 = vunpack.c.h.b16 %v3338
    %v4705 = vunpack.c.l.b16 %v3339
    %v4706 = vunpack.c.h.b16 %v3339
    %v4707 = vunpack.c.l.b16 %v3340
    %v4708 = vunpack.c.h.b16 %v3340
    %v4709 = vunpack.c.l.b16 %v3341
    %v4710 = vunpack.c.h.b16 %v3341
    %v4711 = vunpack.c.l.b16 %v3342
    %v4712 = vunpack.c.h.b16 %v3342
    %v4713 = vunpack.c.l.b16 %v3343
    %v4714 = vunpack.c.h.b16 %v3343
    %v4715 = vunpack.c.l.b16 %v3344
    %v4716 = vunpack.c.h.b16 %v3344
    %v4717 = vunpack.c.l.b16 %v3345
    %v4718 = vunpack.c.h.b16 %v3345
    %v4719 = vunpack.c.l.b16 %v3346
    %v4720 = vunpack.c.h.b16 %v3346
    %v4721 = vunpack.c.l.b16 %v3347
    %v4722 = vunpack.c.h.b16 %v3347
    %v4723 = vunpack.c.l.b16 %v3348
    %v4724 = vunpack.c.h.b16 %v3348
    %v4725 = vunpack.c.l.b16 %v3349
    %v4726 = vunpack.c.h.b16 %v3349
    %v4727 = vunpack.c.l.b16 %v3350
    %v4728 = vunpack.c.h.b16 %v3350
    %v4729 = vunpack.c.l.b16 %v3351
    %v4730 = vunpack.c.h.b16 %v3351
    %v4731 = vunpack.c.l.b16 %v3352
    %v4732 = vunpack.c.h.b16 %v3352
    %v4733 = vunpack.c.l.b16 %v3353
    %v4734 = vunpack.c.h.b16 %v3353
    %v4735 = vunpack.c.l.b16 %v3354
    %v4736 = vunpack.c.h.b16 %v3354
    %v4737 = vunpack.c.l.b16 %v3355
    %v4738 = vunpack.c.h.b16 %v3355
    %v4739 = vunpack.c.l.b16 %v3356
    %v4740 = vunpack.c.h.b16 %v3356
    %v4741 = vunpack.c.l.b16 %v3357
    %v4742 = vunpack.c.h.b16 %v3357
    %v4743 = vunpack.c.l.b16 %v3358
    %v4744 = vunpack.c.h.b16 %v3358
    %v4745 = vunpack.c.l.b16 %v3359
    %v4746 = vunpack.c.h.b16 %v3359
    %v4747 = vunpack.c.l.b16 %v3360
    %v4748 = vunpack.c.h.b16 %v3360
    %v4749 = vunpack.c.l.b16 %v3361
    %v4750 = vunpack.c.h.b16 %v3361
    %v4751 = vunpack.c.l.b16 %v3362
    %v4752 = vunpack.c.h.b16 %v3362
    %v4753 = vunpack.c.l.b16 %v3363
    %v4754 = vunpack.c.h.b16 %v3363
    %v4755 = vunpack.c.l.b16 %v3364
    %v4756 = vunpack.c.h.b16 %v3364
    %v4757 = vunpack.c.l.b16 %v3365
    %v4758 = vunpack.c.h.b16 %v3365
    %v4759 = vunpack.c.l.b16 %v3366
    %v4760 = vunpack.c.h.b16 %v3366
    %v4761 = vunpack.c.l.b16 %v3367
    %v4762 = vunpack.c.h.b16 %v3367
    %v4763 = vunpack.c.l.b16 %v3368
    %v4764 = vunpack.c.h.b16 %v3368
    %v4765 = vunpack.c.l.b16 %v3369
    %v4766 = vunpack.c.h.b16 %v3369
    %v4767 = vunpack.c.l.b16 %v3370
    %v4768 = vunpack.c.h.b16 %v3370
    %v4769 = vunpack.c.l.b16 %v3371
    %v4770 = vunpack.c.h.b16 %v3371
    %v4771 = vunpack.c.l.b16 %v3372
    %v4772 = vunpack.c.h.b16 %v3372
    %v4773 = vunpack.c.l.b16 %v3373
    %v4774 = vunpack.c.h.b16 %v3373
    %v4775 = vunpack.c.l.b16 %v3374
    %v4776 = vunpack.c.h.b16 %v3374
    %v4777 = vunpack.c.l.b16 %v3375
    %v4778 = vunpack.c.h.b16 %v3375
    %v4779 = vunpack.c.l.b16 %v3376
    %v4780 = vunpack.c.h.b16 %v3376
    %v4781 = vunpack.c.l.b16 %v3377
    %v4782 = vunpack.c.h.b16 %v3377
    %v4783 = vunpack.c.l.b16 %v3378
    %v4784 = vunpack.c.h.b16 %v3378
    %v4785 = vunpack.c.l.b16 %v3379
    %v4786 = vunpack.c.h.b16 %v3379
    %v4787 = vunpack.c.l.b16 %v3380
    %v4788 = vunpack.c.h.b16 %v3380
    %v4789 = vunpack.c.l.b16 %v3381
    %v4790 = vunpack.c.h.b16 %v3381
    %v4791 = vunpack.c.l.b16 %v3382
    %v4792 = vunpack.c.h.b16 %v3382
    %v4793 = vunpack.c.l.b16 %v3383
    %v4794 = vunpack.c.h.b16 %v3383
    %v4795 = vunpack.c.l.b16 %v3384
    %v4796 = vunpack.c.h.b16 %v3384
    %v4797 = vunpack.c.l.b16 %v3385
    %v4798 = vunpack.c.h.b16 %v3385
    %v4799 = vunpack.c.l.b16 %v3386
    %v4800 = vunpack.c.h.b16 %v3386
    %v4801 = vunpack.c.l.b16 %v3387
    %v4802 = vunpack.c.h.b16 %v3387
    %v4803 = vunpack.c.l.b16 %v3388
    %v4804 = vunpack.c.h.b16 %v3388
    %v4805 = vunpack.c.l.b16 %v3389
    %v4806 = vunpack.c.h.b16 %v3389
    %v4807 = vunpack.c.l.b16 %v3390
    %v4808 = vunpack.c.h.b16 %v3390
    %v4809 = vunpack.c.l.b16 %v3391
    %v4810 = vunpack.c.h.b16 %v3391
    %v4811 = vunpack.c.l.b16 %v3392
    %v4812 = vunpack.c.h.b16 %v3392
    %v4813 = vunpack.c.l.b16 %v3393
    %v4814 = vunpack.c.h.b16 %v3393
    %v4815 = vunpack.c.l.b16 %v3394
    %v4816 = vunpack.c.h.b16 %v3394
    %v4817 = vunpack.c.l.b16 %v3395
    %v4818 = vunpack.c.h.b16 %v3395
    %v4819 = vunpack.c.l.b16 %v3396
    %v4820 = vunpack.c.h.b16 %v3396
    %v4821 = vunpack.c.l.b16 %v3397
    %v4822 = vunpack.c.h.b16 %v3397
    %v4823 = vunpack.c.l.b16 %v3398
    %v4824 = vunpack.c.h.b16 %v3398
    %v4825 = vunpack.c.l.b16 %v3399
    %v4826 = vunpack.c.h.b16 %v3399
    %v4827 = vunpack.c.l.b16 %v3400
    %v4828 = vunpack.c.h.b16 %v3400
    %v4829 = vunpack.c.l.b16 %v3401
    %v4830 = vunpack.c.h.b16 %v3401
    %v4831 = vunpack.c.l.b16 %v3402
    %v4832 = vunpack.c.h.b16 %v3402
    %v4833 = vunpack.c.l.b16 %v3403
    %v4834 = vunpack.c.h.b16 %v3403
    %v4835 = vunpack.c.l.b16 %v3404
    %v4836 = vunpack.c.h.b16 %v3404
    %v4837 = vunpack.c.l.b16 %v3405
    %v4838 = vunpack.c.h.b16 %v3405
    %v4839 = vunpack.c.l.b16 %v3406
    %v4840 = vunpack.c.h.b16 %v3406
    %v4841 = vunpack.c.l.b16 %v3407
    %v4842 = vunpack.c.h.b16 %v3407
    %v4843 = vunpack.c.l.b16 %v3408
    %v4844 = vunpack.c.h.b16 %v3408
    %v4845 = vunpack.c.l.b16 %v3409
    %v4846 = vunpack.c.h.b16 %v3409
    %v4847 = vunpack.c.l.b16 %v3410
    %v4848 = vunpack.c.h.b16 %v3410
    %v4849 = vunpack.c.l.b16 %v3411
    %v4850 = vunpack.c.h.b16 %v3411
    %v4851 = vunpack.c.l.b16 %v3412
    %v4852 = vunpack.c.h.b16 %v3412
    %v4853 = vunpack.c.l.b16 %v3413
    %v4854 = vunpack.c.h.b16 %v3413
    %v4855 = vunpack.c.l.b16 %v3414
    %v4856 = vunpack.c.h.b16 %v3414
    %v4857 = vunpack.c.l.b16 %v3415
    %v4858 = vunpack.c.h.b16 %v3415
    %v4859 = vunpack.c.l.b16 %v3416
    %v4860 = vunpack.c.h.b16 %v3416
    %v4861 = vunpack.c.l.b16 %v3417
    %v4862 = vunpack.c.h.b16 %v3417
    %v4863 = vunpack.c.l.b16 %v3418
    %v4864 = vunpack.c.h.b16 %v3418
    %v4865 = vunpack.c.l.b16 %v3419
    %v4866 = vunpack.c.h.b16 %v3419
    %v4867 = vunpack.c.l.b16 %v3420
    %v4868 = vunpack.c.h.b16 %v3420
    %v4869 = vunpack.c.l.b16 %v3421
    %v4870 = vunpack.c.h.b16 %v3421
    %v4871 = vunpack.c.l.b16 %v3422
    %v4872 = vunpack.c.h.b16 %v3422
    %v4873 = vunpack.c.l.b16 %v3423
    %v4874 = vunpack.c.h.b16 %v3423
    %v4875 = vunpack.c.l.b16 %v3424
    %v4876 = vunpack.c.h.b16 %v3424
    %v4877 = vunpack.c.l.b16 %v3425
    %v4878 = vunpack.c.h.b16 %v3425
    %v4879 = vunpack.c.l.b16 %v3426
    %v4880 = vunpack.c.h.b16 %v3426
    %v4881 = vunpack.c.l.b16 %v3427
    %v4882 = vunpack.c.h.b16 %v3427
    %v4883 = vunpack.c.l.b16 %v3428
    %v4884 = vunpack.c.h.b16 %v3428
    %v4885 = vunpack.c.l.b16 %v3429
    %v4886 = vunpack.c.h.b16 %v3429
    %v4887 = vunpack.c.l.b16 %v3430
    %v4888 = vunpack.c.h.b16 %v3430
    %v4889 = vunpack.c.l.b16 %v3431
    %v4890 = vunpack.c.h.b16 %v3431
    %v4891 = vunpack.c.l.b16 %v3432
    %v4892 = vunpack.c.h.b16 %v3432
    %v4893 = vunpack.c.l.b16 %v3433
    %v4894 = vunpack.c.h.b16 %v3433
    %v4895 = vunpack.c.l.b16 %v3434
    %v4896 = vunpack.c.h.b16 %v3434
    %v4897 = vunpack.c.l.b16 %v3435
    %v4898 = vunpack.c.h.b16 %v3435
    %v4899 = vunpack.c.l.b16 %v3436
    %v4900 = vunpack.c.h.b16 %v3436
    %v4901 = vunpack.c.l.b16 %v3437
    %v4902 = vunpack.c.h.b16 %v3437
    %v4903 = vunpack.c.l.b16 %v3438
    %v4904 = vunpack.c.h.b16 %v3438
    %v4905 = vunpack.c.l.b16 %v3439
    %v4906 = vunpack.c.h.b16 %v3439
    %v4907 = vunpack.c.l.b16 %v3440
    %v4908 = vunpack.c.h.b16 %v3440
    %v4909 = vunpack.c.l.b16 %v3441
    %v4910 = vunpack.c.h.b16 %v3441
    %v4911 = vunpack.c.l.b16 %v3442
    %v4912 = vunpack.c.h.b16 %v3442
    %v4913 = vunpack.c.l.b16 %v3443
    %v4914 = vunpack.c.h.b16 %v3443
    %v4915 = vunpack.c.l.b16 %v3444
    %v4916 = vunpack.c.h.b16 %v3444
    %v4917 = vunpack.c.l.b16 %v3445
    %v4918 = vunpack.c.h.b16 %v3445
    %v4919 = vunpack.c.l.b16 %v3446
    %v4920 = vunpack.c.h.b16 %v3446
    %v4921 = vunpack.c.l.b16 %v3447
    %v4922 = vunpack.c.h.b16 %v3447
    %v4923 = vunpack.c.l.b16 %v3448
    %v4924 = vunpack.c.h.b16 %v3448
    %v4925 = vunpack.c.l.b16 %v3449
    %v4926 = vunpack.c.h.b16 %v3449
    %v4927 = vunpack.c.l.b16 %v3450
    %v4928 = vunpack.c.h.b16 %v3450
    %v4929 = vunpack.c.l.b16 %v3451
    %v4930 = vunpack.c.h.b16 %v3451
    %v4931 = vunpack.c.l.b16 %v3452
    %v4932 = vunpack.c.h.b16 %v3452
    %v4933 = vunpack.c.l.b16 %v3453
    %v4934 = vunpack.c.h.b16 %v3453
    %v4935 = vunpack.c.l.b16 %v3454
    %v4936 = vunpack.c.h.b16 %v3454
    %v4937 = vunpack.c.l.b16 %v3455
    %v4938 = vunpack.c.h.b16 %v3455
    %v4939 = vunpack.c.l.b16 %v3456
    %v4940 = vunpack.c.h.b16 %v3456
    %v4941 = vunpack.c.l.b16 %v3457
    %v4942 = vunpack.c.h.b16 %v3457
    %v4943 = vunpack.c.l.b16 %v3458
    %v4944 = vunpack.c.h.b16 %v3458
    %v4945 = vunpack.c.l.b16 %v3459
    %v4946 = vunpack.c.h.b16 %v3459
    %v4947 = vunpack.c.l.b16 %v3460
    %v4948 = vunpack.c.h.b16 %v3460
    %v4949 = vunpack.c.l.b16 %v3461
    %v4950 = vunpack.c.h.b16 %v3461
    %v4951 = vunpack.c.l.b16 %v3462
    %v4952 = vunpack.c.h.b16 %v3462
    %v4953 = vunpack.c.l.b16 %v3463
    %v4954 = vunpack.c.h.b16 %v3463
    %v4955 = vunpack.c.l.b16 %v3464
    %v4956 = vunpack.c.h.b16 %v3464
    %v4957 = vunpack.c.l.b16 %v3465
    %v4958 = vunpack.c.h.b16 %v3465
    %v4959 = vunpack.c.l.b16 %v3466
    %v4960 = vunpack.c.h.b16 %v3466
    %v4961 = vunpack.c.l.b16 %v3467
    %v4962 = vunpack.c.h.b16 %v3467
    %v4963 = vunpack.c.l.b16 %v3468
    %v4964 = vunpack.c.h.b16 %v3468
    %v4965 = vunpack.c.l.b16 %v3469
    %v4966 = vunpack.c.h.b16 %v3469
    %v4967 = vunpack.c.l.b16 %v3470
    %v4968 = vunpack.c.h.b16 %v3470
    %v4969 = vunpack.c.l.b16 %v3471
    %v4970 = vunpack.c.h.b16 %v3471
    %v4971 = vunpack.c.l.b16 %v3472
    %v4972 = vunpack.c.h.b16 %v3472
    %v4973 = vunpack.c.l.b16 %v3473
    %v4974 = vunpack.c.h.b16 %v3473
    %v4975 = vunpack.c.l.b16 %v3474
    %v4976 = vunpack.c.h.b16 %v3474
    %v4977 = vunpack.c.l.b16 %v3475
    %v4978 = vunpack.c.h.b16 %v3475
    %v4979 = vunpack.c.l.b16 %v3476
    %v4980 = vunpack.c.h.b16 %v3476
    %v4981 = vunpack.c.l.b16 %v3477
    %v4982 = vunpack.c.h.b16 %v3477
    %v4983 = vunpack.c.l.b16 %v3478
    %v4984 = vunpack.c.h.b16 %v3478
    %v4985 = vunpack.c.l.b16 %v3479
    %v4986 = vunpack.c.h.b16 %v3479
    %v4987 = vunpack.c.l.b16 %v3480
    %v4988 = vunpack.c.h.b16 %v3480
    %v4989 = vunpack.c.l.b16 %v3481
    %v4990 = vunpack.c.h.b16 %v3481
    %v4991 = vunpack.c.l.b16 %v3482
    %v4992 = vunpack.c.h.b16 %v3482
    %v4993 = vunpack.c.l.b16 %v3483
    %v4994 = vunpack.c.h.b16 %v3483
    %v4995 = vunpack.c.l.b16 %v3484
    %v4996 = vunpack.c.h.b16 %v3484
    %v4997 = vunpack.c.l.b16 %v3485
    %v4998 = vunpack.c.h.b16 %v3485
    %v4999 = vunpack.c.l.b16 %v3486
    %v5000 = vunpack.c.h.b16 %v3486
    %v5001 = vunpack.c.l.b16 %v3487
    %v5002 = vunpack.c.h.b16 %v3487
    %v5003 = vunpack.c.l.b16 %v3488
    %v5004 = vunpack.c.h.b16 %v3488
    %v5005 = vunpack.c.l.b16 %v3489
    %v5006 = vunpack.c.h.b16 %v3489
    %v5007 = vunpack.c.l.b16 %v3490
    %v5008 = vunpack.c.h.b16 %v3490
    %v5009 = vunpack.c.l.b16 %v3491
    %v5010 = vunpack.c.h.b16 %v3491
    %v5011 = vunpack.c.l.b16 %v3492
    %v5012 = vunpack.c.h.b16 %v3492
    %v5013 = vunpack.c.l.b16 %v3493
    %v5014 = vunpack.c.h.b16 %v3493
    %v5015 = vunpack.c.l.b16 %v3494
    %v5016 = vunpack.c.h.b16 %v3494
    %v5017 = vunpack.c.l.b16 %v3495
    %v5018 = vunpack.c.h.b16 %v3495
    %v5019 = vunpack.c.l.b16 %v3496
    %v5020 = vunpack.c.h.b16 %v3496
    %v5021 = vunpack.c.l.b16 %v3497
    %v5022 = vunpack.c.h.b16 %v3497
    %v5023 = vunpack.c.l.b16 %v3498
    %v5024 = vunpack.c.h.b16 %v3498
    %v5025 = vunpack.c.l.b16 %v3499
    %v5026 = vunpack.c.h.b16 %v3499
    %v5027 = vunpack.c.l.b16 %v3500
    %v5028 = vunpack.c.h.b16 %v3500
    %v5029 = vunpack.c.l.b16 %v3501
    %v5030 = vunpack.c.h.b16 %v3501
    %v5031 = vunpack.c.l.b16 %v3502
    %v5032 = vunpack.c.h.b16 %v3502
    %v5033 = vunpack.c.l.b16 %v3503
    %v5034 = vunpack.c.h.b16 %v3503
    %v5035 = vunpack.c.l.b16 %v3504
    %v5036 = vunpack.c.h.b16 %v3504
    %v5037 = vunpack.c.l.b16 %v3505
    %v5038 = vunpack.c.h.b16 %v3505
    %v5039 = vunpack.c.l.b16 %v3506
    %v5040 = vunpack.c.h.b16 %v3506
    %v5041 = vunpack.c.l.b16 %v3507
    %v5042 = vunpack.c.h.b16 %v3507
    %v5043 = vunpack.c.l.b16 %v3508
    %v5044 = vunpack.c.h.b16 %v3508
    %v5045 = vunpack.c.l.b16 %v3509
    %v5046 = vunpack.c.h.b16 %v3509
    %v5047 = vunpack.c.l.b16 %v3510
    %v5048 = vunpack.c.h.b16 %v3510
    %v5049 = vunpack.c.l.b16 %v3511
    %v5050 = vunpack.c.h.b16 %v3511
    %v5051 = vunpack.c.l.b16 %v3512
    %v5052 = vunpack.c.h.b16 %v3512
    %v5053 = vunpack.c.l.b16 %v3513
    %v5054 = vunpack.c.h.b16 %v3513
    %v5055 = vunpack.c.l.b16 %v3514
    %v5056 = vunpack.c.h.b16 %v3514
    %v5057 = vunpack.c.l.b16 %v3515
    %v5058 = vunpack.c.h.b16 %v3515
    %v5059 = vunpack.c.l.b16 %v3516
    %v5060 = vunpack.c.h.b16 %v3516
    %v5061 = vunpack.c.l.b16 %v3517
    %v5062 = vunpack.c.h.b16 %v3517
    %v5063 = vunpack.c.l.b16 %v3518
    %v5064 = vunpack.c.h.b16 %v3518
    %v5065 = vunpack.c.l.b16 %v3519
    %v5066 = vunpack.c.h.b16 %v3519
    %v5067 = vunpack.c.l.b16 %v3520
    %v5068 = vunpack.c.h.b16 %v3520
    %v5069 = vunpack.c.l.b16 %v3521
    %v5070 = vunpack.c.h.b16 %v3521
    %v5071 = vunpack.c.l.b16 %v3522
    %v5072 = vunpack.c.h.b16 %v3522
    %v5073 = vunpack.c.l.b16 %v3523
    %v5074 = vunpack.c.h.b16 %v3523
    %v5075 = vunpack.c.l.b16 %v3524
    %v5076 = vunpack.c.h.b16 %v3524
    %v5077 = vunpack.c.l.b16 %v3525
    %v5078 = vunpack.c.h.b16 %v3525
    %v5079 = vunpack.c.l.b16 %v3526
    %v5080 = vunpack.c.h.b16 %v3526
    %v5081 = vunpack.c.l.b16 %v3527
    %v5082 = vunpack.c.h.b16 %v3527
    %v5083 = vunpack.c.l.b16 %v3528
    %v5084 = vunpack.c.h.b16 %v3528
    %v5085 = vunpack.c.l.b16 %v3529
    %v5086 = vunpack.c.h.b16 %v3529
    %v5087 = vunpack.c.l.b16 %v3530
    %v5088 = vunpack.c.h.b16 %v3530
    %v5089 = vunpack.c.l.b16 %v3531
    %v5090 = vunpack.c.h.b16 %v3531
    %v5091 = vunpack.c.l.b16 %v3532
    %v5092 = vunpack.c.h.b16 %v3532
    %v5093 = vunpack.c.l.b16 %v3533
    %v5094 = vunpack.c.h.b16 %v3533
    %v5095 = vunpack.c.l.b16 %v3534
    %v5096 = vunpack.c.h.b16 %v3534
    %v5097 = vunpack.c.l.b16 %v3535
    %v5098 = vunpack.c.h.b16 %v3535
    %v5099 = vunpack.c.l.b16 %v3536
    %v5100 = vunpack.c.h.b16 %v3536
    %v5101 = vunpack.c.l.b16 %v3537
    %v5102 = vunpack.c.h.b16 %v3537
    %v5103 = vunpack.c.l.b16 %v3538
    %v5104 = vunpack.c.h.b16 %v3538
    %v5105 = vunpack.c.l.b16 %v3539
    %v5106 = vunpack.c.h.b16 %v3539
    %v5107 = vunpack.c.l.b16 %v3540
    %v5108 = vunpack.c.h.b16 %v3540
    %v5109 = vunpack.c.l.b16 %v3541
    %v5110 = vunpack.c.h.b16 %v3541
    %v5111 = vunpack.c.l.b16 %v3542
    %v5112 = vunpack.c.h.b16 %v3542
    %v5113 = vunpack.c.l.b16 %v3543
    %v5114 = vunpack.c.h.b16 %v3543
    %v5115 = vunpack.c.l.b16 %v3544
    %v5116 = vunpack.c.h.b16 %v3544
    %v5117 = vunpack.c.l.b16 %v3545
    %v5118 = vunpack.c.h.b16 %v3545
    %v5119 = vunpack.c.l.b16 %v3546
    %v5120 = vunpack.c.h.b16 %v3546
    %v5121 = vunpack.c.l.b16 %v3547
    %v5122 = vunpack.c.h.b16 %v3547
    %v5123 = vunpack.c.l.b16 %v3548
    %v5124 = vunpack.c.h.b16 %v3548
    %v5125 = vunpack.c.l.b16 %v3549
    %v5126 = vunpack.c.h.b16 %v3549
    %v5127 = vunpack.c.l.b16 %v3550
    %v5128 = vunpack.c.h.b16 %v3550
    %v5129 = vpack.c.b16 %v4113, %v4105
    %v5130 = vpack.c.b16 %v4114, %v4106
    %v5131 = vpack.c.b16 %v4115, %v4107
    %v5132 = vpack.c.b16 %v4116, %v4108
    %v5133 = vpack.c.b16 %v4117, %v4109
    %v5134 = vpack.c.b16 %v4118, %v4110
    %v5135 = vpack.c.b16 %v4119, %v4111
    %v5136 = vpack.c.b16 %v4120, %v4112
    %v5137 = vpack.c.b16 %v4129, %v4121
    %v5138 = vpack.c.b16 %v4130, %v4122
    %v5139 = vpack.c.b16 %v4131, %v4123
    %v5140 = vpack.c.b16 %v4132, %v4124
    %v5141 = vpack.c.b16 %v4133, %v4125
    %v5142 = vpack.c.b16 %v4134, %v4126
    %v5143 = vpack.c.b16 %v4135, %v4127
    %v5144 = vpack.c.b16 %v4136, %v4128
    %v5145 = vpack.c.b16 %v4145, %v4137
    %v5146 = vpack.c.b16 %v4146, %v4138
    %v5147 = vpack.c.b16 %v4147, %v4139
    %v5148 = vpack.c.b16 %v4148, %v4140
    %v5149 = vpack.c.b16 %v4149, %v4141
    %v5150 = vpack.c.b16 %v4150, %v4142
    %v5151 = vpack.c.b16 %v4151, %v4143
    %v5152 = vpack.c.b16 %v4152, %v4144
    %v5153 = vpack.c.b16 %v4161, %v4153
    %v5154 = vpack.c.b16 %v4162, %v4154
    %v5155 = vpack.c.b16 %v4163, %v4155
    %v5156 = vpack.c.b16 %v4164, %v4156
    %v5157 = vpack.c.b16 %v4165, %v4157
    %v5158 = vpack.c.b16 %v4166, %v4158
    %v5159 = vpack.c.b16 %v4167, %v4159
    %v5160 = vpack.c.b16 %v4168, %v4160
    %v5161 = vpack.c.b16 %v4177, %v4169
    %v5162 = vpack.c.b16 %v4178, %v4170
    %v5163 = vpack.c.b16 %v4179, %v4171
    %v5164 = vpack.c.b16 %v4180, %v4172
    %v5165 = vpack.c.b16 %v4181, %v4173
    %v5166 = vpack.c.b16 %v4182, %v4174
    %v5167 = vpack.c.b16 %v4183, %v4175
    %v5168 = vpack.c.b16 %v4184, %v4176
    %v5169 = vpack.c.b16 %v4193, %v4185
    %v5170 = vpack.c.b16 %v4194, %v4186
    %v5171 = vpack.c.b16 %v4195, %v4187
    %v5172 = vpack.c.b16 %v4196, %v4188
    %v5173 = vpack.c.b16 %v4197, %v4189
    %v5174 = vpack.c.b16 %v4198, %v4190
    %v5175 = vpack.c.b16 %v4199, %v4191
    %v5176 = vpack.c.b16 %v4200, %v4192
    %v5177 = vpack.c.b16 %v4209, %v4201
    %v5178 = vpack.c.b16 %v4210, %v4202
    %v5179 = vpack.c.b16 %v4211, %v4203
    %v5180 = vpack.c.b16 %v4212, %v4204
    %v5181 = vpack.c.b16 %v4213, %v4205
    %v5182 = vpack.c.b16 %v4214, %v4206
    %v5183 = vpack.c.b16 %v4215, %v4207
    %v5184 = vpack.c.b16 %v4216, %v4208
    %v5185 = vpack.c.b16 %v4225, %v4217
    %v5186 = vpack.c.b16 %v4226, %v4218
    %v5187 = vpack.c.b16 %v4227, %v4219
    %v5188 = vpack.c.b16 %v4228, %v4220
    %v5189 = vpack.c.b16 %v4229, %v4221
    %v5190 = vpack.c.b16 %v4230, %v4222
    %v5191 = vpack.c.b16 %v4231, %v4223
    %v5192 = vpack.c.b16 %v4232, %v4224
    %v5193 = vpack.c.b16 %v4241, %v4233
    %v5194 = vpack.c.b16 %v4242, %v4234
    %v5195 = vpack.c.b16 %v4243, %v4235
    %v5196 = vpack.c.b16 %v4244, %v4236
    %v5197 = vpack.c.b16 %v4245, %v4237
    %v5198 = vpack.c.b16 %v4246, %v4238
    %v5199 = vpack.c.b16 %v4247, %v4239
    %v5200 = vpack.c.b16 %v4248, %v4240
    %v5201 = vpack.c.b16 %v4257, %v4249
    %v5202 = vpack.c.b16 %v4258, %v4250
    %v5203 = vpack.c.b16 %v4259, %v4251
    %v5204 = vpack.c.b16 %v4260, %v4252
    %v5205 = vpack.c.b16 %v4261, %v4253
    %v5206 = vpack.c.b16 %v4262, %v4254
    %v5207 = vpack.c.b16 %v4263, %v4255
    %v5208 = vpack.c.b16 %v4264, %v4256
    %v5209 = vpack.c.b16 %v4273, %v4265
    %v5210 = vpack.c.b16 %v4274, %v4266
    %v5211 = vpack.c.b16 %v4275, %v4267
    %v5212 = vpack.c.b16 %v4276, %v4268
    %v5213 = vpack.c.b16 %v4277, %v4269
    %v5214 = vpack.c.b16 %v4278, %v4270
    %v5215 = vpack.c.b16 %v4279, %v4271
    %v5216 = vpack.c.b16 %v4280, %v4272
    %v5217 = vpack.c.b16 %v4289, %v4281
    %v5218 = vpack.c.b16 %v4290, %v4282
    %v5219 = vpack.c.b16 %v4291, %v4283
    %v5220 = vpack.c.b16 %v4292, %v4284
    %v5221 = vpack.c.b16 %v4293, %v4285
    %v5222 = vpack.c.b16 %v4294, %v4286
    %v5223 = vpack.c.b16 %v4295, %v4287
    %v5224 = vpack.c.b16 %v4296, %v4288
    %v5225 = vpack.c.b16 %v4305, %v4297
    %v5226 = vpack.c.b16 %v4306, %v4298
    %v5227 = vpack.c.b16 %v4307, %v4299
    %v5228 = vpack.c.b16 %v4308, %v4300
    %v5229 = vpack.c.b16 %v4309, %v4301
    %v5230 = vpack.c.b16 %v4310, %v4302
    %v5231 = vpack.c.b16 %v4311, %v4303
    %v5232 = vpack.c.b16 %v4312, %v4304
    %v5233 = vpack.c.b16 %v4321, %v4313
    %v5234 = vpack.c.b16 %v4322, %v4314
    %v5235 = vpack.c.b16 %v4323, %v4315
    %v5236 = vpack.c.b16 %v4324, %v4316
    %v5237 = vpack.c.b16 %v4325, %v4317
    %v5238 = vpack.c.b16 %v4326, %v4318
    %v5239 = vpack.c.b16 %v4327, %v4319
    %v5240 = vpack.c.b16 %v4328, %v4320
    %v5241 = vpack.c.b16 %v4337, %v4329
    %v5242 = vpack.c.b16 %v4338, %v4330
    %v5243 = vpack.c.b16 %v4339, %v4331
    %v5244 = vpack.c.b16 %v4340, %v4332
    %v5245 = vpack.c.b16 %v4341, %v4333
    %v5246 = vpack.c.b16 %v4342, %v4334
    %v5247 = vpack.c.b16 %v4343, %v4335
    %v5248 = vpack.c.b16 %v4344, %v4336
    %v5249 = vpack.c.b16 %v4353, %v4345
    %v5250 = vpack.c.b16 %v4354, %v4346
    %v5251 = vpack.c.b16 %v4355, %v4347
    %v5252 = vpack.c.b16 %v4356, %v4348
    %v5253 = vpack.c.b16 %v4357, %v4349
    %v5254 = vpack.c.b16 %v4358, %v4350
    %v5255 = vpack.c.b16 %v4359, %v4351
    %v5256 = vpack.c.b16 %v4360, %v4352
    %v5257 = vpack.c.b16 %v4369, %v4361
    %v5258 = vpack.c.b16 %v4370, %v4362
    %v5259 = vpack.c.b16 %v4371, %v4363
    %v5260 = vpack.c.b16 %v4372, %v4364
    %v5261 = vpack.c.b16 %v4373, %v4365
    %v5262 = vpack.c.b16 %v4374, %v4366
    %v5263 = vpack.c.b16 %v4375, %v4367
    %v5264 = vpack.c.b16 %v4376, %v4368
    %v5265 = vpack.c.b16 %v4385, %v4377
    %v5266 = vpack.c.b16 %v4386, %v4378
    %v5267 = vpack.c.b16 %v4387, %v4379
    %v5268 = vpack.c.b16 %v4388, %v4380
    %v5269 = vpack.c.b16 %v4389, %v4381
    %v5270 = vpack.c.b16 %v4390, %v4382
    %v5271 = vpack.c.b16 %v4391, %v4383
    %v5272 = vpack.c.b16 %v4392, %v4384
    %v5273 = vpack.c.b16 %v4401, %v4393
    %v5274 = vpack.c.b16 %v4402, %v4394
    %v5275 = vpack.c.b16 %v4403, %v4395
    %v5276 = vpack.c.b16 %v4404, %v4396
    %v5277 = vpack.c.b16 %v4405, %v4397
    %v5278 = vpack.c.b16 %v4406, %v4398
    %v5279 = vpack.c.b16 %v4407, %v4399
    %v5280 = vpack.c.b16 %v4408, %v4400
    %v5281 = vpack.c.b16 %v4417, %v4409
    %v5282 = vpack.c.b16 %v4418, %v4410
    %v5283 = vpack.c.b16 %v4419, %v4411
    %v5284 = vpack.c.b16 %v4420, %v4412
    %v5285 = vpack.c.b16 %v4421, %v4413
    %v5286 = vpack.c.b16 %v4422, %v4414
    %v5287 = vpack.c.b16 %v4423, %v4415
    %v5288 = vpack.c.b16 %v4424, %v4416
    %v5289 = vpack.c.b16 %v4433, %v4425
    %v5290 = vpack.c.b16 %v4434, %v4426
    %v5291 = vpack.c.b16 %v4435, %v4427
    %v5292 = vpack.c.b16 %v4436, %v4428
    %v5293 = vpack.c.b16 %v4437, %v4429
    %v5294 = vpack.c.b16 %v4438, %v4430
    %v5295 = vpack.c.b16 %v4439, %v4431
    %v5296 = vpack.c.b16 %v4440, %v4432
    %v5297 = vpack.c.b16 %v4449, %v4441
    %v5298 = vpack.c.b16 %v4450, %v4442
    %v5299 = vpack.c.b16 %v4451, %v4443
    %v5300 = vpack.c.b16 %v4452, %v4444
    %v5301 = vpack.c.b16 %v4453, %v4445
    %v5302 = vpack.c.b16 %v4454, %v4446
    %v5303 = vpack.c.b16 %v4455, %v4447
    %v5304 = vpack.c.b16 %v4456, %v4448
    %v5305 = vpack.c.b16 %v4465, %v4457
    %v5306 = vpack.c.b16 %v4466, %v4458
    %v5307 = vpack.c.b16 %v4467, %v4459
    %v5308 = vpack.c.b16 %v4468, %v4460
    %v5309 = vpack.c.b16 %v4469, %v4461
    %v5310 = vpack.c.b16 %v4470, %v4462
    %v5311 = vpack.c.b16 %v4471, %v4463
    %v5312 = vpack.c.b16 %v4472, %v4464
    %v5313 = vpack.c.b16 %v4481, %v4473
    %v5314 = vpack.c.b16 %v4482, %v4474
    %v5315 = vpack.c.b16 %v4483, %v4475
    %v5316 = vpack.c.b16 %v4484, %v4476
    %v5317 = vpack.c.b16 %v4485, %v4477
    %v5318 = vpack.c.b16 %v4486, %v4478
    %v5319 = vpack.c.b16 %v4487, %v4479
    %v5320 = vpack.c.b16 %v4488, %v4480
    %v5321 = vpack.c.b16 %v4497, %v4489
    %v5322 = vpack.c.b16 %v4498, %v4490
    %v5323 = vpack.c.b16 %v4499, %v4491
    %v5324 = vpack.c.b16 %v4500, %v4492
    %v5325 = vpack.c.b16 %v4501, %v4493
    %v5326 = vpack.c.b16 %v4502, %v4494
    %v5327 = vpack.c.b16 %v4503, %v4495
    %v5328 = vpack.c.b16 %v4504, %v4496
    %v5329 = vpack.c.b16 %v4513, %v4505
    %v5330 = vpack.c.b16 %v4514, %v4506
    %v5331 = vpack.c.b16 %v4515, %v4507
    %v5332 = vpack.c.b16 %v4516, %v4508
    %v5333 = vpack.c.b16 %v4517, %v4509
    %v5334 = vpack.c.b16 %v4518, %v4510
    %v5335 = vpack.c.b16 %v4519, %v4511
    %v5336 = vpack.c.b16 %v4520, %v4512
    %v5337 = vpack.c.b16 %v4529, %v4521
    %v5338 = vpack.c.b16 %v4530, %v4522
    %v5339 = vpack.c.b16 %v4531, %v4523
    %v5340 = vpack.c.b16 %v4532, %v4524
    %v5341 = vpack.c.b16 %v4533, %v4525
    %v5342 = vpack.c.b16 %v4534, %v4526
    %v5343 = vpack.c.b16 %v4535, %v4527
    %v5344 = vpack.c.b16 %v4536, %v4528
    %v5345 = vpack.c.b16 %v4545, %v4537
    %v5346 = vpack.c.b16 %v4546, %v4538
    %v5347 = vpack.c.b16 %v4547, %v4539
    %v5348 = vpack.c.b16 %v4548, %v4540
    %v5349 = vpack.c.b16 %v4549, %v4541
    %v5350 = vpack.c.b16 %v4550, %v4542
    %v5351 = vpack.c.b16 %v4551, %v4543
    %v5352 = vpack.c.b16 %v4552, %v4544
    %v5353 = vpack.c.b16 %v4561, %v4553
    %v5354 = vpack.c.b16 %v4562, %v4554
    %v5355 = vpack.c.b16 %v4563, %v4555
    %v5356 = vpack.c.b16 %v4564, %v4556
    %v5357 = vpack.c.b16 %v4565, %v4557
    %v5358 = vpack.c.b16 %v4566, %v4558
    %v5359 = vpack.c.b16 %v4567, %v4559
    %v5360 = vpack.c.b16 %v4568, %v4560
    %v5361 = vpack.c.b16 %v4577, %v4569
    %v5362 = vpack.c.b16 %v4578, %v4570
    %v5363 = vpack.c.b16 %v4579, %v4571
    %v5364 = vpack.c.b16 %v4580, %v4572
    %v5365 = vpack.c.b16 %v4581, %v4573
    %v5366 = vpack.c.b16 %v4582, %v4574
    %v5367 = vpack.c.b16 %v4583, %v4575
    %v5368 = vpack.c.b16 %v4584, %v4576
    %v5369 = vpack.c.b16 %v4593, %v4585
    %v5370 = vpack.c.b16 %v4594, %v4586
    %v5371 = vpack.c.b16 %v4595, %v4587
    %v5372 = vpack.c.b16 %v4596, %v4588
    %v5373 = vpack.c.b16 %v4597, %v4589
    %v5374 = vpack.c.b16 %v4598, %v4590
    %v5375 = vpack.c.b16 %v4599, %v4591
    %v5376 = vpack.c.b16 %v4600, %v4592
    %v5377 = vpack.c.b16 %v4609, %v4601
    %v5378 = vpack.c.b16 %v4610, %v4602
    %v5379 = vpack.c.b16 %v4611, %v4603
    %v5380 = vpack.c.b16 %v4612, %v4604
    %v5381 = vpack.c.b16 %v4613, %v4605
    %v5382 = vpack.c.b16 %v4614, %v4606
    %v5383 = vpack.c.b16 %v4615, %v4607
    %v5384 = vpack.c.b16 %v4616, %v4608
    %v5385 = vpack.c.b16 %v4625, %v4617
    %v5386 = vpack.c.b16 %v4626, %v4618
    %v5387 = vpack.c.b16 %v4627, %v4619
    %v5388 = vpack.c.b16 %v4628, %v4620
    %v5389 = vpack.c.b16 %v4629, %v4621
    %v5390 = vpack.c.b16 %v4630, %v4622
    %v5391 = vpack.c.b16 %v4631, %v4623
    %v5392 = vpack.c.b16 %v4632, %v4624
    %v5393 = vpack.c.b16 %v4641, %v4633
    %v5394 = vpack.c.b16 %v4642, %v4634
    %v5395 = vpack.c.b16 %v4643, %v4635
    %v5396 = vpack.c.b16 %v4644, %v4636
    %v5397 = vpack.c.b16 %v4645, %v4637
    %v5398 = vpack.c.b16 %v4646, %v4638
    %v5399 = vpack.c.b16 %v4647, %v4639
    %v5400 = vpack.c.b16 %v4648, %v4640
    %v5401 = vpack.c.b16 %v4657, %v4649
    %v5402 = vpack.c.b16 %v4658, %v4650
    %v5403 = vpack.c.b16 %v4659, %v4651
    %v5404 = vpack.c.b16 %v4660, %v4652
    %v5405 = vpack.c.b16 %v4661, %v4653
    %v5406 = vpack.c.b16 %v4662, %v4654
    %v5407 = vpack.c.b16 %v4663, %v4655
    %v5408 = vpack.c.b16 %v4664, %v4656
    %v5409 = vpack.c.b16 %v4673, %v4665
    %v5410 = vpack.c.b16 %v4674, %v4666
    %v5411 = vpack.c.b16 %v4675, %v4667
    %v5412 = vpack.c.b16 %v4676, %v4668
    %v5413 = vpack.c.b16 %v4677, %v4669
    %v5414 = vpack.c.b16 %v4678, %v4670
    %v5415 = vpack.c.b16 %v4679, %v4671
    %v5416 = vpack.c.b16 %v4680, %v4672
    %v5417 = vpack.c.b16 %v4689, %v4681
    %v5418 = vpack.c.b16 %v4690, %v4682
    %v5419 = vpack.c.b16 %v4691, %v4683
    %v5420 = vpack.c.b16 %v4692, %v4684
    %v5421 = vpack.c.b16 %v4693, %v4685
    %v5422 = vpack.c.b16 %v4694, %v4686
    %v5423 = vpack.c.b16 %v4695, %v4687
    %v5424 = vpack.c.b16 %v4696, %v4688
    %v5425 = vpack.c.b16 %v4705, %v4697
    %v5426 = vpack.c.b16 %v4706, %v4698
    %v5427 = vpack.c.b16 %v4707, %v4699
    %v5428 = vpack.c.b16 %v4708, %v4700
    %v5429 = vpack.c.b16 %v4709, %v4701
    %v5430 = vpack.c.b16 %v4710, %v4702
    %v5431 = vpack.c.b16 %v4711, %v4703
    %v5432 = vpack.c.b16 %v4712, %v4704
    %v5433 = vpack.c.b16 %v4721, %v4713
    %v5434 = vpack.c.b16 %v4722, %v4714
    %v5435 = vpack.c.b16 %v4723, %v4715
    %v5436 = vpack.c.b16 %v4724, %v4716
    %v5437 = vpack.c.b16 %v4725, %v4717
    %v5438 = vpack.c.b16 %v4726, %v4718
    %v5439 = vpack.c.b16 %v4727, %v4719
    %v5440 = vpack.c.b16 %v4728, %v4720
    %v5441 = vpack.c.b16 %v4737, %v4729
    %v5442 = vpack.c.b16 %v4738, %v4730
    %v5443 = vpack.c.b16 %v4739, %v4731
    %v5444 = vpack.c.b16 %v4740, %v4732
    %v5445 = vpack.c.b16 %v4741, %v4733
    %v5446 = vpack.c.b16 %v4742, %v4734
    %v5447 = vpack.c.b16 %v4743, %v4735
    %v5448 = vpack.c.b16 %v4744, %v4736
    %v5449 = vpack.c.b16 %v4753, %v4745
    %v5450 = vpack.c.b16 %v4754, %v4746
    %v5451 = vpack.c.b16 %v4755, %v4747
    %v5452 = vpack.c.b16 %v4756, %v4748
    %v5453 = vpack.c.b16 %v4757, %v4749
    %v5454 = vpack.c.b16 %v4758, %v4750
    %v5455 = vpack.c.b16 %v4759, %v4751
    %v5456 = vpack.c.b16 %v4760, %v4752
    %v5457 = vpack.c.b16 %v4769, %v4761
    %v5458 = vpack.c.b16 %v4770, %v4762
    %v5459 = vpack.c.b16 %v4771, %v4763
    %v5460 = vpack.c.b16 %v4772, %v4764
    %v5461 = vpack.c.b16 %v4773, %v4765
    %v5462 = vpack.c.b16 %v4774, %v4766
    %v5463 = vpack.c.b16 %v4775, %v4767
    %v5464 = vpack.c.b16 %v4776, %v4768
    %v5465 = vpack.c.b16 %v4785, %v4777
    %v5466 = vpack.c.b16 %v4786, %v4778
    %v5467 = vpack.c.b16 %v4787, %v4779
    %v5468 = vpack.c.b16 %v4788, %v4780
    %v5469 = vpack.c.b16 %v4789, %v4781
    %v5470 = vpack.c.b16 %v4790, %v4782
    %v5471 = vpack.c.b16 %v4791, %v4783
    %v5472 = vpack.c.b16 %v4792, %v4784
    %v5473 = vpack.c.b16 %v4801, %v4793
    %v5474 = vpack.c.b16 %v4802, %v4794
    %v5475 = vpack.c.b16 %v4803, %v4795
    %v5476 = vpack.c.b16 %v4804, %v4796
    %v5477 = vpack.c.b16 %v4805, %v4797
    %v5478 = vpack.c.b16 %v4806, %v4798
    %v5479 = vpack.c.b16 %v4807, %v4799
    %v5480 = vpack.c.b16 %v4808, %v4800
    %v5481 = vpack.c.b16 %v4817, %v4809
    %v5482 = vpack.c.b16 %v4818, %v4810
    %v5483 = vpack.c.b16 %v4819, %v4811
    %v5484 = vpack.c.b16 %v4820, %v4812
    %v5485 = vpack.c.b16 %v4821, %v4813
    %v5486 = vpack.c.b16 %v4822, %v4814
    %v5487 = vpack.c.b16 %v4823, %v4815
    %v5488 = vpack.c.b16 %v4824, %v4816
    %v5489 = vpack.c.b16 %v4833, %v4825
    %v5490 = vpack.c.b16 %v4834, %v4826
    %v5491 = vpack.c.b16 %v4835, %v4827
    %v5492 = vpack.c.b16 %v4836, %v4828
    %v5493 = vpack.c.b16 %v4837, %v4829
    %v5494 = vpack.c.b16 %v4838, %v4830
    %v5495 = vpack.c.b16 %v4839, %v4831
    %v5496 = vpack.c.b16 %v4840, %v4832
    %v5497 = vpack.c.b16 %v4849, %v4841
    %v5498 = vpack.c.b16 %v4850, %v4842
    %v5499 = vpack.c.b16 %v4851, %v4843
    %v5500 = vpack.c.b16 %v4852, %v4844
    %v5501 = vpack.c.b16 %v4853, %v4845
    %v5502 = vpack.c.b16 %v4854, %v4846
    %v5503 = vpack.c.b16 %v4855, %v4847
    %v5504 = vpack.c.b16 %v4856, %v4848
    %v5505 = vpack.c.b16 %v4865, %v4857
    %v5506 = vpack.c.b16 %v4866, %v4858
    %v5507 = vpack.c.b16 %v4867, %v4859
    %v5508 = vpack.c.b16 %v4868, %v4860
    %v5509 = vpack.c.b16 %v4869, %v4861
    %v5510 = vpack.c.b16 %v4870, %v4862
    %v5511 = vpack.c.b16 %v4871, %v4863
    %v5512 = vpack.c.b16 %v4872, %v4864
    %v5513 = vpack.c.b16 %v4881, %v4873
    %v5514 = vpack.c.b16 %v4882, %v4874
    %v5515 = vpack.c.b16 %v4883, %v4875
    %v5516 = vpack.c.b16 %v4884, %v4876
    %v5517 = vpack.c.b16 %v4885, %v4877
    %v5518 = vpack.c.b16 %v4886, %v4878
    %v5519 = vpack.c.b16 %v4887, %v4879
    %v5520 = vpack.c.b16 %v4888, %v4880
    %v5521 = vpack.c.b16 %v4897, %v4889
    %v5522 = vpack.c.b16 %v4898, %v4890
    %v5523 = vpack.c.b16 %v4899, %v4891
    %v5524 = vpack.c.b16 %v4900, %v4892
    %v5525 = vpack.c.b16 %v4901, %v4893
    %v5526 = vpack.c.b16 %v4902, %v4894
    %v5527 = vpack.c.b16 %v4903, %v4895
    %v5528 = vpack.c.b16 %v4904, %v4896
    %v5529 = vpack.c.b16 %v4913, %v4905
    %v5530 = vpack.c.b16 %v4914, %v4906
    %v5531 = vpack.c.b16 %v4915, %v4907
    %v5532 = vpack.c.b16 %v4916, %v4908
    %v5533 = vpack.c.b16 %v4917, %v4909
    %v5534 = vpack.c.b16 %v4918, %v4910
    %v5535 = vpack.c.b16 %v4919, %v4911
    %v5536 = vpack.c.b16 %v4920, %v4912
    %v5537 = vpack.c.b16 %v4929, %v4921
    %v5538 = vpack.c.b16 %v4930, %v4922
    %v5539 = vpack.c.b16 %v4931, %v4923
    %v5540 = vpack.c.b16 %v4932, %v4924
    %v5541 = vpack.c.b16 %v4933, %v4925
    %v5542 = vpack.c.b16 %v4934, %v4926
    %v5543 = vpack.c.b16 %v4935, %v4927
    %v5544 = vpack.c.b16 %v4936, %v4928
    %v5545 = vpack.c.b16 %v4945, %v4937
    %v5546 = vpack.c.b16 %v4946, %v4938
    %v5547 = vpack.c.b16 %v4947, %v4939
    %v5548 = vpack.c.b16 %v4948, %v4940
    %v5549 = vpack.c.b16 %v4949, %v4941
    %v5550 = vpack.c.b16 %v4950, %v4942
    %v5551 = vpack.c.b16 %v4951, %v4943
    %v5552 = vpack.c.b16 %v4952, %v4944
    %v5553 = vpack.c.b16 %v4961, %v4953
    %v5554 = vpack.c.b16 %v4962, %v4954
    %v5555 = vpack.c.b16 %v4963, %v4955
    %v5556 = vpack.c.b16 %v4964, %v4956
    %v5557 = vpack.c.b16 %v4965, %v4957
    %v5558 = vpack.c.b16 %v4966, %v4958
    %v5559 = vpack.c.b16 %v4967, %v4959
    %v5560 = vpack.c.b16 %v4968, %v4960
    %v5561 = vpack.c.b16 %v4977, %v4969
    %v5562 = vpack.c.b16 %v4978, %v4970
    %v5563 = vpack.c.b16 %v4979, %v4971
    %v5564 = vpack.c.b16 %v4980, %v4972
    %v5565 = vpack.c.b16 %v4981, %v4973
    %v5566 = vpack.c.b16 %v4982, %v4974
    %v5567 = vpack.c.b16 %v4983, %v4975
    %v5568 = vpack.c.b16 %v4984, %v4976
    %v5569 = vpack.c.b16 %v4993, %v4985
    %v5570 = vpack.c.b16 %v4994, %v4986
    %v5571 = vpack.c.b16 %v4995, %v4987
    %v5572 = vpack.c.b16 %v4996, %v4988
    %v5573 = vpack.c.b16 %v4997, %v4989
    %v5574 = vpack.c.b16 %v4998, %v4990
    %v5575 = vpack.c.b16 %v4999, %v4991
    %v5576 = vpack.c.b16 %v5000, %v4992
    %v5577 = vpack.c.b16 %v5009, %v5001
    %v5578 = vpack.c.b16 %v5010, %v5002
    %v5579 = vpack.c.b16 %v5011, %v5003
    %v5580 = vpack.c.b16 %v5012, %v5004
    %v5581 = vpack.c.b16 %v5013, %v5005
    %v5582 = vpack.c.b16 %v5014, %v5006
    %v5583 = vpack.c.b16 %v5015, %v5007
    %v5584 = vpack.c.b16 %v5016, %v5008
    %v5585 = vpack.c.b16 %v5025, %v5017
    %v5586 = vpack.c.b16 %v5026, %v5018
    %v5587 = vpack.c.b16 %v5027, %v5019
    %v5588 = vpack.c.b16 %v5028, %v5020
    %v5589 = vpack.c.b16 %v5029, %v5021
    %v5590 = vpack.c.b16 %v5030, %v5022
    %v5591 = vpack.c.b16 %v5031, %v5023
    %v5592 = vpack.c.b16 %v5032, %v5024
    %v5593 = vpack.c.b16 %v5041, %v5033
    %v5594 = vpack.c.b16 %v5042, %v5034
    %v5595 = vpack.c.b16 %v5043, %v5035
    %v5596 = vpack.c.b16 %v5044, %v5036
    %v5597 = vpack.c.b16 %v5045, %v5037
    %v5598 = vpack.c.b16 %v5046, %v5038
    %v5599 = vpack.c.b16 %v5047, %v5039
    %v5600 = vpack.c.b16 %v5048, %v5040
    %v5601 = vpack.c.b16 %v5057, %v5049
    %v5602 = vpack.c.b16 %v5058, %v5050
    %v5603 = vpack.c.b16 %v5059, %v5051
    %v5604 = vpack.c.b16 %v5060, %v5052
    %v5605 = vpack.c.b16 %v5061, %v5053
    %v5606 = vpack.c.b16 %v5062, %v5054
    %v5607 = vpack.c.b16 %v5063, %v5055
    %v5608 = vpack.c.b16 %v5064, %v5056
    %v5609 = vpack.c.b16 %v5073, %v5065
    %v5610 = vpack.c.b16 %v5074, %v5066
    %v5611 = vpack.c.b16 %v5075, %v5067
    %v5612 = vpack.c.b16 %v5076, %v5068
    %v5613 = vpack.c.b16 %v5077, %v5069
    %v5614 = vpack.c.b16 %v5078, %v5070
    %v5615 = vpack.c.b16 %v5079, %v5071
    %v5616 = vpack.c.b16 %v5080, %v5072
    %v5617 = vpack.c.b16 %v5089, %v5081
    %v5618 = vpack.c.b16 %v5090, %v5082
    %v5619 = vpack.c.b16 %v5091, %v5083
    %v5620 = vpack.c.b16 %v5092, %v5084
    %v5621 = vpack.c.b16 %v5093, %v5085
    %v5622 = vpack.c.b16 %v5094, %v5086
    %v5623 = vpack.c.b16 %v5095, %v5087
    %v5624 = vpack.c.b16 %v5096, %v5088
    %v5625 = vpack.c.b16 %v5105, %v5097
    %v5626 = vpack.c.b16 %v5106, %v5098
    %v5627 = vpack.c.b16 %v5107, %v5099
    %v5628 = vpack.c.b16 %v5108, %v5100
    %v5629 = vpack.c.b16 %v5109, %v5101
    %v5630 = vpack.c.b16 %v5110, %v5102
    %v5631 = vpack.c.b16 %v5111, %v5103
    %v5632 = vpack.c.b16 %v5112, %v5104
    %v5633 = vpack.c.b16 %v5121, %v5113
    %v5634 = vpack.c.b16 %v5122, %v5114
    %v5635 = vpack.c.b16 %v5123, %v5115
    %v5636 = vpack.c.b16 %v5124, %v5116
    %v5637 = vpack.c.b16 %v5125, %v5117
    %v5638 = vpack.c.b16 %v5126, %v5118
    %v5639 = vpack.c.b16 %v5127, %v5119
    %v5640 = vpack.c.b16 %v5128, %v5120
    %6153 = vmatprep.subr.bf16.mxu0 %v5130
    %6154 = vmatpush1.bf16.msra.mxu0 %v5129
    %6155 = vmatprep.subr.bf16.mxu0 %v5138
    %6156 = vmatpush1.bf16.msra.mxu0 %v5137
    %6157 = vmatprep.subr.bf16.mxu0 %v5146
    %6158 = vmatpush1.bf16.msra.mxu0 %v5145
    %6159 = vmatprep.subr.bf16.mxu0 %v5154
    %6160 = vmatpush1.bf16.msra.mxu0 %v5153
    %6161 = vmatprep.subr.bf16.mxu0 %v5162
    %6162 = vmatpush1.bf16.msra.mxu0 %v5161
    %6163 = vmatprep.subr.bf16.mxu0 %v5170
    %6164 = vmatpush1.bf16.msra.mxu0 %v5169
    %6165 = vmatprep.subr.bf16.mxu0 %v5178
    %6166 = vmatpush1.bf16.msra.mxu0 %v5177
    %6167 = vmatprep.subr.bf16.mxu0 %v5186
    %6168 = vmatpush1.bf16.msra.mxu0 %v5185
    %6169 = vmatprep.subr.bf16.mxu0 %v5194
    %6170 = vmatpush1.bf16.msra.mxu0 %v5193
    %6171 = vmatprep.subr.bf16.mxu0 %v5202
    %6172 = vmatpush1.bf16.msra.mxu0 %v5201
    %6173 = vmatprep.subr.bf16.mxu0 %v5210
    %6174 = vmatpush1.bf16.msra.mxu0 %v5209
    %6175 = vmatprep.subr.bf16.mxu0 %v5218
    %6176 = vmatpush1.bf16.msra.mxu0 %v5217
    %6177 = vmatprep.subr.bf16.mxu0 %v5226
    %6178 = vmatpush1.bf16.msra.mxu0 %v5225
    %6179 = vmatprep.subr.bf16.mxu0 %v5234
    %6180 = vmatpush1.bf16.msra.mxu0 %v5233
    %6181 = vmatprep.subr.bf16.mxu0 %v5242
    %6182 = vmatpush1.bf16.msra.mxu0 %v5241
    %6183 = vmatprep.subr.bf16.mxu0 %v5250
    %6184 = vmatpush1.bf16.msra.mxu0 %v5249
    %6185 = vmatprep.mubr.bf16.mxu0 %v3032
    %6186 = vmatmul.mubr.bf16.gmra.mrb[0].mxu0 %v3031
    %v6187 = vpop.f32.mrb[0].mxu0
    %v6188 = vadd.f32 %v3556, %v6187
    %v6189 = vpop.f32.mrb[0].mxu0
    %v6190 = vadd.f32 %v3560, %v6189
    %v6191 = vpop.f32.mrb[0].mxu0
    %v6192 = vadd.f32 %v3556, %v6191
    %v6193 = vpop.f32.mrb[0].mxu0
    %v6194 = vadd.f32 %v3560, %v6193
    %6195 = vdwg.mxu0
    %6196 = vmatprep.subr.bf16.mxu0 %v5258
    %6197 = vmatpush1.bf16.msra.mxu0 %v5257
    %6198 = vmatprep.subr.bf16.mxu0 %v5266
    %6199 = vmatpush1.bf16.msra.mxu0 %v5265
    %6200 = vmatprep.subr.bf16.mxu0 %v5274
    %6201 = vmatpush1.bf16.msra.mxu0 %v5273
    %6202 = vmatprep.subr.bf16.mxu0 %v5282
    %6203 = vmatpush1.bf16.msra.mxu0 %v5281
    %6204 = vmatprep.subr.bf16.mxu0 %v5290
    %6205 = vmatpush1.bf16.msra.mxu0 %v5289
    %6206 = vmatprep.subr.bf16.mxu0 %v5298
    %6207 = vmatpush1.bf16.msra.mxu0 %v5297
    %6208 = vmatprep.subr.bf16.mxu0 %v5306
    %6209 = vmatpush1.bf16.msra.mxu0 %v5305
    %6210 = vmatprep.subr.bf16.mxu0 %v5314
    %6211 = vmatpush1.bf16.msra.mxu0 %v5313
    %6212 = vmatprep.subr.bf16.mxu0 %v5322
    %6213 = vmatpush1.bf16.msra.mxu0 %v5321
    %6214 = vmatprep.subr.bf16.mxu0 %v5330
    %6215 = vmatpush1.bf16.msra.mxu0 %v5329
    %6216 = vmatprep.subr.bf16.mxu0 %v5338
    %6217 = vmatpush1.bf16.msra.mxu0 %v5337
    %6218 = vmatprep.subr.bf16.mxu0 %v5346
    %6219 = vmatpush1.bf16.msra.mxu0 %v5345
    %6220 = vmatprep.subr.bf16.mxu0 %v5354
    %6221 = vmatpush1.bf16.msra.mxu0 %v5353
    %6222 = vmatprep.subr.bf16.mxu0 %v5362
    %6223 = vmatpush1.bf16.msra.mxu0 %v5361
    %6224 = vmatprep.subr.bf16.mxu0 %v5370
    %6225 = vmatpush1.bf16.msra.mxu0 %v5369
    %6226 = vmatprep.subr.bf16.mxu0 %v5378
    %6227 = vmatpush1.bf16.msra.mxu0 %v5377
    %6228 = vmatprep.mubr.bf16.mxu0 %v3034
    %6229 = vmatmul.mubr.bf16.gmra.mrb[0].mxu0 %v3033
    %v6230 = vpop.f32.mrb[0].mxu0
    %v6231 = vadd.f32 %v6188, %v6230
    %v6232 = vpop.f32.mrb[0].mxu0
    %v6233 = vadd.f32 %v6190, %v6232
    %v6234 = vpop.f32.mrb[0].mxu0
    %v6235 = vadd.f32 %v6192, %v6234
    %v6236 = vpop.f32.mrb[0].mxu0
    %v6237 = vadd.f32 %v6194, %v6236
    %6238 = vdwg.mxu0
    %6239 = vmatprep.subr.bf16.mxu0 %v5386
    %6240 = vmatpush1.bf16.msra.mxu0 %v5385
    %6241 = vmatprep.subr.bf16.mxu0 %v5394
    %6242 = vmatpush1.bf16.msra.mxu0 %v5393
    %6243 = vmatprep.subr.bf16.mxu0 %v5402
    %6244 = vmatpush1.bf16.msra.mxu0 %v5401
    %6245 = vmatprep.subr.bf16.mxu0 %v5410
    %6246 = vmatpush1.bf16.msra.mxu0 %v5409
    %6247 = vmatprep.subr.bf16.mxu0 %v5418
    %6248 = vmatpush1.bf16.msra.mxu0 %v5417
    %6249 = vmatprep.subr.bf16.mxu0 %v5426
    %6250 = vmatpush1.bf16.msra.mxu0 %v5425
    %6251 = vmatprep.subr.bf16.mxu0 %v5434
    %6252 = vmatpush1.bf16.msra.mxu0 %v5433
    %6253 = vmatprep.subr.bf16.mxu0 %v5442
    %6254 = vmatpush1.bf16.msra.mxu0 %v5441
    %6255 = vmatprep.subr.bf16.mxu0 %v5450
    %6256 = vmatpush1.bf16.msra.mxu0 %v5449
    %6257 = vmatprep.subr.bf16.mxu0 %v5458
    %6258 = vmatpush1.bf16.msra.mxu0 %v5457
    %6259 = vmatprep.subr.bf16.mxu0 %v5466
    %6260 = vmatpush1.bf16.msra.mxu0 %v5465
    %6261 = vmatprep.subr.bf16.mxu0 %v5474
    %6262 = vmatpush1.bf16.msra.mxu0 %v5473
    %6263 = vmatprep.subr.bf16.mxu0 %v5482
    %6264 = vmatpush1.bf16.msra.mxu0 %v5481
    %6265 = vmatprep.subr.bf16.mxu0 %v5490
    %6266 = vmatpush1.bf16.msra.mxu0 %v5489
    %6267 = vmatprep.subr.bf16.mxu0 %v5498
    %6268 = vmatpush1.bf16.msra.mxu0 %v5497
    %6269 = vmatprep.subr.bf16.mxu0 %v5506
    %6270 = vmatpush1.bf16.msra.mxu0 %v5505
    %6271 = vmatprep.mubr.bf16.mxu0 %v3036
    %6272 = vmatmul.mubr.bf16.gmra.mrb[0].mxu0 %v3035
    %v6273 = vpop.f32.mrb[0].mxu0
    %v6274 = vadd.f32 %v6231, %v6273
    %v6275 = vpop.f32.mrb[0].mxu0
    %v6276 = vadd.f32 %v6233, %v6275
    %v6277 = vpop.f32.mrb[0].mxu0
    %v6278 = vadd.f32 %v6235, %v6277
    %v6279 = vpop.f32.mrb[0].mxu0
    %v6280 = vadd.f32 %v6237, %v6279
    %6281 = vdwg.mxu0
    %6282 = vmatprep.subr.bf16.mxu0 %v5514
    %6283 = vmatpush1.bf16.msra.mxu0 %v5513
    %6284 = vmatprep.subr.bf16.mxu0 %v5522
    %6285 = vmatpush1.bf16.msra.mxu0 %v5521
    %6286 = vmatprep.subr.bf16.mxu0 %v5530
    %6287 = vmatpush1.bf16.msra.mxu0 %v5529
    %6288 = vmatprep.subr.bf16.mxu0 %v5538
    %6289 = vmatpush1.bf16.msra.mxu0 %v5537
    %6290 = vmatprep.subr.bf16.mxu0 %v5546
    %6291 = vmatpush1.bf16.msra.mxu0 %v5545
    %6292 = vmatprep.subr.bf16.mxu0 %v5554
    %6293 = vmatpush1.bf16.msra.mxu0 %v5553
    %6294 = vmatprep.subr.bf16.mxu0 %v5562
    %6295 = vmatpush1.bf16.msra.mxu0 %v5561
    %6296 = vmatprep.subr.bf16.mxu0 %v5570
    %6297 = vmatpush1.bf16.msra.mxu0 %v5569
    %6298 = vmatprep.subr.bf16.mxu0 %v5578
    %6299 = vmatpush1.bf16.msra.mxu0 %v5577
    %6300 = vmatprep.subr.bf16.mxu0 %v5586
    %6301 = vmatpush1.bf16.msra.mxu0 %v5585
    %6302 = vmatprep.subr.bf16.mxu0 %v5594
    %6303 = vmatpush1.bf16.msra.mxu0 %v5593
    %6304 = vmatprep.subr.bf16.mxu0 %v5602
    %6305 = vmatpush1.bf16.msra.mxu0 %v5601
    %6306 = vmatprep.subr.bf16.mxu0 %v5610
    %6307 = vmatpush1.bf16.msra.mxu0 %v5609
    %6308 = vmatprep.subr.bf16.mxu0 %v5618
    %6309 = vmatpush1.bf16.msra.mxu0 %v5617
    %6310 = vmatprep.subr.bf16.mxu0 %v5626
    %6311 = vmatpush1.bf16.msra.mxu0 %v5625
    %6312 = vmatprep.subr.bf16.mxu0 %v5634
    %6313 = vmatpush1.bf16.msra.mxu0 %v5633
    %6314 = vmatprep.mubr.bf16.mxu0 %v3038
    %6315 = vmatmul.mubr.bf16.gmra.mrb[0].mxu0 %v3037
    %v6316 = vpop.f32.mrb[0].mxu0
    %v6317 = vadd.f32 %v6274, %v6316
    %v6318 = vpop.f32.mrb[0].mxu0
    %v6319 = vadd.f32 %v6276, %v6318
    %v6320 = vpop.f32.mrb[0].mxu0
    %v6321 = vadd.f32 %v6278, %v6320
    %v6322 = vpop.f32.mrb[0].mxu0
    %v6323 = vadd.f32 %v6280, %v6322
    %6324 = vdwg.mxu0
    %6325 = vmatprep.subr.bf16.mxu0 %v5132
    %6326 = vmatpush1.bf16.msra.mxu0 %v5131
    %6327 = vmatprep.subr.bf16.mxu0 %v5140
    %6328 = vmatpush1.bf16.msra.mxu0 %v5139
    %6329 = vmatprep.subr.bf16.mxu0 %v5148
    %6330 = vmatpush1.bf16.msra.mxu0 %v5147
    %6331 = vmatprep.subr.bf16.mxu0 %v5156
    %6332 = vmatpush1.bf16.msra.mxu0 %v5155
    %6333 = vmatprep.subr.bf16.mxu0 %v5164
    %6334 = vmatpush1.bf16.msra.mxu0 %v5163
    %6335 = vmatprep.subr.bf16.mxu0 %v5172
    %6336 = vmatpush1.bf16.msra.mxu0 %v5171
    %6337 = vmatprep.subr.bf16.mxu0 %v5180
    %6338 = vmatpush1.bf16.msra.mxu0 %v5179
    %6339 = vmatprep.subr.bf16.mxu0 %v5188
    %6340 = vmatpush1.bf16.msra.mxu0 %v5187
    %6341 = vmatprep.subr.bf16.mxu0 %v5196
    %6342 = vmatpush1.bf16.msra.mxu0 %v5195
    %6343 = vmatprep.subr.bf16.mxu0 %v5204
    %6344 = vmatpush1.bf16.msra.mxu0 %v5203
    %6345 = vmatprep.subr.bf16.mxu0 %v5212
    %6346 = vmatpush1.bf16.msra.mxu0 %v5211
    %6347 = vmatprep.subr.bf16.mxu0 %v5220
    %6348 = vmatpush1.bf16.msra.mxu0 %v5219
    %6349 = vmatprep.subr.bf16.mxu0 %v5228
    %6350 = vmatpush1.bf16.msra.mxu0 %v5227
    %6351 = vmatprep.subr.bf16.mxu0 %v5236
    %6352 = vmatpush1.bf16.msra.mxu0 %v5235
    %6353 = vmatprep.subr.bf16.mxu0 %v5244
    %6354 = vmatpush1.bf16.msra.mxu0 %v5243
    %6355 = vmatprep.subr.bf16.mxu0 %v5252
    %6356 = vmatpush1.bf16.msra.mxu0 %v5251
    %6357 = vmatprep.mubr.bf16.mxu0 %v3032
    %6358 = vmatmul.mubr.bf16.gmra.mrb[0].mxu0 %v3031
    %v6359 = vpop.f32.mrb[0].mxu0
    %v6360 = vadd.f32 %v3564, %v6359
    %v6361 = vpop.f32.mrb[0].mxu0
    %v6362 = vadd.f32 %v3568, %v6361
    %v6363 = vpop.f32.mrb[0].mxu0
    %v6364 = vadd.f32 %v3564, %v6363
    %v6365 = vpop.f32.mrb[0].mxu0
    %v6366 = vadd.f32 %v3568, %v6365
    %6367 = vdwg.mxu0
    %6368 = vmatprep.subr.bf16.mxu0 %v5260
    %6369 = vmatpush1.bf16.msra.mxu0 %v5259
    %6370 = vmatprep.subr.bf16.mxu0 %v5268
    %6371 = vmatpush1.bf16.msra.mxu0 %v5267
    %6372 = vmatprep.subr.bf16.mxu0 %v5276
    %6373 = vmatpush1.bf16.msra.mxu0 %v5275
    %6374 = vmatprep.subr.bf16.mxu0 %v5284
    %6375 = vmatpush1.bf16.msra.mxu0 %v5283
    %6376 = vmatprep.subr.bf16.mxu0 %v5292
    %6377 = vmatpush1.bf16.msra.mxu0 %v5291
    %6378 = vmatprep.subr.bf16.mxu0 %v5300
    %6379 = vmatpush1.bf16.msra.mxu0 %v5299
    %6380 = vmatprep.subr.bf16.mxu0 %v5308
    %6381 = vmatpush1.bf16.msra.mxu0 %v5307
    %6382 = vmatprep.subr.bf16.mxu0 %v5316
    %6383 = vmatpush1.bf16.msra.mxu0 %v5315
    %6384 = vmatprep.subr.bf16.mxu0 %v5324
    %6385 = vmatpush1.bf16.msra.mxu0 %v5323
    %6386 = vmatprep.subr.bf16.mxu0 %v5332
    %6387 = vmatpush1.bf16.msra.mxu0 %v5331
    %6388 = vmatprep.subr.bf16.mxu0 %v5340
    %6389 = vmatpush1.bf16.msra.mxu0 %v5339
    %6390 = vmatprep.subr.bf16.mxu0 %v5348
    %6391 = vmatpush1.bf16.msra.mxu0 %v5347
    %6392 = vmatprep.subr.bf16.mxu0 %v5356
    %6393 = vmatpush1.bf16.msra.mxu0 %v5355
    %6394 = vmatprep.subr.bf16.mxu0 %v5364
    %6395 = vmatpush1.bf16.msra.mxu0 %v5363
    %6396 = vmatprep.subr.bf16.mxu0 %v5372
    %6397 = vmatpush1.bf16.msra.mxu0 %v5371
    %6398 = vmatprep.subr.bf16.mxu0 %v5380
    %6399 = vmatpush1.bf16.msra.mxu0 %v5379
    %6400 = vmatprep.mubr.bf16.mxu0 %v3034
    %6401 = vmatmul.mubr.bf16.gmra.mrb[0].mxu0 %v3033
    %v6402 = vpop.f32.mrb[0].mxu0
    %v6403 = vadd.f32 %v6360, %v6402
    %v6404 = vpop.f32.mrb[0].mxu0
    %v6405 = vadd.f32 %v6362, %v6404
    %v6406 = vpop.f32.mrb[0].mxu0
    %v6407 = vadd.f32 %v6364, %v6406
    %v6408 = vpop.f32.mrb[0].mxu0
    %v6409 = vadd.f32 %v6366, %v6408
    %6410 = vdwg.mxu0
    %6411 = vmatprep.subr.bf16.mxu0 %v5388
    %6412 = vmatpush1.bf16.msra.mxu0 %v5387
    %6413 = vmatprep.subr.bf16.mxu0 %v5396
    %6414 = vmatpush1.bf16.msra.mxu0 %v5395
    %6415 = vmatprep.subr.bf16.mxu0 %v5404
    %6416 = vmatpush1.bf16.msra.mxu0 %v5403
    %6417 = vmatprep.subr.bf16.mxu0 %v5412
    %6418 = vmatpush1.bf16.msra.mxu0 %v5411
    %6419 = vmatprep.subr.bf16.mxu0 %v5420
    %6420 = vmatpush1.bf16.msra.mxu0 %v5419
    %6421 = vmatprep.subr.bf16.mxu0 %v5428
    %6422 = vmatpush1.bf16.msra.mxu0 %v5427
    %6423 = vmatprep.subr.bf16.mxu0 %v5436
    %6424 = vmatpush1.bf16.msra.mxu0 %v5435
    %6425 = vmatprep.subr.bf16.mxu0 %v5444
    %6426 = vmatpush1.bf16.msra.mxu0 %v5443
    %6427 = vmatprep.subr.bf16.mxu0 %v5452
    %6428 = vmatpush1.bf16.msra.mxu0 %v5451
    %6429 = vmatprep.subr.bf16.mxu0 %v5460
    %6430 = vmatpush1.bf16.msra.mxu0 %v5459
    %6431 = vmatprep.subr.bf16.mxu0 %v5468
    %6432 = vmatpush1.bf16.msra.mxu0 %v5467
    %6433 = vmatprep.subr.bf16.mxu0 %v5476
    %6434 = vmatpush1.bf16.msra.mxu0 %v5475
    %6435 = vmatprep.subr.bf16.mxu0 %v5484
    %6436 = vmatpush1.bf16.msra.mxu0 %v5483
    %6437 = vmatprep.subr.bf16.mxu0 %v5492
    %6438 = vmatpush1.bf16.msra.mxu0 %v5491
    %6439 = vmatprep.subr.bf16.mxu0 %v5500
    %6440 = vmatpush1.bf16.msra.mxu0 %v5499
    %6441 = vmatprep.subr.bf16.mxu0 %v5508
    %6442 = vmatpush1.bf16.msra.mxu0 %v5507
    %6443 = vmatprep.mubr.bf16.mxu0 %v3036
    %6444 = vmatmul.mubr.bf16.gmra.mrb[0].mxu0 %v3035
    %v6445 = vpop.f32.mrb[0].mxu0
    %v6446 = vadd.f32 %v6403, %v6445
    %v6447 = vpop.f32.mrb[0].mxu0
    %v6448 = vadd.f32 %v6405, %v6447
    %v6449 = vpop.f32.mrb[0].mxu0
    %v6450 = vadd.f32 %v6407, %v6449
    %v6451 = vpop.f32.mrb[0].mxu0
    %v6452 = vadd.f32 %v6409, %v6451
    %6453 = vdwg.mxu0
    %6454 = vmatprep.subr.bf16.mxu0 %v5516
    %6455 = vmatpush1.bf16.msra.mxu0 %v5515
    %6456 = vmatprep.subr.bf16.mxu0 %v5524
    %6457 = vmatpush1.bf16.msra.mxu0 %v5523
    %6458 = vmatprep.subr.bf16.mxu0 %v5532
    %6459 = vmatpush1.bf16.msra.mxu0 %v5531
    %6460 = vmatprep.subr.bf16.mxu0 %v5540
    %6461 = vmatpush1.bf16.msra.mxu0 %v5539
    %6462 = vmatprep.subr.bf16.mxu0 %v5548
    %6463 = vmatpush1.bf16.msra.mxu0 %v5547
    %6464 = vmatprep.subr.bf16.mxu0 %v5556
    %6465 = vmatpush1.bf16.msra.mxu0 %v5555
    %6466 = vmatprep.subr.bf16.mxu0 %v5564
    %6467 = vmatpush1.bf16.msra.mxu0 %v5563
    %6468 = vmatprep.subr.bf16.mxu0 %v5572
    %6469 = vmatpush1.bf16.msra.mxu0 %v5571
    %6470 = vmatprep.subr.bf16.mxu0 %v5580
    %6471 = vmatpush1.bf16.msra.mxu0 %v5579
    %6472 = vmatprep.subr.bf16.mxu0 %v5588
    %6473 = vmatpush1.bf16.msra.mxu0 %v5587
    %6474 = vmatprep.subr.bf16.mxu0 %v5596
    %6475 = vmatpush1.bf16.msra.mxu0 %v5595
    %6476 = vmatprep.subr.bf16.mxu0 %v5604
    %6477 = vmatpush1.bf16.msra.mxu0 %v5603
    %6478 = vmatprep.subr.bf16.mxu0 %v5612
    %6479 = vmatpush1.bf16.msra.mxu0 %v5611
    %6480 = vmatprep.subr.bf16.mxu0 %v5620
    %6481 = vmatpush1.bf16.msra.mxu0 %v5619
    %6482 = vmatprep.subr.bf16.mxu0 %v5628
    %6483 = vmatpush1.bf16.msra.mxu0 %v5627
    %6484 = vmatprep.subr.bf16.mxu0 %v5636
    %6485 = vmatpush1.bf16.msra.mxu0 %v5635
    %6486 = vmatprep.mubr.bf16.mxu0 %v3038
    %6487 = vmatmul.mubr.bf16.gmra.mrb[0].mxu0 %v3037
    %v6488 = vpop.f32.mrb[0].mxu0
    %v6489 = vadd.f32 %v6446, %v6488
    %v6490 = vpop.f32.mrb[0].mxu0
    %v6491 = vadd.f32 %v6448, %v6490
    %v6492 = vpop.f32.mrb[0].mxu0
    %v6493 = vadd.f32 %v6450, %v6492
    %v6494 = vpop.f32.mrb[0].mxu0
    %v6495 = vadd.f32 %v6452, %v6494
    %6496 = vdwg.mxu0
    %6497 = vmatprep.subr.bf16.mxu0 %v5134
    %6498 = vmatpush1.bf16.msra.mxu0 %v5133
    %6499 = vmatprep.subr.bf16.mxu0 %v5142
    %6500 = vmatpush1.bf16.msra.mxu0 %v5141
    %6501 = vmatprep.subr.bf16.mxu0 %v5150
    %6502 = vmatpush1.bf16.msra.mxu0 %v5149
    %6503 = vmatprep.subr.bf16.mxu0 %v5158
    %6504 = vmatpush1.bf16.msra.mxu0 %v5157
    %6505 = vmatprep.subr.bf16.mxu0 %v5166
    %6506 = vmatpush1.bf16.msra.mxu0 %v5165
    %6507 = vmatprep.subr.bf16.mxu0 %v5174
    %6508 = vmatpush1.bf16.msra.mxu0 %v5173
    %6509 = vmatprep.subr.bf16.mxu0 %v5182
    %6510 = vmatpush1.bf16.msra.mxu0 %v5181
    %6511 = vmatprep.subr.bf16.mxu0 %v5190
    %6512 = vmatpush1.bf16.msra.mxu0 %v5189
    %6513 = vmatprep.subr.bf16.mxu0 %v5198
    %6514 = vmatpush1.bf16.msra.mxu0 %v5197
    %6515 = vmatprep.subr.bf16.mxu0 %v5206
    %6516 = vmatpush1.bf16.msra.mxu0 %v5205
    %6517 = vmatprep.subr.bf16.mxu0 %v5214
    %6518 = vmatpush1.bf16.msra.mxu0 %v5213
    %6519 = vmatprep.subr.bf16.mxu0 %v5222
    %6520 = vmatpush1.bf16.msra.mxu0 %v5221
    %6521 = vmatprep.subr.bf16.mxu0 %v5230
    %6522 = vmatpush1.bf16.msra.mxu0 %v5229
    %6523 = vmatprep.subr.bf16.mxu0 %v5238
    %6524 = vmatpush1.bf16.msra.mxu0 %v5237
    %6525 = vmatprep.subr.bf16.mxu0 %v5246
    %6526 = vmatpush1.bf16.msra.mxu0 %v5245
    %6527 = vmatprep.subr.bf16.mxu0 %v5254
    %6528 = vmatpush1.bf16.msra.mxu0 %v5253
    %6529 = vmatprep.mubr.bf16.mxu0 %v3032
    %6530 = vmatmul.mubr.bf16.gmra.mrb[0].mxu0 %v3031
    %v6531 = vpop.f32.mrb[0].mxu0
    %v6532 = vadd.f32 %v3572, %v6531
    %v6533 = vpop.f32.mrb[0].mxu0
    %v6534 = vadd.f32 %v3576, %v6533
    %v6535 = vpop.f32.mrb[0].mxu0
    %v6536 = vadd.f32 %v3572, %v6535
    %v6537 = vpop.f32.mrb[0].mxu0
    %v6538 = vadd.f32 %v3576, %v6537
    %6539 = vdwg.mxu0
    %6540 = vmatprep.subr.bf16.mxu0 %v5262
    %6541 = vmatpush1.bf16.msra.mxu0 %v5261
    %6542 = vmatprep.subr.bf16.mxu0 %v5270
    %6543 = vmatpush1.bf16.msra.mxu0 %v5269
    %6544 = vmatprep.subr.bf16.mxu0 %v5278
    %6545 = vmatpush1.bf16.msra.mxu0 %v5277
    %6546 = vmatprep.subr.bf16.mxu0 %v5286
    %6547 = vmatpush1.bf16.msra.mxu0 %v5285
    %6548 = vmatprep.subr.bf16.mxu0 %v5294
    %6549 = vmatpush1.bf16.msra.mxu0 %v5293
    %6550 = vmatprep.subr.bf16.mxu0 %v5302
    %6551 = vmatpush1.bf16.msra.mxu0 %v5301
    %6552 = vmatprep.subr.bf16.mxu0 %v5310
    %6553 = vmatpush1.bf16.msra.mxu0 %v5309
    %6554 = vmatprep.subr.bf16.mxu0 %v5318
    %6555 = vmatpush1.bf16.msra.mxu0 %v5317
    %6556 = vmatprep.subr.bf16.mxu0 %v5326
    %6557 = vmatpush1.bf16.msra.mxu0 %v5325
    %6558 = vmatprep.subr.bf16.mxu0 %v5334
    %6559 = vmatpush1.bf16.msra.mxu0 %v5333
    %6560 = vmatprep.subr.bf16.mxu0 %v5342
    %6561 = vmatpush1.bf16.msra.mxu0 %v5341
    %6562 = vmatprep.subr.bf16.mxu0 %v5350
    %6563 = vmatpush1.bf16.msra.mxu0 %v5349
    %6564 = vmatprep.subr.bf16.mxu0 %v5358
    %6565 = vmatpush1.bf16.msra.mxu0 %v5357
    %6566 = vmatprep.subr.bf16.mxu0 %v5366
    %6567 = vmatpush1.bf16.msra.mxu0 %v5365
    %6568 = vmatprep.subr.bf16.mxu0 %v5374
    %6569 = vmatpush1.bf16.msra.mxu0 %v5373
    %6570 = vmatprep.subr.bf16.mxu0 %v5382
    %6571 = vmatpush1.bf16.msra.mxu0 %v5381
    %6572 = vmatprep.mubr.bf16.mxu0 %v3034
    %6573 = vmatmul.mubr.bf16.gmra.mrb[0].mxu0 %v3033
    %v6574 = vpop.f32.mrb[0].mxu0
    %v6575 = vadd.f32 %v6532, %v6574
    %v6576 = vpop.f32.mrb[0].mxu0
    %v6577 = vadd.f32 %v6534, %v6576
    %v6578 = vpop.f32.mrb[0].mxu0
    %v6579 = vadd.f32 %v6536, %v6578
    %v6580 = vpop.f32.mrb[0].mxu0
    %v6581 = vadd.f32 %v6538, %v6580
    %6582 = vdwg.mxu0
    %6583 = vmatprep.subr.bf16.mxu0 %v5390
    %6584 = vmatpush1.bf16.msra.mxu0 %v5389
    %6585 = vmatprep.subr.bf16.mxu0 %v5398
    %6586 = vmatpush1.bf16.msra.mxu0 %v5397
    %6587 = vmatprep.subr.bf16.mxu0 %v5406
    %6588 = vmatpush1.bf16.msra.mxu0 %v5405
    %6589 = vmatprep.subr.bf16.mxu0 %v5414
    %6590 = vmatpush1.bf16.msra.mxu0 %v5413
    %6591 = vmatprep.subr.bf16.mxu0 %v5422
    %6592 = vmatpush1.bf16.msra.mxu0 %v5421
    %6593 = vmatprep.subr.bf16.mxu0 %v5430
    %6594 = vmatpush1.bf16.msra.mxu0 %v5429
    %6595 = vmatprep.subr.bf16.mxu0 %v5438
    %6596 = vmatpush1.bf16.msra.mxu0 %v5437
    %6597 = vmatprep.subr.bf16.mxu0 %v5446
    %6598 = vmatpush1.bf16.msra.mxu0 %v5445
    %6599 = vmatprep.subr.bf16.mxu0 %v5454
    %6600 = vmatpush1.bf16.msra.mxu0 %v5453
    %6601 = vmatprep.subr.bf16.mxu0 %v5462
    %6602 = vmatpush1.bf16.msra.mxu0 %v5461
    %6603 = vmatprep.subr.bf16.mxu0 %v5470
    %6604 = vmatpush1.bf16.msra.mxu0 %v5469
    %6605 = vmatprep.subr.bf16.mxu0 %v5478
    %6606 = vmatpush1.bf16.msra.mxu0 %v5477
    %6607 = vmatprep.subr.bf16.mxu0 %v5486
    %6608 = vmatpush1.bf16.msra.mxu0 %v5485
    %6609 = vmatprep.subr.bf16.mxu0 %v5494
    %6610 = vmatpush1.bf16.msra.mxu0 %v5493
    %6611 = vmatprep.subr.bf16.mxu0 %v5502
    %6612 = vmatpush1.bf16.msra.mxu0 %v5501
    %6613 = vmatprep.subr.bf16.mxu0 %v5510
    %6614 = vmatpush1.bf16.msra.mxu0 %v5509
    %6615 = vmatprep.mubr.bf16.mxu0 %v3036
    %6616 = vmatmul.mubr.bf16.gmra.mrb[0].mxu0 %v3035
    %v6617 = vpop.f32.mrb[0].mxu0
    %v6618 = vadd.f32 %v6575, %v6617
    %v6619 = vpop.f32.mrb[0].mxu0
    %v6620 = vadd.f32 %v6577, %v6619
    %v6621 = vpop.f32.mrb[0].mxu0
    %v6622 = vadd.f32 %v6579, %v6621
    %v6623 = vpop.f32.mrb[0].mxu0
    %v6624 = vadd.f32 %v6581, %v6623
    %6625 = vdwg.mxu0
    %6626 = vmatprep.subr.bf16.mxu0 %v5518
    %6627 = vmatpush1.bf16.msra.mxu0 %v5517
    %6628 = vmatprep.subr.bf16.mxu0 %v5526
    %6629 = vmatpush1.bf16.msra.mxu0 %v5525
    %6630 = vmatprep.subr.bf16.mxu0 %v5534
    %6631 = vmatpush1.bf16.msra.mxu0 %v5533
    %6632 = vmatprep.subr.bf16.mxu0 %v5542
    %6633 = vmatpush1.bf16.msra.mxu0 %v5541
    %6634 = vmatprep.subr.bf16.mxu0 %v5550
    %6635 = vmatpush1.bf16.msra.mxu0 %v5549
    %6636 = vmatprep.subr.bf16.mxu0 %v5558
    %6637 = vmatpush1.bf16.msra.mxu0 %v5557
    %6638 = vmatprep.subr.bf16.mxu0 %v5566
    %6639 = vmatpush1.bf16.msra.mxu0 %v5565
    %6640 = vmatprep.subr.bf16.mxu0 %v5574
    %6641 = vmatpush1.bf16.msra.mxu0 %v5573
    %6642 = vmatprep.subr.bf16.mxu0 %v5582
    %6643 = vmatpush1.bf16.msra.mxu0 %v5581
    %6644 = vmatprep.subr.bf16.mxu0 %v5590
    %6645 = vmatpush1.bf16.msra.mxu0 %v5589
    %6646 = vmatprep.subr.bf16.mxu0 %v5598
    %6647 = vmatpush1.bf16.msra.mxu0 %v5597
    %6648 = vmatprep.subr.bf16.mxu0 %v5606
    %6649 = vmatpush1.bf16.msra.mxu0 %v5605
    %6650 = vmatprep.subr.bf16.mxu0 %v5614
    %6651 = vmatpush1.bf16.msra.mxu0 %v5613
    %6652 = vmatprep.subr.bf16.mxu0 %v5622
    %6653 = vmatpush1.bf16.msra.mxu0 %v5621
    %6654 = vmatprep.subr.bf16.mxu0 %v5630
    %6655 = vmatpush1.bf16.msra.mxu0 %v5629
    %6656 = vmatprep.subr.bf16.mxu0 %v5638
    %6657 = vmatpush1.bf16.msra.mxu0 %v5637
    %6658 = vmatprep.mubr.bf16.mxu0 %v3038
    %6659 = vmatmul.mubr.bf16.gmra.mrb[0].mxu0 %v3037
    %v6660 = vpop.f32.mrb[0].mxu0
    %v6661 = vadd.f32 %v6618, %v6660
    %v6662 = vpop.f32.mrb[0].mxu0
    %v6663 = vadd.f32 %v6620, %v6662
    %v6664 = vpop.f32.mrb[0].mxu0
    %v6665 = vadd.f32 %v6622, %v6664
    %v6666 = vpop.f32.mrb[0].mxu0
    %v6667 = vadd.f32 %v6624, %v6666
    %6668 = vdwg.mxu0
    %6669 = vmatprep.subr.bf16.mxu0 %v5136
    %6670 = vmatpush1.bf16.msra.mxu0 %v5135
    %6671 = vmatprep.subr.bf16.mxu0 %v5144
    %6672 = vmatpush1.bf16.msra.mxu0 %v5143
    %6673 = vmatprep.subr.bf16.mxu0 %v5152
    %6674 = vmatpush1.bf16.msra.mxu0 %v5151
    %6675 = vmatprep.subr.bf16.mxu0 %v5160
    %6676 = vmatpush1.bf16.msra.mxu0 %v5159
    %6677 = vmatprep.subr.bf16.mxu0 %v5168
    %6678 = vmatpush1.bf16.msra.mxu0 %v5167
    %6679 = vmatprep.subr.bf16.mxu0 %v5176
    %6680 = vmatpush1.bf16.msra.mxu0 %v5175
    %6681 = vmatprep.subr.bf16.mxu0 %v5184
    %6682 = vmatpush1.bf16.msra.mxu0 %v5183
    %6683 = vmatprep.subr.bf16.mxu0 %v5192
    %6684 = vmatpush1.bf16.msra.mxu0 %v5191
    %6685 = vmatprep.subr.bf16.mxu0 %v5200
    %6686 = vmatpush1.bf16.msra.mxu0 %v5199
    %6687 = vmatprep.subr.bf16.mxu0 %v5208
    %6688 = vmatpush1.bf16.msra.mxu0 %v5207
    %6689 = vmatprep.subr.bf16.mxu0 %v5216
    %6690 = vmatpush1.bf16.msra.mxu0 %v5215
    %6691 = vmatprep.subr.bf16.mxu0 %v5224
    %6692 = vmatpush1.bf16.msra.mxu0 %v5223
    %6693 = vmatprep.subr.bf16.mxu0 %v5232
    %6694 = vmatpush1.bf16.msra.mxu0 %v5231
    %6695 = vmatprep.subr.bf16.mxu0 %v5240
    %6696 = vmatpush1.bf16.msra.mxu0 %v5239
    %6697 = vmatprep.subr.bf16.mxu0 %v5248
    %6698 = vmatpush1.bf16.msra.mxu0 %v5247
    %6699 = vmatprep.subr.bf16.mxu0 %v5256
    %6700 = vmatpush1.bf16.msra.mxu0 %v5255
    %6701 = vmatprep.mubr.bf16.mxu0 %v3032
    %6702 = vmatmul.mubr.bf16.gmra.mrb[0].mxu0 %v3031
    %v6703 = vpop.f32.mrb[0].mxu0
    %v6704 = vadd.f32 %v3580, %v6703
    %v6705 = vpop.f32.mrb[0].mxu0
    %v6706 = vadd.f32 %v3584, %v6705
    %v6707 = vpop.f32.mrb[0].mxu0
    %v6708 = vadd.f32 %v3580, %v6707
    %v6709 = vpop.f32.mrb[0].mxu0
    %v6710 = vadd.f32 %v3584, %v6709
    %6711 = vdwg.mxu0
    %6712 = vmatprep.subr.bf16.mxu0 %v5264
    %6713 = vmatpush1.bf16.msra.mxu0 %v5263
    %6714 = vmatprep.subr.bf16.mxu0 %v5272
    %6715 = vmatpush1.bf16.msra.mxu0 %v5271
    %6716 = vmatprep.subr.bf16.mxu0 %v5280
    %6717 = vmatpush1.bf16.msra.mxu0 %v5279
    %6718 = vmatprep.subr.bf16.mxu0 %v5288
    %6719 = vmatpush1.bf16.msra.mxu0 %v5287
    %6720 = vmatprep.subr.bf16.mxu0 %v5296
    %6721 = vmatpush1.bf16.msra.mxu0 %v5295
    %6722 = vmatprep.subr.bf16.mxu0 %v5304
    %6723 = vmatpush1.bf16.msra.mxu0 %v5303
    %6724 = vmatprep.subr.bf16.mxu0 %v5312
    %6725 = vmatpush1.bf16.msra.mxu0 %v5311
    %6726 = vmatprep.subr.bf16.mxu0 %v5320
    %6727 = vmatpush1.bf16.msra.mxu0 %v5319
    %6728 = vmatprep.subr.bf16.mxu0 %v5328
    %6729 = vmatpush1.bf16.msra.mxu0 %v5327
    %6730 = vmatprep.subr.bf16.mxu0 %v5336
    %6731 = vmatpush1.bf16.msra.mxu0 %v5335
    %6732 = vmatprep.subr.bf16.mxu0 %v5344
    %6733 = vmatpush1.bf16.msra.mxu0 %v5343
    %6734 = vmatprep.subr.bf16.mxu0 %v5352
    %6735 = vmatpush1.bf16.msra.mxu0 %v5351
    %6736 = vmatprep.subr.bf16.mxu0 %v5360
    %6737 = vmatpush1.bf16.msra.mxu0 %v5359
    %6738 = vmatprep.subr.bf16.mxu0 %v5368
    %6739 = vmatpush1.bf16.msra.mxu0 %v5367
    %6740 = vmatprep.subr.bf16.mxu0 %v5376
    %6741 = vmatpush1.bf16.msra.mxu0 %v5375
    %6742 = vmatprep.subr.bf16.mxu0 %v5384
    %6743 = vmatpush1.bf16.msra.mxu0 %v5383
    %6744 = vmatprep.mubr.bf16.mxu0 %v3034
    %6745 = vmatmul.mubr.bf16.gmra.mrb[0].mxu0 %v3033
    %v6746 = vpop.f32.mrb[0].mxu0
    %v6747 = vadd.f32 %v6704, %v6746
    %v6748 = vpop.f32.mrb[0].mxu0
    %v6749 = vadd.f32 %v6706, %v6748
    %v6750 = vpop.f32.mrb[0].mxu0
    %v6751 = vadd.f32 %v6708, %v6750
    %v6752 = vpop.f32.mrb[0].mxu0
    %v6753 = vadd.f32 %v6710, %v6752
    %6754 = vdwg.mxu0
    %6755 = vmatprep.subr.bf16.mxu0 %v5392
    %6756 = vmatpush1.bf16.msra.mxu0 %v5391
    %6757 = vmatprep.subr.bf16.mxu0 %v5400
    %6758 = vmatpush1.bf16.msra.mxu0 %v5399
    %6759 = vmatprep.subr.bf16.mxu0 %v5408
    %6760 = vmatpush1.bf16.msra.mxu0 %v5407
    %6761 = vmatprep.subr.bf16.mxu0 %v5416
    %6762 = vmatpush1.bf16.msra.mxu0 %v5415
    %6763 = vmatprep.subr.bf16.mxu0 %v5424
    %6764 = vmatpush1.bf16.msra.mxu0 %v5423
    %6765 = vmatprep.subr.bf16.mxu0 %v5432
    %6766 = vmatpush1.bf16.msra.mxu0 %v5431
    %6767 = vmatprep.subr.bf16.mxu0 %v5440
    %6768 = vmatpush1.bf16.msra.mxu0 %v5439
    %6769 = vmatprep.subr.bf16.mxu0 %v5448
    %6770 = vmatpush1.bf16.msra.mxu0 %v5447
    %6771 = vmatprep.subr.bf16.mxu0 %v5456
    %6772 = vmatpush1.bf16.msra.mxu0 %v5455
    %6773 = vmatprep.subr.bf16.mxu0 %v5464
    %6774 = vmatpush1.bf16.msra.mxu0 %v5463
    %6775 = vmatprep.subr.bf16.mxu0 %v5472
    %6776 = vmatpush1.bf16.msra.mxu0 %v5471
    %6777 = vmatprep.subr.bf16.mxu0 %v5480
    %6778 = vmatpush1.bf16.msra.mxu0 %v5479
    %6779 = vmatprep.subr.bf16.mxu0 %v5488
    %6780 = vmatpush1.bf16.msra.mxu0 %v5487
    %6781 = vmatprep.subr.bf16.mxu0 %v5496
    %6782 = vmatpush1.bf16.msra.mxu0 %v5495
    %6783 = vmatprep.subr.bf16.mxu0 %v5504
    %6784 = vmatpush1.bf16.msra.mxu0 %v5503
    %6785 = vmatprep.subr.bf16.mxu0 %v5512
    %6786 = vmatpush1.bf16.msra.mxu0 %v5511
    %6787 = vmatprep.mubr.bf16.mxu0 %v3036
    %6788 = vmatmul.mubr.bf16.gmra.mrb[0].mxu0 %v3035
    %v6789 = vpop.f32.mrb[0].mxu0
    %v6790 = vadd.f32 %v6747, %v6789
    %v6791 = vpop.f32.mrb[0].mxu0
    %v6792 = vadd.f32 %v6749, %v6791
    %v6793 = vpop.f32.mrb[0].mxu0
    %v6794 = vadd.f32 %v6751, %v6793
    %v6795 = vpop.f32.mrb[0].mxu0
    %v6796 = vadd.f32 %v6753, %v6795
    %6797 = vdwg.mxu0
    %6798 = vmatprep.subr.bf16.mxu0 %v5520
    %6799 = vmatpush1.bf16.msra.mxu0 %v5519
    %6800 = vmatprep.subr.bf16.mxu0 %v5528
    %6801 = vmatpush1.bf16.msra.mxu0 %v5527
    %6802 = vmatprep.subr.bf16.mxu0 %v5536
    %6803 = vmatpush1.bf16.msra.mxu0 %v5535
    %6804 = vmatprep.subr.bf16.mxu0 %v5544
    %6805 = vmatpush1.bf16.msra.mxu0 %v5543
    %6806 = vmatprep.subr.bf16.mxu0 %v5552
    %6807 = vmatpush1.bf16.msra.mxu0 %v5551
    %6808 = vmatprep.subr.bf16.mxu0 %v5560
    %6809 = vmatpush1.bf16.msra.mxu0 %v5559
    %6810 = vmatprep.subr.bf16.mxu0 %v5568
    %6811 = vmatpush1.bf16.msra.mxu0 %v5567
    %6812 = vmatprep.subr.bf16.mxu0 %v5576
    %6813 = vmatpush1.bf16.msra.mxu0 %v5575
    %6814 = vmatprep.subr.bf16.mxu0 %v5584
    %6815 = vmatpush1.bf16.msra.mxu0 %v5583
    %6816 = vmatprep.subr.bf16.mxu0 %v5592
    %6817 = vmatpush1.bf16.msra.mxu0 %v5591
    %6818 = vmatprep.subr.bf16.mxu0 %v5600
    %6819 = vmatpush1.bf16.msra.mxu0 %v5599
    %6820 = vmatprep.subr.bf16.mxu0 %v5608
    %6821 = vmatpush1.bf16.msra.mxu0 %v5607
    %6822 = vmatprep.subr.bf16.mxu0 %v5616
    %6823 = vmatpush1.bf16.msra.mxu0 %v5615
    %6824 = vmatprep.subr.bf16.mxu0 %v5624
    %6825 = vmatpush1.bf16.msra.mxu0 %v5623
    %6826 = vmatprep.subr.bf16.mxu0 %v5632
    %6827 = vmatpush1.bf16.msra.mxu0 %v5631
    %6828 = vmatprep.subr.bf16.mxu0 %v5640
    %6829 = vmatpush1.bf16.msra.mxu0 %v5639
    %6830 = vmatprep.mubr.bf16.mxu0 %v3038
    %6831 = vmatmul.mubr.bf16.gmra.mrb[0].mxu0 %v3037
    %v6832 = vpop.f32.mrb[0].mxu0
    %v6833 = vadd.f32 %v6790, %v6832
    %v6834 = vpop.f32.mrb[0].mxu0
    %v6835 = vadd.f32 %v6792, %v6834
    %v6836 = vpop.f32.mrb[0].mxu0
    %v6837 = vadd.f32 %v6794, %v6836
    %v6838 = vpop.f32.mrb[0].mxu0
    %v6839 = vadd.f32 %v6796, %v6838
    %6840 = vdwg.mxu0
    %v6841 = vmax.f32 %v6317, 0.0
    %v6842 = vmax.f32 %v6319, 0.0
    %v6843 = vmax.f32 %v6489, 0.0
    %v6844 = vmax.f32 %v6491, 0.0
    %v6845 = vmax.f32 %v6661, 0.0
    %v6846 = vmax.f32 %v6663, 0.0
    %v6847 = vmax.f32 %v6833, 0.0
    %v6848 = vmax.f32 %v6835, 0.0
    %v6849 = vmax.f32 %v6321, 0.0
    %v6850 = vmax.f32 %v6323, 0.0
    %v6851 = vmax.f32 %v6493, 0.0
    %v6852 = vmax.f32 %v6495, 0.0
    %v6853 = vmax.f32 %v6665, 0.0
    %v6854 = vmax.f32 %v6667, 0.0
    %v6855 = vmax.f32 %v6837, 0.0
    %v6856 = vmax.f32 %v6839, 0.0
    %v6857 = vpack.c.bf16 %v6849, %v6841
    %v6858 = vpack.c.bf16 %v6850, %v6842
    %v6859 = vpack.c.bf16 %v6851, %v6843
    %v6860 = vpack.c.bf16 %v6852, %v6844
    %v6861 = vpack.c.bf16 %v6853, %v6845
    %v6862 = vpack.c.bf16 %v6854, %v6846
    %v6863 = vpack.c.bf16 %v6855, %v6847
    %v6864 = vpack.c.bf16 %v6856, %v6848
    %v6865 = vld [vmem:[#allocation11] sm:$0xf]
    %v6866 = vld [vmem:[#allocation11 + $0x4] sm:$0xf]
    %v6867 = vld [vmem:[#allocation11 + $0x8] sm:$0xf]
    %v6868 = vld [vmem:[#allocation11 + $0xc] sm:$0xf]
    %v6869 = vld [vmem:[#allocation11 + $0x10] sm:$0xf]
    %v6870 = vld [vmem:[#allocation11 + $0x14] sm:$0xf]
    %v6871 = vld [vmem:[#allocation11 + $0x18] sm:$0xf]
    %v6872 = vld [vmem:[#allocation11 + $0x1c] sm:$0xf]
    %v6873 = vld [vmem:[#allocation11 + $0x20] sm:$0xf]
    %v6874 = vld [vmem:[#allocation11 + $0x24] sm:$0xf]
    %v6875 = vld [vmem:[#allocation11 + $0x28] sm:$0xf]
    %v6876 = vld [vmem:[#allocation11 + $0x2c] sm:$0xf]
    %v6877 = vld [vmem:[#allocation11 + $0x30] sm:$0xf]
    %v6878 = vld [vmem:[#allocation11 + $0x34] sm:$0xf]
    %v6879 = vld [vmem:[#allocation11 + $0x38] sm:$0xf]
    %v6880 = vld [vmem:[#allocation11 + $0x3c] sm:$0xf]
    %v6881 = vld [vmem:[#allocation11 + $0x40] sm:$0xf]
    %v6882 = vld [vmem:[#allocation11 + $0x44] sm:$0xf]
    %v6883 = vld [vmem:[#allocation11 + $0x48] sm:$0xf]
    %v6884 = vld [vmem:[#allocation11 + $0x4c] sm:$0xf]
    %v6885 = vld [vmem:[#allocation11 + $0x50] sm:$0xf]
    %v6886 = vld [vmem:[#allocation11 + $0x54] sm:$0xf]
    %v6887 = vld [vmem:[#allocation11 + $0x58] sm:$0xf]
    %v6888 = vld [vmem:[#allocation11 + $0x5c] sm:$0xf]
    %v6889 = vld [vmem:[#allocation11 + $0x60] sm:$0xf]
    %v6890 = vld [vmem:[#allocation11 + $0x64] sm:$0xf]
    %v6891 = vld [vmem:[#allocation11 + $0x68] sm:$0xf]
    %v6892 = vld [vmem:[#allocation11 + $0x6c] sm:$0xf]
    %v6893 = vld [vmem:[#allocation11 + $0x70] sm:$0xf]
    %v6894 = vld [vmem:[#allocation11 + $0x74] sm:$0xf]
    %v6895 = vld [vmem:[#allocation11 + $0x78] sm:$0xf]
    %v6896 = vld [vmem:[#allocation11 + $0x7c] sm:$0xf]
    %v6897 = vld [vmem:[#allocation11 + $0x80] sm:$0xf]
    %v6898 = vld [vmem:[#allocation11 + $0x84] sm:$0xf]
    %v6899 = vld [vmem:[#allocation11 + $0x88] sm:$0xf]
    %v6900 = vld [vmem:[#allocation11 + $0x8c] sm:$0xf]
    %v6901 = vld [vmem:[#allocation11 + $0x90] sm:$0xf]
    %v6902 = vld [vmem:[#allocation11 + $0x94] sm:$0xf]
    %v6903 = vld [vmem:[#allocation11 + $0x98] sm:$0xf]
    %v6904 = vld [vmem:[#allocation11 + $0x9c] sm:$0xf]
    %v6905 = vld [vmem:[#allocation11 + $0xa0] sm:$0xf]
    %v6906 = vld [vmem:[#allocation11 + $0xa4] sm:$0xf]
    %v6907 = vld [vmem:[#allocation11 + $0xa8] sm:$0xf]
    %v6908 = vld [vmem:[#allocation11 + $0xac] sm:$0xf]
    %v6909 = vld [vmem:[#allocation11 + $0xb0] sm:$0xf]
    %v6910 = vld [vmem:[#allocation11 + $0xb4] sm:$0xf]
    %v6911 = vld [vmem:[#allocation11 + $0xb8] sm:$0xf]
    %v6912 = vld [vmem:[#allocation11 + $0xbc] sm:$0xf]
    %v6913 = vld [vmem:[#allocation11 + $0xc0] sm:$0xf]
    %v6914 = vld [vmem:[#allocation11 + $0xc4] sm:$0xf]
    %v6915 = vld [vmem:[#allocation11 + $0xc8] sm:$0xf]
    %v6916 = vld [vmem:[#allocation11 + $0xcc] sm:$0xf]
    %v6917 = vld [vmem:[#allocation11 + $0xd0] sm:$0xf]
    %v6918 = vld [vmem:[#allocation11 + $0xd4] sm:$0xf]
    %v6919 = vld [vmem:[#allocation11 + $0xd8] sm:$0xf]
    %v6920 = vld [vmem:[#allocation11 + $0xdc] sm:$0xf]
    %v6921 = vld [vmem:[#allocation11 + $0xe0] sm:$0xf]
    %v6922 = vld [vmem:[#allocation11 + $0xe4] sm:$0xf]
    %v6923 = vld [vmem:[#allocation11 + $0xe8] sm:$0xf]
    %v6924 = vld [vmem:[#allocation11 + $0xec] sm:$0xf]
    %v6925 = vld [vmem:[#allocation11 + $0xf0] sm:$0xf]
    %v6926 = vld [vmem:[#allocation11 + $0xf4] sm:$0xf]
    %v6927 = vld [vmem:[#allocation11 + $0xf8] sm:$0xf]
    %v6928 = vld [vmem:[#allocation11 + $0xfc] sm:$0xf]
    %v6929 = vld [vmem:[#allocation11 + $0x100] sm:$0xf]
    %v6930 = vld [vmem:[#allocation11 + $0x104] sm:$0xf]
    %v6931 = vld [vmem:[#allocation11 + $0x108] sm:$0xf]
    %v6932 = vld [vmem:[#allocation11 + $0x10c] sm:$0xf]
    %v6933 = vld [vmem:[#allocation11 + $0x110] sm:$0xf]
    %v6934 = vld [vmem:[#allocation11 + $0x114] sm:$0xf]
    %v6935 = vld [vmem:[#allocation11 + $0x118] sm:$0xf]
    %v6936 = vld [vmem:[#allocation11 + $0x11c] sm:$0xf]
    %v6937 = vld [vmem:[#allocation11 + $0x120] sm:$0xf]
    %v6938 = vld [vmem:[#allocation11 + $0x124] sm:$0xf]
    %v6939 = vld [vmem:[#allocation11 + $0x128] sm:$0xf]
    %v6940 = vld [vmem:[#allocation11 + $0x12c] sm:$0xf]
    %v6941 = vld [vmem:[#allocation11 + $0x130] sm:$0xf]
    %v6942 = vld [vmem:[#allocation11 + $0x134] sm:$0xf]
    %v6943 = vld [vmem:[#allocation11 + $0x138] sm:$0xf]
    %v6944 = vld [vmem:[#allocation11 + $0x13c] sm:$0xf]
    %v6945 = vld [vmem:[#allocation11 + $0x140] sm:$0xf]
    %v6946 = vld [vmem:[#allocation11 + $0x144] sm:$0xf]
    %v6947 = vld [vmem:[#allocation11 + $0x148] sm:$0xf]
    %v6948 = vld [vmem:[#allocation11 + $0x14c] sm:$0xf]
    %v6949 = vld [vmem:[#allocation11 + $0x150] sm:$0xf]
    %v6950 = vld [vmem:[#allocation11 + $0x154] sm:$0xf]
    %v6951 = vld [vmem:[#allocation11 + $0x158] sm:$0xf]
    %v6952 = vld [vmem:[#allocation11 + $0x15c] sm:$0xf]
    %v6953 = vld [vmem:[#allocation11 + $0x160] sm:$0xf]
    %v6954 = vld [vmem:[#allocation11 + $0x164] sm:$0xf]
    %v6955 = vld [vmem:[#allocation11 + $0x168] sm:$0xf]
    %v6956 = vld [vmem:[#allocation11 + $0x16c] sm:$0xf]
    %v6957 = vld [vmem:[#allocation11 + $0x170] sm:$0xf]
    %v6958 = vld [vmem:[#allocation11 + $0x174] sm:$0xf]
    %v6959 = vld [vmem:[#allocation11 + $0x178] sm:$0xf]
    %v6960 = vld [vmem:[#allocation11 + $0x17c] sm:$0xf]
    %v6961 = vld [vmem:[#allocation11 + $0x180] sm:$0xf]
    %v6962 = vld [vmem:[#allocation11 + $0x184] sm:$0xf]
    %v6963 = vld [vmem:[#allocation11 + $0x188] sm:$0xf]
    %v6964 = vld [vmem:[#allocation11 + $0x18c] sm:$0xf]
    %v6965 = vld [vmem:[#allocation11 + $0x190] sm:$0xf]
    %v6966 = vld [vmem:[#allocation11 + $0x194] sm:$0xf]
    %v6967 = vld [vmem:[#allocation11 + $0x198] sm:$0xf]
    %v6968 = vld [vmem:[#allocation11 + $0x19c] sm:$0xf]
    %v6969 = vld [vmem:[#allocation11 + $0x1a0] sm:$0xf]
    %v6970 = vld [vmem:[#allocation11 + $0x1a4] sm:$0xf]
    %v6971 = vld [vmem:[#allocation11 + $0x1a8] sm:$0xf]
    %v6972 = vld [vmem:[#allocation11 + $0x1ac] sm:$0xf]
    %v6973 = vld [vmem:[#allocation11 + $0x1b0] sm:$0xf]
    %v6974 = vld [vmem:[#allocation11 + $0x1b4] sm:$0xf]
    %v6975 = vld [vmem:[#allocation11 + $0x1b8] sm:$0xf]
    %v6976 = vld [vmem:[#allocation11 + $0x1bc] sm:$0xf]
    %v6977 = vld [vmem:[#allocation11 + $0x1c0] sm:$0xf]
    %v6978 = vld [vmem:[#allocation11 + $0x1c4] sm:$0xf]
    %v6979 = vld [vmem:[#allocation11 + $0x1c8] sm:$0xf]
    %v6980 = vld [vmem:[#allocation11 + $0x1cc] sm:$0xf]
    %v6981 = vld [vmem:[#allocation11 + $0x1d0] sm:$0xf]
    %v6982 = vld [vmem:[#allocation11 + $0x1d4] sm:$0xf]
    %v6983 = vld [vmem:[#allocation11 + $0x1d8] sm:$0xf]
    %v6984 = vld [vmem:[#allocation11 + $0x1dc] sm:$0xf]
    %v6985 = vld [vmem:[#allocation11 + $0x1e0] sm:$0xf]
    %v6986 = vld [vmem:[#allocation11 + $0x1e4] sm:$0xf]
    %v6987 = vld [vmem:[#allocation11 + $0x1e8] sm:$0xf]
    %v6988 = vld [vmem:[#allocation11 + $0x1ec] sm:$0xf]
    %v6989 = vld [vmem:[#allocation11 + $0x1f0] sm:$0xf]
    %v6990 = vld [vmem:[#allocation11 + $0x1f4] sm:$0xf]
    %v6991 = vld [vmem:[#allocation11 + $0x1f8] sm:$0xf]
    %v6992 = vld [vmem:[#allocation11 + $0x1fc] sm:$0xf]
    %v6993 = vld [vmem:[#allocation13] sm:$0x1]
    %v6995 = vlaneseq
    %v6996 = vshrl.u32 %v6995, 7
    %v6997 = vsub.s32 0, %v6996
    %v6998 = vrot.slane %v6993, %v6997
    %v7128 = vunpack.c.l.b16 %v6865
    %v7129 = vunpack.c.l.b16 %v6866
    %v7130 = vunpack.c.l.b16 %v6867
    %v7131 = vunpack.c.l.b16 %v6868
    %v7132 = vunpack.c.l.b16 %v6869
    %v7133 = vunpack.c.l.b16 %v6870
    %v7134 = vunpack.c.l.b16 %v6871
    %v7135 = vunpack.c.l.b16 %v6872
    %v7136 = vunpack.c.l.b16 %v6873
    %v7137 = vunpack.c.l.b16 %v6874
    %v7138 = vunpack.c.l.b16 %v6875
    %v7139 = vunpack.c.l.b16 %v6876
    %v7140 = vunpack.c.l.b16 %v6877
    %v7141 = vunpack.c.l.b16 %v6878
    %v7142 = vunpack.c.l.b16 %v6879
    %v7143 = vunpack.c.l.b16 %v6880
    %v7144 = vunpack.c.l.b16 %v6881
    %v7145 = vunpack.c.l.b16 %v6882
    %v7146 = vunpack.c.l.b16 %v6883
    %v7147 = vunpack.c.l.b16 %v6884
    %v7148 = vunpack.c.l.b16 %v6885
    %v7149 = vunpack.c.l.b16 %v6886
    %v7150 = vunpack.c.l.b16 %v6887
    %v7151 = vunpack.c.l.b16 %v6888
    %v7152 = vunpack.c.l.b16 %v6889
    %v7153 = vunpack.c.l.b16 %v6890
    %v7154 = vunpack.c.l.b16 %v6891
    %v7155 = vunpack.c.l.b16 %v6892
    %v7156 = vunpack.c.l.b16 %v6893
    %v7157 = vunpack.c.l.b16 %v6894
    %v7158 = vunpack.c.l.b16 %v6895
    %v7159 = vunpack.c.l.b16 %v6896
    %v7160 = vunpack.c.l.b16 %v6897
    %v7161 = vunpack.c.l.b16 %v6898
    %v7162 = vunpack.c.l.b16 %v6899
    %v7163 = vunpack.c.l.b16 %v6900
    %v7164 = vunpack.c.l.b16 %v6901
    %v7165 = vunpack.c.l.b16 %v6902
    %v7166 = vunpack.c.l.b16 %v6903
    %v7167 = vunpack.c.l.b16 %v6904
    %v7168 = vunpack.c.l.b16 %v6905
    %v7169 = vunpack.c.l.b16 %v6906
    %v7170 = vunpack.c.l.b16 %v6907
    %v7171 = vunpack.c.l.b16 %v6908
    %v7172 = vunpack.c.l.b16 %v6909
    %v7173 = vunpack.c.l.b16 %v6910
    %v7174 = vunpack.c.l.b16 %v6911
    %v7175 = vunpack.c.l.b16 %v6912
    %v7176 = vunpack.c.l.b16 %v6913
    %v7177 = vunpack.c.l.b16 %v6914
    %v7178 = vunpack.c.l.b16 %v6915
    %v7179 = vunpack.c.l.b16 %v6916
    %v7180 = vunpack.c.l.b16 %v6917
    %v7181 = vunpack.c.l.b16 %v6918
    %v7182 = vunpack.c.l.b16 %v6919
    %v7183 = vunpack.c.l.b16 %v6920
    %v7184 = vunpack.c.l.b16 %v6921
    %v7185 = vunpack.c.l.b16 %v6922
    %v7186 = vunpack.c.l.b16 %v6923
    %v7187 = vunpack.c.l.b16 %v6924
    %v7188 = vunpack.c.l.b16 %v6925
    %v7189 = vunpack.c.l.b16 %v6926
    %v7190 = vunpack.c.l.b16 %v6927
    %v7191 = vunpack.c.l.b16 %v6928
    %v7192 = vunpack.c.l.b16 %v6929
    %v7193 = vunpack.c.l.b16 %v6930
    %v7194 = vunpack.c.l.b16 %v6931
    %v7195 = vunpack.c.l.b16 %v6932
    %v7196 = vunpack.c.l.b16 %v6933
    %v7197 = vunpack.c.l.b16 %v6934
    %v7198 = vunpack.c.l.b16 %v6935
    %v7199 = vunpack.c.l.b16 %v6936
    %v7200 = vunpack.c.l.b16 %v6937
    %v7201 = vunpack.c.l.b16 %v6938
    %v7202 = vunpack.c.l.b16 %v6939
    %v7203 = vunpack.c.l.b16 %v6940
    %v7204 = vunpack.c.l.b16 %v6941
    %v7205 = vunpack.c.l.b16 %v6942
    %v7206 = vunpack.c.l.b16 %v6943
    %v7207 = vunpack.c.l.b16 %v6944
    %v7208 = vunpack.c.l.b16 %v6945
    %v7209 = vunpack.c.l.b16 %v6946
    %v7210 = vunpack.c.l.b16 %v6947
    %v7211 = vunpack.c.l.b16 %v6948
    %v7212 = vunpack.c.l.b16 %v6949
    %v7213 = vunpack.c.l.b16 %v6950
    %v7214 = vunpack.c.l.b16 %v6951
    %v7215 = vunpack.c.l.b16 %v6952
    %v7216 = vunpack.c.l.b16 %v6953
    %v7217 = vunpack.c.l.b16 %v6954
    %v7218 = vunpack.c.l.b16 %v6955
    %v7219 = vunpack.c.l.b16 %v6956
    %v7220 = vunpack.c.l.b16 %v6957
    %v7221 = vunpack.c.l.b16 %v6958
    %v7222 = vunpack.c.l.b16 %v6959
    %v7223 = vunpack.c.l.b16 %v6960
    %v7224 = vunpack.c.l.b16 %v6961
    %v7225 = vunpack.c.l.b16 %v6962
    %v7226 = vunpack.c.l.b16 %v6963
    %v7227 = vunpack.c.l.b16 %v6964
    %v7228 = vunpack.c.l.b16 %v6965
    %v7229 = vunpack.c.l.b16 %v6966
    %v7230 = vunpack.c.l.b16 %v6967
    %v7231 = vunpack.c.l.b16 %v6968
    %v7232 = vunpack.c.l.b16 %v6969
    %v7233 = vunpack.c.l.b16 %v6970
    %v7234 = vunpack.c.l.b16 %v6971
    %v7235 = vunpack.c.l.b16 %v6972
    %v7236 = vunpack.c.l.b16 %v6973
    %v7237 = vunpack.c.l.b16 %v6974
    %v7238 = vunpack.c.l.b16 %v6975
    %v7239 = vunpack.c.l.b16 %v6976
    %v7240 = vunpack.c.l.b16 %v6977
    %v7241 = vunpack.c.l.b16 %v6978
    %v7242 = vunpack.c.l.b16 %v6979
    %v7243 = vunpack.c.l.b16 %v6980
    %v7244 = vunpack.c.l.b16 %v6981
    %v7245 = vunpack.c.l.b16 %v6982
    %v7246 = vunpack.c.l.b16 %v6983
    %v7247 = vunpack.c.l.b16 %v6984
    %v7248 = vunpack.c.l.b16 %v6985
    %v7249 = vunpack.c.l.b16 %v6986
    %v7250 = vunpack.c.l.b16 %v6987
    %v7251 = vunpack.c.l.b16 %v6988
    %v7252 = vunpack.c.l.b16 %v6989
    %v7253 = vunpack.c.l.b16 %v6990
    %v7254 = vunpack.c.l.b16 %v6991
    %v7255 = vunpack.c.l.b16 %v6992
    %v7256 = vpack.c.b16 %v7129, %v7128
    %v7257 = vpack.c.b16 %v7131, %v7130
    %v7258 = vpack.c.b16 %v7133, %v7132
    %v7259 = vpack.c.b16 %v7135, %v7134
    %v7260 = vpack.c.b16 %v7137, %v7136
    %v7261 = vpack.c.b16 %v7139, %v7138
    %v7262 = vpack.c.b16 %v7141, %v7140
    %v7263 = vpack.c.b16 %v7143, %v7142
    %v7264 = vpack.c.b16 %v7145, %v7144
    %v7265 = vpack.c.b16 %v7147, %v7146
    %v7266 = vpack.c.b16 %v7149, %v7148
    %v7267 = vpack.c.b16 %v7151, %v7150
    %v7268 = vpack.c.b16 %v7153, %v7152
    %v7269 = vpack.c.b16 %v7155, %v7154
    %v7270 = vpack.c.b16 %v7157, %v7156
    %v7271 = vpack.c.b16 %v7159, %v7158
    %v7272 = vpack.c.b16 %v7161, %v7160
    %v7273 = vpack.c.b16 %v7163, %v7162
    %v7274 = vpack.c.b16 %v7165, %v7164
    %v7275 = vpack.c.b16 %v7167, %v7166
    %v7276 = vpack.c.b16 %v7169, %v7168
    %v7277 = vpack.c.b16 %v7171, %v7170
    %v7278 = vpack.c.b16 %v7173, %v7172
    %v7279 = vpack.c.b16 %v7175, %v7174
    %v7280 = vpack.c.b16 %v7177, %v7176
    %v7281 = vpack.c.b16 %v7179, %v7178
    %v7282 = vpack.c.b16 %v7181, %v7180
    %v7283 = vpack.c.b16 %v7183, %v7182
    %v7284 = vpack.c.b16 %v7185, %v7184
    %v7285 = vpack.c.b16 %v7187, %v7186
    %v7286 = vpack.c.b16 %v7189, %v7188
    %v7287 = vpack.c.b16 %v7191, %v7190
    %v7288 = vpack.c.b16 %v7193, %v7192
    %v7289 = vpack.c.b16 %v7195, %v7194
    %v7290 = vpack.c.b16 %v7197, %v7196
    %v7291 = vpack.c.b16 %v7199, %v7198
    %v7292 = vpack.c.b16 %v7201, %v7200
    %v7293 = vpack.c.b16 %v7203, %v7202
    %v7294 = vpack.c.b16 %v7205, %v7204
    %v7295 = vpack.c.b16 %v7207, %v7206
    %v7296 = vpack.c.b16 %v7209, %v7208
    %v7297 = vpack.c.b16 %v7211, %v7210
    %v7298 = vpack.c.b16 %v7213, %v7212
    %v7299 = vpack.c.b16 %v7215, %v7214
    %v7300 = vpack.c.b16 %v7217, %v7216
    %v7301 = vpack.c.b16 %v7219, %v7218
    %v7302 = vpack.c.b16 %v7221, %v7220
    %v7303 = vpack.c.b16 %v7223, %v7222
    %v7304 = vpack.c.b16 %v7225, %v7224
    %v7305 = vpack.c.b16 %v7227, %v7226
    %v7306 = vpack.c.b16 %v7229, %v7228
    %v7307 = vpack.c.b16 %v7231, %v7230
    %v7308 = vpack.c.b16 %v7233, %v7232
    %v7309 = vpack.c.b16 %v7235, %v7234
    %v7310 = vpack.c.b16 %v7237, %v7236
    %v7311 = vpack.c.b16 %v7239, %v7238
    %v7312 = vpack.c.b16 %v7241, %v7240
    %v7313 = vpack.c.b16 %v7243, %v7242
    %v7314 = vpack.c.b16 %v7245, %v7244
    %v7315 = vpack.c.b16 %v7247, %v7246
    %v7316 = vpack.c.b16 %v7249, %v7248
    %v7317 = vpack.c.b16 %v7251, %v7250
    %v7318 = vpack.c.b16 %v7253, %v7252
    %v7319 = vpack.c.b16 %v7255, %v7254
    %7384 = vmatprep.subr.bf16.mxu0 0
    %7385 = vmatpush1.bf16.msra.mxu0 %v7256
    %7386 = vmatprep.subr.bf16.mxu0 0
    %7387 = vmatpush1.bf16.msra.mxu0 %v7257
    %7388 = vmatprep.subr.bf16.mxu0 0
    %7389 = vmatpush1.bf16.msra.mxu0 %v7258
    %7390 = vmatprep.subr.bf16.mxu0 0
    %7391 = vmatpush1.bf16.msra.mxu0 %v7259
    %7392 = vmatprep.subr.bf16.mxu0 0
    %7393 = vmatpush1.bf16.msra.mxu0 %v7260
    %7394 = vmatprep.subr.bf16.mxu0 0
    %7395 = vmatpush1.bf16.msra.mxu0 %v7261
    %7396 = vmatprep.subr.bf16.mxu0 0
    %7397 = vmatpush1.bf16.msra.mxu0 %v7262
    %7398 = vmatprep.subr.bf16.mxu0 0
    %7399 = vmatpush1.bf16.msra.mxu0 %v7263
    %7400 = vmatprep.subr.bf16.mxu0 0
    %7401 = vmatpush1.bf16.msra.mxu0 %v7264
    %7402 = vmatprep.subr.bf16.mxu0 0
    %7403 = vmatpush1.bf16.msra.mxu0 %v7265
    %7404 = vmatprep.subr.bf16.mxu0 0
    %7405 = vmatpush1.bf16.msra.mxu0 %v7266
    %7406 = vmatprep.subr.bf16.mxu0 0
    %7407 = vmatpush1.bf16.msra.mxu0 %v7267
    %7408 = vmatprep.subr.bf16.mxu0 0
    %7409 = vmatpush1.bf16.msra.mxu0 %v7268
    %7410 = vmatprep.subr.bf16.mxu0 0
    %7411 = vmatpush1.bf16.msra.mxu0 %v7269
    %7412 = vmatprep.subr.bf16.mxu0 0
    %7413 = vmatpush1.bf16.msra.mxu0 %v7270
    %7414 = vmatprep.subr.bf16.mxu0 0
    %7415 = vmatpush1.bf16.msra.mxu0 %v7271
    %7416 = vmatprep.mubr.bf16.mxu0 %v6858
    %7417 = vmatmul.mubr.bf16.gmra.mrb[0].mxu0 %v6857
    %v7418 = vpop.f32.mrb[0].mxu0
    %v7419 = vadd.f32 %v6998, %v7418
    %v7420 = vpop.f32.mrb[0].mxu0
    %v7421 = vpop.f32.mrb[0].mxu0
    %v7422 = vadd.f32 %v6998, %v7421
    %v7423 = vpop.f32.mrb[0].mxu0
    %7424 = vdwg.mxu0
    %7425 = vmatprep.subr.bf16.mxu0 0
    %7426 = vmatpush1.bf16.msra.mxu0 %v7272
    %7427 = vmatprep.subr.bf16.mxu0 0
    %7428 = vmatpush1.bf16.msra.mxu0 %v7273
    %7429 = vmatprep.subr.bf16.mxu0 0
    %7430 = vmatpush1.bf16.msra.mxu0 %v7274
    %7431 = vmatprep.subr.bf16.mxu0 0
    %7432 = vmatpush1.bf16.msra.mxu0 %v7275
    %7433 = vmatprep.subr.bf16.mxu0 0
    %7434 = vmatpush1.bf16.msra.mxu0 %v7276
    %7435 = vmatprep.subr.bf16.mxu0 0
    %7436 = vmatpush1.bf16.msra.mxu0 %v7277
    %7437 = vmatprep.subr.bf16.mxu0 0
    %7438 = vmatpush1.bf16.msra.mxu0 %v7278
    %7439 = vmatprep.subr.bf16.mxu0 0
    %7440 = vmatpush1.bf16.msra.mxu0 %v7279
    %7441 = vmatprep.subr.bf16.mxu0 0
    %7442 = vmatpush1.bf16.msra.mxu0 %v7280
    %7443 = vmatprep.subr.bf16.mxu0 0
    %7444 = vmatpush1.bf16.msra.mxu0 %v7281
    %7445 = vmatprep.subr.bf16.mxu0 0
    %7446 = vmatpush1.bf16.msra.mxu0 %v7282
    %7447 = vmatprep.subr.bf16.mxu0 0
    %7448 = vmatpush1.bf16.msra.mxu0 %v7283
    %7449 = vmatprep.subr.bf16.mxu0 0
    %7450 = vmatpush1.bf16.msra.mxu0 %v7284
    %7451 = vmatprep.subr.bf16.mxu0 0
    %7452 = vmatpush1.bf16.msra.mxu0 %v7285
    %7453 = vmatprep.subr.bf16.mxu0 0
    %7454 = vmatpush1.bf16.msra.mxu0 %v7286
    %7455 = vmatprep.subr.bf16.mxu0 0
    %7456 = vmatpush1.bf16.msra.mxu0 %v7287
    %7457 = vmatprep.mubr.bf16.mxu0 %v6860
    %7458 = vmatmul.mubr.bf16.gmra.mrb[0].mxu0 %v6859
    %v7459 = vpop.f32.mrb[0].mxu0
    %v7460 = vadd.f32 %v7419, %v7459
    %v7461 = vpop.f32.mrb[0].mxu0
    %v7462 = vpop.f32.mrb[0].mxu0
    %v7463 = vadd.f32 %v7422, %v7462
    %v7464 = vpop.f32.mrb[0].mxu0
    %7465 = vdwg.mxu0
    %7466 = vmatprep.subr.bf16.mxu0 0
    %7467 = vmatpush1.bf16.msra.mxu0 %v7288
    %7468 = vmatprep.subr.bf16.mxu0 0
    %7469 = vmatpush1.bf16.msra.mxu0 %v7289
    %7470 = vmatprep.subr.bf16.mxu0 0
    %7471 = vmatpush1.bf16.msra.mxu0 %v7290
    %7472 = vmatprep.subr.bf16.mxu0 0
    %7473 = vmatpush1.bf16.msra.mxu0 %v7291
    %7474 = vmatprep.subr.bf16.mxu0 0
    %7475 = vmatpush1.bf16.msra.mxu0 %v7292
    %7476 = vmatprep.subr.bf16.mxu0 0
    %7477 = vmatpush1.bf16.msra.mxu0 %v7293
    %7478 = vmatprep.subr.bf16.mxu0 0
    %7479 = vmatpush1.bf16.msra.mxu0 %v7294
    %7480 = vmatprep.subr.bf16.mxu0 0
    %7481 = vmatpush1.bf16.msra.mxu0 %v7295
    %7482 = vmatprep.subr.bf16.mxu0 0
    %7483 = vmatpush1.bf16.msra.mxu0 %v7296
    %7484 = vmatprep.subr.bf16.mxu0 0
    %7485 = vmatpush1.bf16.msra.mxu0 %v7297
    %7486 = vmatprep.subr.bf16.mxu0 0
    %7487 = vmatpush1.bf16.msra.mxu0 %v7298
    %7488 = vmatprep.subr.bf16.mxu0 0
    %7489 = vmatpush1.bf16.msra.mxu0 %v7299
    %7490 = vmatprep.subr.bf16.mxu0 0
    %7491 = vmatpush1.bf16.msra.mxu0 %v7300
    %7492 = vmatprep.subr.bf16.mxu0 0
    %7493 = vmatpush1.bf16.msra.mxu0 %v7301
    %7494 = vmatprep.subr.bf16.mxu0 0
    %7495 = vmatpush1.bf16.msra.mxu0 %v7302
    %7496 = vmatprep.subr.bf16.mxu0 0
    %7497 = vmatpush1.bf16.msra.mxu0 %v7303
    %7498 = vmatprep.mubr.bf16.mxu0 %v6862
    %7499 = vmatmul.mubr.bf16.gmra.mrb[0].mxu0 %v6861
    %v7500 = vpop.f32.mrb[0].mxu0
    %v7501 = vadd.f32 %v7460, %v7500
    %v7502 = vpop.f32.mrb[0].mxu0
    %v7503 = vpop.f32.mrb[0].mxu0
    %v7504 = vadd.f32 %v7463, %v7503
    %v7505 = vpop.f32.mrb[0].mxu0
    %7506 = vdwg.mxu0
    %7507 = vmatprep.subr.bf16.mxu0 0
    %7508 = vmatpush1.bf16.msra.mxu0 %v7304
    %7509 = vmatprep.subr.bf16.mxu0 0
    %7510 = vmatpush1.bf16.msra.mxu0 %v7305
    %7511 = vmatprep.subr.bf16.mxu0 0
    %7512 = vmatpush1.bf16.msra.mxu0 %v7306
    %7513 = vmatprep.subr.bf16.mxu0 0
    %7514 = vmatpush1.bf16.msra.mxu0 %v7307
    %7515 = vmatprep.subr.bf16.mxu0 0
    %7516 = vmatpush1.bf16.msra.mxu0 %v7308
    %7517 = vmatprep.subr.bf16.mxu0 0
    %7518 = vmatpush1.bf16.msra.mxu0 %v7309
    %7519 = vmatprep.subr.bf16.mxu0 0
    %7520 = vmatpush1.bf16.msra.mxu0 %v7310
    %7521 = vmatprep.subr.bf16.mxu0 0
    %7522 = vmatpush1.bf16.msra.mxu0 %v7311
    %7523 = vmatprep.subr.bf16.mxu0 0
    %7524 = vmatpush1.bf16.msra.mxu0 %v7312
    %7525 = vmatprep.subr.bf16.mxu0 0
    %7526 = vmatpush1.bf16.msra.mxu0 %v7313
    %7527 = vmatprep.subr.bf16.mxu0 0
    %7528 = vmatpush1.bf16.msra.mxu0 %v7314
    %7529 = vmatprep.subr.bf16.mxu0 0
    %7530 = vmatpush1.bf16.msra.mxu0 %v7315
    %7531 = vmatprep.subr.bf16.mxu0 0
    %7532 = vmatpush1.bf16.msra.mxu0 %v7316
    %7533 = vmatprep.subr.bf16.mxu0 0
    %7534 = vmatpush1.bf16.msra.mxu0 %v7317
    %7535 = vmatprep.subr.bf16.mxu0 0
    %7536 = vmatpush1.bf16.msra.mxu0 %v7318
    %7537 = vmatprep.subr.bf16.mxu0 0
    %7538 = vmatpush1.bf16.msra.mxu0 %v7319
    %7539 = vmatprep.mubr.bf16.mxu0 %v6864
    %7540 = vmatmul.mubr.bf16.gmra.mrb[0].mxu0 %v6863
    %v7541 = vpop.f32.mrb[0].mxu0
    %v7542 = vadd.f32 %v7501, %v7541
    %v7543 = vpop.f32.mrb[0].mxu0
    %v7544 = vpop.f32.mrb[0].mxu0
    %v7545 = vadd.f32 %v7504, %v7544
    %v7546 = vpop.f32.mrb[0].mxu0
    %7547 = vdwg.mxu0
    %7548 = vst [vmem:[#allocation14] sm:$0xff] %v7542
    %7549 = vst [vmem:[#allocation14 + $0x8] sm:$0xff] %v7545
    // Predicated region
    $region58: #{tpu_custom_call.1} parent=1 // pred_check
      _
    $region59: #{tpu_custom_call.1} parent=1 // pred_check_branch
      %7551 = sbr.rel (0) target = $region61
    $region60: #{tpu_custom_call.1} parent=1 // pred_region
      %s7553 = ssub.s32 256, 256
      %7554 = vsyncadd [#allocation4], %s7553
      %s7555 = sshll.u32 [#allocation14], 4
      %s7556 = int_to_ptr.vmem [resolvable:$true] %s7555
      %7561 = dma.vmem_to_hbm [thread:$0]  %s7556, 256, %s7, [#allocation4], 128, 128, 8
    $region61: #{tpu_custom_call.1} parent=1 // pred_fallthru
      _
    // Predicated region
    $region62: #{tpu_custom_call.1} parent=1 // pred_check
      _
    $region63: #{tpu_custom_call.1} parent=1 // pred_check_branch
      %7563 = sbr.rel (0) target = $region65
    $region64: #{tpu_custom_call.1} parent=1 // pred_region
      %7564 = dma.done [#allocation4], 256
    $region65: #{tpu_custom_call.1} parent=1 // pred_fallthru
      _
    %7565 = vsyncpa [#allocation3], 1
    %7566 = vsyncpa [#allocation6], 1
    %7567 = vsyncpa [#allocation9], 1
    %7568 = vsyncpa [#allocation12], 1
    %7569 = vsyncpa [#allocation4], 1

</llo_original>
